<compile_context>
chip_gen: v6e
topology: v6e:2x2x1
jax: 0.10.0
libtpu: 0.0.40
codegen_flags: <defaults>
</compile_context>

<pallas_src>
import math

import jax
import jax.numpy as jnp
from jax.experimental import pallas as pl
from jax.experimental.pallas import tpu as pltpu

# ----------------- small synthetic BERT config -----------------
VOCAB = 128
MAX_POS = 64
HIDDEN = 32
NUM_LAYERS = 2
NUM_HEADS = 4
HEAD_DIM = HIDDEN // NUM_HEADS
INTERMEDIATE = 64
NUM_CLASSES = 2          # matches NUM_CLASSES = 2 in the reference module
LN_EPS = 1e-12           # BERT layernorm eps
LANE = 128               # lane width of the packed slabs


# ----------------- packed-slab row layouts (static) -----------------
def _w_layout():
    off, r = {}, 0
    off["word_emb"] = r; r += VOCAB
    off["pos_emb"] = r; r += MAX_POS
    for l in range(NUM_LAYERS):
        off[f"wqkv{l}"] = r; r += HIDDEN
        off[f"wo{l}"] = r; r += HIDDEN
        off[f"w1{l}"] = r; r += HIDDEN
        off[f"w2{l}"] = r; r += INTERMEDIATE
    return off, r


def _v_layout():
    off, r = {}, 0
    for name in ("emb_ln_g", "emb_ln_b", "type_emb"):
        off[name] = r; r += 1
    off["cls_w"] = r; r += NUM_CLASSES      # stored transposed: (C, H)
    off["cls_b"] = r; r += 1
    for l in range(NUM_LAYERS):
        for name in (f"bqkv{l}", f"bo{l}", f"ln1_g{l}", f"ln1_b{l}",
                     f"b1{l}", f"b2{l}", f"ln2_g{l}", f"ln2_b{l}"):
            off[name] = r; r += 1
    return off, r


W_OFF, W_ROWS = _w_layout()
V_OFF, V_ROWS = _v_layout()
V_ROWS_PAD = ((V_ROWS + 7) // 8) * 8


# ----------------- fused Pallas kernel -----------------
def _bert_fused_kernel(ids_ref, mask_ref, w_ref, v_ref, out_ref):
    B, S = mask_ref.shape
    BS = B * S

    # Static unpacking from the two packed slabs (free ref views).
    def W(name, rows, cols):
        r = W_OFF[name]
        return w_ref[r:r + rows, 0:cols]

    def V(name, cols, rows=1):
        r = V_OFF[name]
        return v_ref[r:r + rows, 0:cols]

    def ln(x, g, b):
        mean = jnp.mean(x, axis=-1, keepdims=True)
        xc = x - mean
        var = jnp.mean(xc * xc, axis=-1, keepdims=True)
        return xc * jax.lax.rsqrt(var + LN_EPS) * g + b

    # ---- embeddings: in-kernel word gather via one-hot MXU matmul ----
    ids = ids_ref[...]                                                  # (BS, 1) int32
    vocab_iota = jax.lax.broadcasted_iota(jnp.int32, (BS, VOCAB), 1)
    one_hot = (ids == vocab_iota).astype(jnp.float32)                   # (BS, VOCAB)
    word = jnp.dot(one_hot, W("word_emb", VOCAB, HIDDEN),
                   preferred_element_type=jnp.float32)                  # (BS, H)
    pos = W("pos_emb", S, HIDDEN)                                       # (S, H)
    pos_b = jnp.concatenate([pos] * B, axis=0)                          # (BS, H)
    # token_type_ids assumed zeros -> single type-0 row broadcast.
    x = word + pos_b + V("type_emb", HIDDEN)
    x = ln(x, V("emb_ln_g", HIDDEN), V("emb_ln_b", HIDDEN))

    # ---- additive attention bias, built ONCE from the raw {0,1} mask ----
    bias = (1.0 - mask_ref[...]) * -1e9                                 # (B, S)
    # Leading attention-batch index is i = h*B + b  ->  bias_full[i] = bias[i % B].
    bias_full = jnp.concatenate([bias] * NUM_HEADS, axis=0)[:, None, :]  # (NH*B, 1, S)

    # NUM_LAYERS == 2: static unroll keeps all slab offsets static.
    # TODO(synk): switch to lax.fori_loop with a fixed per-layer row stride if layer count grows.
    for l in range(NUM_LAYERS):
        # Fused Q|K|V projection (1/sqrt(Dh) already folded into the Q columns at init).
        qkv = (jnp.dot(x, W(f"wqkv{l}", HIDDEN, 3 * HIDDEN),
                       preferred_element_type=jnp.float32)
               + V(f"bqkv{l}", 3 * HIDDEN))                             # (BS, 3H)

        # Relayout to (NH*B, S, Dh): static lane slices + leading-dim reshapes only.
        def heads(base):
            return jnp.concatenate(
                [qkv[:, base + h * HEAD_DIM: base + (h + 1) * HEAD_DIM]
                 .reshape(B, S, HEAD_DIM) for h in range(NUM_HEADS)], axis=0)

        q = heads(0)
        k = heads(HIDDEN)
        v = heads(2 * HIDDEN)

        # Batched scores over all (head, batch) pairs: one dot_general, one softmax chain.
        s = jax.lax.dot_general(q, k, (((2,), (2,)), ((0,), (0,))),
                                preferred_element_type=jnp.float32)     # (NH*B, S, S)
        s = s + bias_full
        m = jnp.max(s, axis=-1, keepdims=True)
        p = jnp.exp(s - m)
        p = p * pl.reciprocal(jnp.sum(p, axis=-1, keepdims=True), approx=True)
        ctx = jax.lax.dot_general(p, v, (((2,), (1,)), ((0,), (0,))),
                                  preferred_element_type=jnp.float32)   # (NH*B, S, Dh)

        # Back to (BS, H), head-major on lanes (matches wo's input layout).
        ctx2d = jnp.concatenate(
            [ctx[h * B:(h + 1) * B].reshape(BS, HEAD_DIM) for h in range(NUM_HEADS)],
            axis=-1)                                                    # (BS, H)

        # Output projection + residual + LayerNorm (fused, no HBM round-trip).
        attn = (jnp.dot(ctx2d, W(f"wo{l}", HIDDEN, HIDDEN),
                        preferred_element_type=jnp.float32)
                + V(f"bo{l}", HIDDEN))
        x = ln(x + attn, V(f"ln1_g{l}", HIDDEN), V(f"ln1_b{l}", HIDDEN))

        # FFN: dense + GELU, dense, residual + LayerNorm.
        # TODO(synk): HF BERT uses erf-GELU; tanh-approx gelu used here (EUP-friendly).
        ff = (jnp.dot(x, W(f"w1{l}", HIDDEN, INTERMEDIATE),
                      preferred_element_type=jnp.float32)
              + V(f"b1{l}", INTERMEDIATE))
        ff = jax.nn.gelu(ff, approximate=True)
        ff = (jnp.dot(ff, W(f"w2{l}", INTERMEDIATE, HIDDEN),
                      preferred_element_type=jnp.float32)
              + V(f"b2{l}", HIDDEN))
        x = ln(x + ff, V(f"ln2_g{l}", HIDDEN), V(f"ln2_b{l}", HIDDEN))

    # ---- classifier on ALL rows (one MXU op); wrapper slices CLS rows ----
    cls_wT = V("cls_w", HIDDEN, rows=NUM_CLASSES)                       # (C, H)
    logits = (jax.lax.dot_general(x, cls_wT, (((1,), (1,)), ((), ())),
                                  preferred_element_type=jnp.float32)
              + V("cls_b", NUM_CLASSES))                                # (BS, C)
    out_ref[...] = logits.astype(out_ref.dtype)


# ----------------- parameter init (deterministic, synthetic) + packing -----------------
def _pack_rows(layout_off, total_rows, entries):
    slab = jnp.zeros((total_rows, LANE), jnp.float32)
    for name, arr in entries.items():
        arr = jnp.asarray(arr, jnp.float32)
        if arr.ndim == 1:
            arr = arr[None, :]
        r = layout_off[name]
        slab = slab.at[r:r + arr.shape[0], 0:arr.shape[1]].set(arr)
    return slab


def init_params(key):
    ks = iter(jax.random.split(key, 64))

    def norm(shape, scale=0.02):
        return scale * jax.random.normal(next(ks), shape, dtype=jnp.float32)

    attn_scale = 1.0 / math.sqrt(HEAD_DIM)

    w_entries = {
        "word_emb": norm((VOCAB, HIDDEN)),
        "pos_emb": norm((MAX_POS, HIDDEN)),
    }
    v_entries = {
        "emb_ln_g": jnp.ones((HIDDEN,), jnp.float32),
        "emb_ln_b": jnp.zeros((HIDDEN,), jnp.float32),
        "type_emb": norm((HIDDEN,)),
        "cls_w": norm((NUM_CLASSES, HIDDEN)),        # stored transposed (C, H)
        "cls_b": jnp.zeros((NUM_CLASSES,), jnp.float32),
    }
    for l in range(NUM_LAYERS):
        # Fold the 1/sqrt(head_dim) attention scale into the Q projection (equivalent math).
        wq = norm((HIDDEN, HIDDEN)) * attn_scale
        wk = norm((HIDDEN, HIDDEN))
        wv = norm((HIDDEN, HIDDEN))
        w_entries[f"wqkv{l}"] = jnp.concatenate([wq, wk, wv], axis=1)   # (H, 3H)
        w_entries[f"wo{l}"] = norm((HIDDEN, HIDDEN))
        w_entries[f"w1{l}"] = norm((HIDDEN, INTERMEDIATE))
        w_entries[f"w2{l}"] = norm((INTERMEDIATE, HIDDEN))
        v_entries[f"bqkv{l}"] = jnp.zeros((3 * HIDDEN,), jnp.float32)
        v_entries[f"bo{l}"] = jnp.zeros((HIDDEN,), jnp.float32)
        v_entries[f"ln1_g{l}"] = jnp.ones((HIDDEN,), jnp.float32)
        v_entries[f"ln1_b{l}"] = jnp.zeros((HIDDEN,), jnp.float32)
        v_entries[f"b1{l}"] = jnp.zeros((INTERMEDIATE,), jnp.float32)
        v_entries[f"b2{l}"] = jnp.zeros((HIDDEN,), jnp.float32)
        v_entries[f"ln2_g{l}"] = jnp.ones((HIDDEN,), jnp.float32)
        v_entries[f"ln2_b{l}"] = jnp.zeros((HIDDEN,), jnp.float32)

    return {
        "w_slab": _pack_rows(W_OFF, W_ROWS, w_entries),       # (512, 128) fp32
        "v_slab": _pack_rows(V_OFF, V_ROWS_PAD, v_entries),   # (24, 128) fp32
    }


# ----------------- BERT_Wrapper.forward -----------------
@jax.jit
def bert_wrapper_forward(packed, input_ids, attention_mask):
    B, S = input_ids.shape
    BS = B * S

    ids2d = input_ids.reshape(BS, 1).astype(jnp.int32)
    mask_f = attention_mask.astype(jnp.float32)                # (B, S)

    def _mm(m, k, n):
        return 2 * m * k * n

    flops = (_mm(BS, VOCAB, HIDDEN)
             + NUM_LAYERS * (_mm(BS, HIDDEN, 3 * HIDDEN)
                             + 2 * NUM_HEADS * B * _mm(S, HEAD_DIM, S)
                             + _mm(BS, HIDDEN, HIDDEN)
                             + _mm(BS, HIDDEN, INTERMEDIATE)
                             + _mm(BS, INTERMEDIATE, HIDDEN))
             + _mm(BS, HIDDEN, NUM_CLASSES))
    transcendentals = (NUM_LAYERS * (NUM_HEADS * B * S * S + BS * INTERMEDIATE)
                       + (2 * NUM_LAYERS + 1) * BS)
    bytes_accessed = 4 * (ids2d.size + mask_f.size + packed["w_slab"].size
                          + packed["v_slab"].size + BS * NUM_CLASSES)

    logits_all = pl.pallas_call(
        _bert_fused_kernel,
        out_shape=jax.ShapeDtypeStruct((BS, NUM_CLASSES), jnp.float32),
        in_specs=[pl.BlockSpec(memory_space=pltpu.MemorySpace.VMEM)] * 4,
        out_specs=pl.BlockSpec(memory_space=pltpu.MemorySpace.VMEM),
        cost_estimate=pl.CostEstimate(flops=flops,
                                      transcendentals=transcendentals,
                                      bytes_accessed=bytes_accessed),
    )(ids2d, mask_f, packed["w_slab"], packed["v_slab"])

    # CLS token (row 0 of every sequence) -> final logits.
    return logits_all.reshape(B, S, NUM_CLASSES)[:, 0, :]


# ----------------- main -----------------
if __name__ == "__main__":
    B, S = 2, 8
    key = jax.random.PRNGKey(0)
    k_params, k_ids = jax.random.split(key)

    packed = init_params(k_params)
    input_ids = jax.random.randint(k_ids, (B, S), 0, VOCAB, dtype=jnp.int32)
    attention_mask = jnp.ones((B, S), dtype=jnp.int32).at[:, S - 2:].set(0)  # pad last 2 tokens

    logits = bert_wrapper_forward(packed, input_ids, attention_mask)
    jax.block_until_ready(logits)
    assert logits.shape == (B, NUM_CLASSES)
    print("KERNEL_OK")
</pallas_src>

<mosaic_0001>
module attributes {stable_mosaic.version = 11 : i64} {
  func.func @_bert_fused_kernel(%arg0: memref<16x1xi32, #tpu.memory_space<vmem>>, %arg1: memref<2x8xf32, #tpu.memory_space<vmem>>, %arg2: memref<512x128xf32, #tpu.memory_space<vmem>>, %arg3: memref<24x128xf32, #tpu.memory_space<vmem>>, %arg4: memref<16x2xf32, #tpu.memory_space<vmem>>) attributes {dimension_semantics = [], scalar_prefetch = 0 : i64, scratch_operands = 0 : i64, tpu.core_type = #tpu.core_type<tc>} {
    %c0 = arith.constant 0 : index
    %c0_0 = arith.constant 0 : index
    %0 = vector.load %arg0[%c0, %c0_0] : memref<16x1xi32, #tpu.memory_space<vmem>>, vector<16x1xi32>
    %1 = tpu.iota {dimensions = array<i32: 1>} : vector<16x128xi32>
    %2 = vector.broadcast %0 : vector<16x1xi32> to vector<16x128xi32>
    %3 = arith.cmpi eq, %2, %1 : vector<16x128xi32>
    %4 = arith.extui %3 : vector<16x128xi1> to vector<16x128xi32>
    %5 = arith.sitofp %4 : vector<16x128xi32> to vector<16x128xf32>
    %c0_1 = arith.constant 0 : index
    %c0_2 = arith.constant 0 : index
    %6 = vector.load %arg2[%c0_1, %c0_2] : memref<512x128xf32, #tpu.memory_space<vmem>>, vector<128x32xf32>
    %cst = arith.constant dense<0.000000e+00> : vector<16x32xf32>
    %7 = tpu.matmul %5, %6, %cst {dimension_numbers = #tpu.dot_dimension_numbers<[1], [0], [0], [1], [0, 0, 1, 1], [], []>} : vector<16x128xf32>, vector<128x32xf32>, vector<16x32xf32> -> vector<16x32xf32>
    %c128 = arith.constant 128 : index
    %c0_3 = arith.constant 0 : index
    %8 = vector.load %arg2[%c128, %c0_3] : memref<512x128xf32, #tpu.memory_space<vmem>>, vector<8x32xf32>
    %9 = tpu.concatenate %8, %8 in 0 : vector<8x32xf32>, vector<8x32xf32> -> vector<16x32xf32>
    %10 = arith.addf %7, %9 : vector<16x32xf32>
    %c2 = arith.constant 2 : index
    %c0_4 = arith.constant 0 : index
    %11 = vector.load %arg3[%c2, %c0_4] : memref<24x128xf32, #tpu.memory_space<vmem>>, vector<1x32xf32>
    %12 = vector.broadcast %11 : vector<1x32xf32> to vector<16x32xf32>
    %13 = arith.addf %10, %12 : vector<16x32xf32>
    %c0_5 = arith.constant 0 : index
    %c0_6 = arith.constant 0 : index
    %14 = vector.load %arg3[%c0_5, %c0_6] : memref<24x128xf32, #tpu.memory_space<vmem>>, vector<1x32xf32>
    %c1 = arith.constant 1 : index
    %c0_7 = arith.constant 0 : index
    %15 = vector.load %arg3[%c1, %c0_7] : memref<24x128xf32, #tpu.memory_space<vmem>>, vector<1x32xf32>
    %cst_8 = arith.constant dense<0.000000e+00> : vector<16xf32>
    %16 = vector.multi_reduction <add>, %13, %cst_8 [1] : vector<16x32xf32> to vector<16xf32>
    %17 = vector.shape_cast %16 : vector<16xf32> to vector<16x1xf32>
    %cst_9 = arith.constant 3.200000e+01 : f32
    %18 = vector.broadcast %cst_9 : f32 to vector<16x1xf32>
    %19 = arith.divf %17, %18 : vector<16x1xf32>
    %20 = vector.broadcast %19 : vector<16x1xf32> to vector<16x32xf32>
    %21 = arith.subf %13, %20 : vector<16x32xf32>
    %22 = arith.mulf %21, %21 : vector<16x32xf32>
    %cst_10 = arith.constant dense<0.000000e+00> : vector<16xf32>
    %23 = vector.multi_reduction <add>, %22, %cst_10 [1] : vector<16x32xf32> to vector<16xf32>
    %24 = vector.shape_cast %23 : vector<16xf32> to vector<16x1xf32>
    %cst_11 = arith.constant 3.200000e+01 : f32
    %25 = vector.broadcast %cst_11 : f32 to vector<16x1xf32>
    %26 = arith.divf %24, %25 : vector<16x1xf32>
    %cst_12 = arith.constant 9.99999996E-13 : f32
    %27 = vector.broadcast %cst_12 : f32 to vector<16x1xf32>
    %28 = arith.addf %26, %27 : vector<16x1xf32>
    %29 = math.rsqrt %28 : vector<16x1xf32>
    %30 = vector.broadcast %29 : vector<16x1xf32> to vector<16x32xf32>
    %31 = arith.mulf %21, %30 : vector<16x32xf32>
    %32 = vector.broadcast %14 : vector<1x32xf32> to vector<16x32xf32>
    %33 = arith.mulf %31, %32 : vector<16x32xf32>
    %34 = vector.broadcast %15 : vector<1x32xf32> to vector<16x32xf32>
    %35 = arith.addf %33, %34 : vector<16x32xf32>
    %c0_13 = arith.constant 0 : index
    %c0_14 = arith.constant 0 : index
    %36 = vector.load %arg1[%c0_13, %c0_14] : memref<2x8xf32, #tpu.memory_space<vmem>>, vector<2x8xf32>
    %cst_15 = arith.constant 1.000000e+00 : f32
    %37 = vector.broadcast %cst_15 : f32 to vector<2x8xf32>
    %38 = arith.subf %37, %36 : vector<2x8xf32>
    %cst_16 = arith.constant -1.000000e+09 : f32
    %39 = vector.broadcast %cst_16 : f32 to vector<2x8xf32>
    %40 = arith.mulf %38, %39 : vector<2x8xf32>
    %41 = tpu.concatenate %40, %40, %40, %40 in 0 : vector<2x8xf32>, vector<2x8xf32>, vector<2x8xf32>, vector<2x8xf32> -> vector<8x8xf32>
    %42 = vector.shape_cast %41 : vector<8x8xf32> to vector<8x1x8xf32>
    %c192 = arith.constant 192 : index
    %c0_17 = arith.constant 0 : index
    %43 = vector.load %arg2[%c192, %c0_17] : memref<512x128xf32, #tpu.memory_space<vmem>>, vector<32x96xf32>
    %cst_18 = arith.constant dense<0.000000e+00> : vector<16x96xf32>
    %44 = tpu.matmul %35, %43, %cst_18 {dimension_numbers = #tpu.dot_dimension_numbers<[1], [0], [0], [1], [0, 0, 1, 1], [], []>} : vector<16x32xf32>, vector<32x96xf32>, vector<16x96xf32> -> vector<16x96xf32>
    %c6 = arith.constant 6 : index
    %c0_19 = arith.constant 0 : index
    %45 = vector.load %arg3[%c6, %c0_19] : memref<24x128xf32, #tpu.memory_space<vmem>>, vector<1x96xf32>
    %46 = vector.broadcast %45 : vector<1x96xf32> to vector<16x96xf32>
    %47 = arith.addf %44, %46 : vector<16x96xf32>
    %48 = vector.extract_strided_slice %47 {offsets = [0, 0], sizes = [16, 8], strides = [1, 1]} : vector<16x96xf32> to vector<16x8xf32>
    %49 = vector.shape_cast %48 : vector<16x8xf32> to vector<2x8x8xf32>
    %50 = vector.extract_strided_slice %47 {offsets = [0, 8], sizes = [16, 8], strides = [1, 1]} : vector<16x96xf32> to vector<16x8xf32>
    %51 = vector.shape_cast %50 : vector<16x8xf32> to vector<2x8x8xf32>
    %52 = vector.extract_strided_slice %47 {offsets = [0, 16], sizes = [16, 8], strides = [1, 1]} : vector<16x96xf32> to vector<16x8xf32>
    %53 = vector.shape_cast %52 : vector<16x8xf32> to vector<2x8x8xf32>
    %54 = vector.extract_strided_slice %47 {offsets = [0, 24], sizes = [16, 8], strides = [1, 1]} : vector<16x96xf32> to vector<16x8xf32>
    %55 = vector.shape_cast %54 : vector<16x8xf32> to vector<2x8x8xf32>
    %56 = tpu.concatenate %49, %51, %53, %55 in 0 : vector<2x8x8xf32>, vector<2x8x8xf32>, vector<2x8x8xf32>, vector<2x8x8xf32> -> vector<8x8x8xf32>
    %57 = vector.extract_strided_slice %47 {offsets = [0, 32], sizes = [16, 8], strides = [1, 1]} : vector<16x96xf32> to vector<16x8xf32>
    %58 = vector.shape_cast %57 : vector<16x8xf32> to vector<2x8x8xf32>
    %59 = vector.extract_strided_slice %47 {offsets = [0, 40], sizes = [16, 8], strides = [1, 1]} : vector<16x96xf32> to vector<16x8xf32>
    %60 = vector.shape_cast %59 : vector<16x8xf32> to vector<2x8x8xf32>
    %61 = vector.extract_strided_slice %47 {offsets = [0, 48], sizes = [16, 8], strides = [1, 1]} : vector<16x96xf32> to vector<16x8xf32>
    %62 = vector.shape_cast %61 : vector<16x8xf32> to vector<2x8x8xf32>
    %63 = vector.extract_strided_slice %47 {offsets = [0, 56], sizes = [16, 8], strides = [1, 1]} : vector<16x96xf32> to vector<16x8xf32>
    %64 = vector.shape_cast %63 : vector<16x8xf32> to vector<2x8x8xf32>
    %65 = tpu.concatenate %58, %60, %62, %64 in 0 : vector<2x8x8xf32>, vector<2x8x8xf32>, vector<2x8x8xf32>, vector<2x8x8xf32> -> vector<8x8x8xf32>
    %66 = vector.extract_strided_slice %47 {offsets = [0, 64], sizes = [16, 8], strides = [1, 1]} : vector<16x96xf32> to vector<16x8xf32>
    %67 = vector.shape_cast %66 : vector<16x8xf32> to vector<2x8x8xf32>
    %68 = vector.extract_strided_slice %47 {offsets = [0, 72], sizes = [16, 8], strides = [1, 1]} : vector<16x96xf32> to vector<16x8xf32>
    %69 = vector.shape_cast %68 : vector<16x8xf32> to vector<2x8x8xf32>
    %70 = vector.extract_strided_slice %47 {offsets = [0, 80], sizes = [16, 8], strides = [1, 1]} : vector<16x96xf32> to vector<16x8xf32>
    %71 = vector.shape_cast %70 : vector<16x8xf32> to vector<2x8x8xf32>
    %72 = vector.extract_strided_slice %47 {offsets = [0, 88], sizes = [16, 8], strides = [1, 1]} : vector<16x96xf32> to vector<16x8xf32>
    %73 = vector.shape_cast %72 : vector<16x8xf32> to vector<2x8x8xf32>
    %74 = tpu.concatenate %67, %69, %71, %73 in 0 : vector<2x8x8xf32>, vector<2x8x8xf32>, vector<2x8x8xf32>, vector<2x8x8xf32> -> vector<8x8x8xf32>
    %cst_20 = arith.constant dense<0.000000e+00> : vector<8x8x8xf32>
    %75 = tpu.matmul %56, %65, %cst_20 {dimension_numbers = #tpu.dot_dimension_numbers<[2], [2], [1], [1], [0, 0, 0, 1, 1, 1], [0], [0]>} : vector<8x8x8xf32>, vector<8x8x8xf32>, vector<8x8x8xf32> -> vector<8x8x8xf32>
    %76 = vector.broadcast %42 : vector<8x1x8xf32> to vector<8x8x8xf32>
    %77 = arith.addf %75, %76 : vector<8x8x8xf32>
    %cst_21 = arith.constant dense<0xFF800000> : vector<8x8xf32>
    %78 = vector.multi_reduction <maximumf>, %77, %cst_21 [2] : vector<8x8x8xf32> to vector<8x8xf32>
    %79 = vector.shape_cast %78 : vector<8x8xf32> to vector<8x8x1xf32>
    %80 = vector.broadcast %79 : vector<8x8x1xf32> to vector<8x8x8xf32>
    %81 = arith.subf %77, %80 : vector<8x8x8xf32>
    %82 = math.exp %81 : vector<8x8x8xf32>
    %cst_22 = arith.constant dense<0.000000e+00> : vector<8x8xf32>
    %83 = vector.multi_reduction <add>, %82, %cst_22 [2] : vector<8x8x8xf32> to vector<8x8xf32>
    %84 = vector.shape_cast %83 : vector<8x8xf32> to vector<8x8x1xf32>
    %85 = tpu.reciprocal %84 {approx = true} : vector<8x8x1xf32> -> vector<8x8x1xf32>
    %86 = vector.broadcast %85 : vector<8x8x1xf32> to vector<8x8x8xf32>
    %87 = arith.mulf %82, %86 : vector<8x8x8xf32>
    %cst_23 = arith.constant dense<0.000000e+00> : vector<8x8x8xf32>
    %88 = tpu.matmul %87, %74, %cst_23 {dimension_numbers = #tpu.dot_dimension_numbers<[2], [1], [1], [2], [0, 0, 0, 1, 1, 2], [0], [0]>} : vector<8x8x8xf32>, vector<8x8x8xf32>, vector<8x8x8xf32> -> vector<8x8x8xf32>
    %89 = vector.extract_strided_slice %88 {offsets = [0, 0, 0], sizes = [2, 8, 8], strides = [1, 1, 1]} : vector<8x8x8xf32> to vector<2x8x8xf32>
    %90 = vector.shape_cast %89 : vector<2x8x8xf32> to vector<16x8xf32>
    %91 = vector.extract_strided_slice %88 {offsets = [2, 0, 0], sizes = [2, 8, 8], strides = [1, 1, 1]} : vector<8x8x8xf32> to vector<2x8x8xf32>
    %92 = vector.shape_cast %91 : vector<2x8x8xf32> to vector<16x8xf32>
    %93 = vector.extract_strided_slice %88 {offsets = [4, 0, 0], sizes = [2, 8, 8], strides = [1, 1, 1]} : vector<8x8x8xf32> to vector<2x8x8xf32>
    %94 = vector.shape_cast %93 : vector<2x8x8xf32> to vector<16x8xf32>
    %95 = vector.extract_strided_slice %88 {offsets = [6, 0, 0], sizes = [2, 8, 8], strides = [1, 1, 1]} : vector<8x8x8xf32> to vector<2x8x8xf32>
    %96 = vector.shape_cast %95 : vector<2x8x8xf32> to vector<16x8xf32>
    %97 = tpu.concatenate %90, %92, %94, %96 in 1 : vector<16x8xf32>, vector<16x8xf32>, vector<16x8xf32>, vector<16x8xf32> -> vector<16x32xf32>
    %c224 = arith.constant 224 : index
    %c0_24 = arith.constant 0 : index
    %98 = vector.load %arg2[%c224, %c0_24] : memref<512x128xf32, #tpu.memory_space<vmem>>, vector<32x32xf32>
    %cst_25 = arith.constant dense<0.000000e+00> : vector<16x32xf32>
    %99 = tpu.matmul %97, %98, %cst_25 {dimension_numbers = #tpu.dot_dimension_numbers<[1], [0], [0], [1], [0, 0, 1, 1], [], []>} : vector<16x32xf32>, vector<32x32xf32>, vector<16x32xf32> -> vector<16x32xf32>
    %c7 = arith.constant 7 : index
    %c0_26 = arith.constant 0 : index
    %100 = vector.load %arg3[%c7, %c0_26] : memref<24x128xf32, #tpu.memory_space<vmem>>, vector<1x32xf32>
    %101 = vector.broadcast %100 : vector<1x32xf32> to vector<16x32xf32>
    %102 = arith.addf %99, %101 : vector<16x32xf32>
    %103 = arith.addf %35, %102 : vector<16x32xf32>
    %c8 = arith.constant 8 : index
    %c0_27 = arith.constant 0 : index
    %104 = vector.load %arg3[%c8, %c0_27] : memref<24x128xf32, #tpu.memory_space<vmem>>, vector<1x32xf32>
    %c9 = arith.constant 9 : index
    %c0_28 = arith.constant 0 : index
    %105 = vector.load %arg3[%c9, %c0_28] : memref<24x128xf32, #tpu.memory_space<vmem>>, vector<1x32xf32>
    %cst_29 = arith.constant dense<0.000000e+00> : vector<16xf32>
    %106 = vector.multi_reduction <add>, %103, %cst_29 [1] : vector<16x32xf32> to vector<16xf32>
    %107 = vector.shape_cast %106 : vector<16xf32> to vector<16x1xf32>
    %cst_30 = arith.constant 3.200000e+01 : f32
    %108 = vector.broadcast %cst_30 : f32 to vector<16x1xf32>
    %109 = arith.divf %107, %108 : vector<16x1xf32>
    %110 = vector.broadcast %109 : vector<16x1xf32> to vector<16x32xf32>
    %111 = arith.subf %103, %110 : vector<16x32xf32>
    %112 = arith.mulf %111, %111 : vector<16x32xf32>
    %cst_31 = arith.constant dense<0.000000e+00> : vector<16xf32>
    %113 = vector.multi_reduction <add>, %112, %cst_31 [1] : vector<16x32xf32> to vector<16xf32>
    %114 = vector.shape_cast %113 : vector<16xf32> to vector<16x1xf32>
    %cst_32 = arith.constant 3.200000e+01 : f32
    %115 = vector.broadcast %cst_32 : f32 to vector<16x1xf32>
    %116 = arith.divf %114, %115 : vector<16x1xf32>
    %cst_33 = arith.constant 9.99999996E-13 : f32
    %117 = vector.broadcast %cst_33 : f32 to vector<16x1xf32>
    %118 = arith.addf %116, %117 : vector<16x1xf32>
    %119 = math.rsqrt %118 : vector<16x1xf32>
    %120 = vector.broadcast %119 : vector<16x1xf32> to vector<16x32xf32>
    %121 = arith.mulf %111, %120 : vector<16x32xf32>
    %122 = vector.broadcast %104 : vector<1x32xf32> to vector<16x32xf32>
    %123 = arith.mulf %121, %122 : vector<16x32xf32>
    %124 = vector.broadcast %105 : vector<1x32xf32> to vector<16x32xf32>
    %125 = arith.addf %123, %124 : vector<16x32xf32>
    %c256 = arith.constant 256 : index
    %c0_34 = arith.constant 0 : index
    %126 = vector.load %arg2[%c256, %c0_34] : memref<512x128xf32, #tpu.memory_space<vmem>>, vector<32x64xf32>
    %cst_35 = arith.constant dense<0.000000e+00> : vector<16x64xf32>
    %127 = tpu.matmul %125, %126, %cst_35 {dimension_numbers = #tpu.dot_dimension_numbers<[1], [0], [0], [1], [0, 0, 1, 1], [], []>} : vector<16x32xf32>, vector<32x64xf32>, vector<16x64xf32> -> vector<16x64xf32>
    %c10 = arith.constant 10 : index
    %c0_36 = arith.constant 0 : index
    %128 = vector.load %arg3[%c10, %c0_36] : memref<24x128xf32, #tpu.memory_space<vmem>>, vector<1x64xf32>
    %129 = vector.broadcast %128 : vector<1x64xf32> to vector<16x64xf32>
    %130 = arith.addf %127, %129 : vector<16x64xf32>
    %131 = arith.mulf %130, %130 : vector<16x64xf32>
    %132 = arith.mulf %130, %131 : vector<16x64xf32>
    %cst_37 = arith.constant 4.471500e-02 : f32
    %133 = vector.broadcast %cst_37 : f32 to vector<16x64xf32>
    %134 = arith.mulf %133, %132 : vector<16x64xf32>
    %135 = arith.addf %130, %134 : vector<16x64xf32>
    %cst_38 = arith.constant 0.797884583 : f32
    %136 = vector.broadcast %cst_38 : f32 to vector<16x64xf32>
    %137 = arith.mulf %136, %135 : vector<16x64xf32>
    %138 = math.tanh %137 : vector<16x64xf32>
    %cst_39 = arith.constant 1.000000e+00 : f32
    %139 = vector.broadcast %cst_39 : f32 to vector<16x64xf32>
    %140 = arith.addf %139, %138 : vector<16x64xf32>
    %cst_40 = arith.constant 5.000000e-01 : f32
    %141 = vector.broadcast %cst_40 : f32 to vector<16x64xf32>
    %142 = arith.mulf %141, %140 : vector<16x64xf32>
    %143 = arith.mulf %130, %142 : vector<16x64xf32>
    %c288 = arith.constant 288 : index
    %c0_41 = arith.constant 0 : index
    %144 = vector.load %arg2[%c288, %c0_41] : memref<512x128xf32, #tpu.memory_space<vmem>>, vector<64x32xf32>
    %cst_42 = arith.constant dense<0.000000e+00> : vector<16x32xf32>
    %145 = tpu.matmul %143, %144, %cst_42 {dimension_numbers = #tpu.dot_dimension_numbers<[1], [0], [0], [1], [0, 0, 1, 1], [], []>} : vector<16x64xf32>, vector<64x32xf32>, vector<16x32xf32> -> vector<16x32xf32>
    %c11 = arith.constant 11 : index
    %c0_43 = arith.constant 0 : index
    %146 = vector.load %arg3[%c11, %c0_43] : memref<24x128xf32, #tpu.memory_space<vmem>>, vector<1x32xf32>
    %147 = vector.broadcast %146 : vector<1x32xf32> to vector<16x32xf32>
    %148 = arith.addf %145, %147 : vector<16x32xf32>
    %149 = arith.addf %125, %148 : vector<16x32xf32>
    %c12 = arith.constant 12 : index
    %c0_44 = arith.constant 0 : index
    %150 = vector.load %arg3[%c12, %c0_44] : memref<24x128xf32, #tpu.memory_space<vmem>>, vector<1x32xf32>
    %c13 = arith.constant 13 : index
    %c0_45 = arith.constant 0 : index
    %151 = vector.load %arg3[%c13, %c0_45] : memref<24x128xf32, #tpu.memory_space<vmem>>, vector<1x32xf32>
    %cst_46 = arith.constant dense<0.000000e+00> : vector<16xf32>
    %152 = vector.multi_reduction <add>, %149, %cst_46 [1] : vector<16x32xf32> to vector<16xf32>
    %153 = vector.shape_cast %152 : vector<16xf32> to vector<16x1xf32>
    %cst_47 = arith.constant 3.200000e+01 : f32
    %154 = vector.broadcast %cst_47 : f32 to vector<16x1xf32>
    %155 = arith.divf %153, %154 : vector<16x1xf32>
    %156 = vector.broadcast %155 : vector<16x1xf32> to vector<16x32xf32>
    %157 = arith.subf %149, %156 : vector<16x32xf32>
    %158 = arith.mulf %157, %157 : vector<16x32xf32>
    %cst_48 = arith.constant dense<0.000000e+00> : vector<16xf32>
    %159 = vector.multi_reduction <add>, %158, %cst_48 [1] : vector<16x32xf32> to vector<16xf32>
    %160 = vector.shape_cast %159 : vector<16xf32> to vector<16x1xf32>
    %cst_49 = arith.constant 3.200000e+01 : f32
    %161 = vector.broadcast %cst_49 : f32 to vector<16x1xf32>
    %162 = arith.divf %160, %161 : vector<16x1xf32>
    %cst_50 = arith.constant 9.99999996E-13 : f32
    %163 = vector.broadcast %cst_50 : f32 to vector<16x1xf32>
    %164 = arith.addf %162, %163 : vector<16x1xf32>
    %165 = math.rsqrt %164 : vector<16x1xf32>
    %166 = vector.broadcast %165 : vector<16x1xf32> to vector<16x32xf32>
    %167 = arith.mulf %157, %166 : vector<16x32xf32>
    %168 = vector.broadcast %150 : vector<1x32xf32> to vector<16x32xf32>
    %169 = arith.mulf %167, %168 : vector<16x32xf32>
    %170 = vector.broadcast %151 : vector<1x32xf32> to vector<16x32xf32>
    %171 = arith.addf %169, %170 : vector<16x32xf32>
    %c352 = arith.constant 352 : index
    %c0_51 = arith.constant 0 : index
    %172 = vector.load %arg2[%c352, %c0_51] : memref<512x128xf32, #tpu.memory_space<vmem>>, vector<32x96xf32>
    %cst_52 = arith.constant dense<0.000000e+00> : vector<16x96xf32>
    %173 = tpu.matmul %171, %172, %cst_52 {dimension_numbers = #tpu.dot_dimension_numbers<[1], [0], [0], [1], [0, 0, 1, 1], [], []>} : vector<16x32xf32>, vector<32x96xf32>, vector<16x96xf32> -> vector<16x96xf32>
    %c14 = arith.constant 14 : index
    %c0_53 = arith.constant 0 : index
    %174 = vector.load %arg3[%c14, %c0_53] : memref<24x128xf32, #tpu.memory_space<vmem>>, vector<1x96xf32>
    %175 = vector.broadcast %174 : vector<1x96xf32> to vector<16x96xf32>
    %176 = arith.addf %173, %175 : vector<16x96xf32>
    %177 = vector.extract_strided_slice %176 {offsets = [0, 0], sizes = [16, 8], strides = [1, 1]} : vector<16x96xf32> to vector<16x8xf32>
    %178 = vector.shape_cast %177 : vector<16x8xf32> to vector<2x8x8xf32>
    %179 = vector.extract_strided_slice %176 {offsets = [0, 8], sizes = [16, 8], strides = [1, 1]} : vector<16x96xf32> to vector<16x8xf32>
    %180 = vector.shape_cast %179 : vector<16x8xf32> to vector<2x8x8xf32>
    %181 = vector.extract_strided_slice %176 {offsets = [0, 16], sizes = [16, 8], strides = [1, 1]} : vector<16x96xf32> to vector<16x8xf32>
    %182 = vector.shape_cast %181 : vector<16x8xf32> to vector<2x8x8xf32>
    %183 = vector.extract_strided_slice %176 {offsets = [0, 24], sizes = [16, 8], strides = [1, 1]} : vector<16x96xf32> to vector<16x8xf32>
    %184 = vector.shape_cast %183 : vector<16x8xf32> to vector<2x8x8xf32>
    %185 = tpu.concatenate %178, %180, %182, %184 in 0 : vector<2x8x8xf32>, vector<2x8x8xf32>, vector<2x8x8xf32>, vector<2x8x8xf32> -> vector<8x8x8xf32>
    %186 = vector.extract_strided_slice %176 {offsets = [0, 32], sizes = [16, 8], strides = [1, 1]} : vector<16x96xf32> to vector<16x8xf32>
    %187 = vector.shape_cast %186 : vector<16x8xf32> to vector<2x8x8xf32>
    %188 = vector.extract_strided_slice %176 {offsets = [0, 40], sizes = [16, 8], strides = [1, 1]} : vector<16x96xf32> to vector<16x8xf32>
    %189 = vector.shape_cast %188 : vector<16x8xf32> to vector<2x8x8xf32>
    %190 = vector.extract_strided_slice %176 {offsets = [0, 48], sizes = [16, 8], strides = [1, 1]} : vector<16x96xf32> to vector<16x8xf32>
    %191 = vector.shape_cast %190 : vector<16x8xf32> to vector<2x8x8xf32>
    %192 = vector.extract_strided_slice %176 {offsets = [0, 56], sizes = [16, 8], strides = [1, 1]} : vector<16x96xf32> to vector<16x8xf32>
    %193 = vector.shape_cast %192 : vector<16x8xf32> to vector<2x8x8xf32>
    %194 = tpu.concatenate %187, %189, %191, %193 in 0 : vector<2x8x8xf32>, vector<2x8x8xf32>, vector<2x8x8xf32>, vector<2x8x8xf32> -> vector<8x8x8xf32>
    %195 = vector.extract_strided_slice %176 {offsets = [0, 64], sizes = [16, 8], strides = [1, 1]} : vector<16x96xf32> to vector<16x8xf32>
    %196 = vector.shape_cast %195 : vector<16x8xf32> to vector<2x8x8xf32>
    %197 = vector.extract_strided_slice %176 {offsets = [0, 72], sizes = [16, 8], strides = [1, 1]} : vector<16x96xf32> to vector<16x8xf32>
    %198 = vector.shape_cast %197 : vector<16x8xf32> to vector<2x8x8xf32>
    %199 = vector.extract_strided_slice %176 {offsets = [0, 80], sizes = [16, 8], strides = [1, 1]} : vector<16x96xf32> to vector<16x8xf32>
    %200 = vector.shape_cast %199 : vector<16x8xf32> to vector<2x8x8xf32>
    %201 = vector.extract_strided_slice %176 {offsets = [0, 88], sizes = [16, 8], strides = [1, 1]} : vector<16x96xf32> to vector<16x8xf32>
    %202 = vector.shape_cast %201 : vector<16x8xf32> to vector<2x8x8xf32>
    %203 = tpu.concatenate %196, %198, %200, %202 in 0 : vector<2x8x8xf32>, vector<2x8x8xf32>, vector<2x8x8xf32>, vector<2x8x8xf32> -> vector<8x8x8xf32>
    %cst_54 = arith.constant dense<0.000000e+00> : vector<8x8x8xf32>
    %204 = tpu.matmul %185, %194, %cst_54 {dimension_numbers = #tpu.dot_dimension_numbers<[2], [2], [1], [1], [0, 0, 0, 1, 1, 1], [0], [0]>} : vector<8x8x8xf32>, vector<8x8x8xf32>, vector<8x8x8xf32> -> vector<8x8x8xf32>
    %205 = vector.broadcast %42 : vector<8x1x8xf32> to vector<8x8x8xf32>
    %206 = arith.addf %204, %205 : vector<8x8x8xf32>
    %cst_55 = arith.constant dense<0xFF800000> : vector<8x8xf32>
    %207 = vector.multi_reduction <maximumf>, %206, %cst_55 [2] : vector<8x8x8xf32> to vector<8x8xf32>
    %208 = vector.shape_cast %207 : vector<8x8xf32> to vector<8x8x1xf32>
    %209 = vector.broadcast %208 : vector<8x8x1xf32> to vector<8x8x8xf32>
    %210 = arith.subf %206, %209 : vector<8x8x8xf32>
    %211 = math.exp %210 : vector<8x8x8xf32>
    %cst_56 = arith.constant dense<0.000000e+00> : vector<8x8xf32>
    %212 = vector.multi_reduction <add>, %211, %cst_56 [2] : vector<8x8x8xf32> to vector<8x8xf32>
    %213 = vector.shape_cast %212 : vector<8x8xf32> to vector<8x8x1xf32>
    %214 = tpu.reciprocal %213 {approx = true} : vector<8x8x1xf32> -> vector<8x8x1xf32>
    %215 = vector.broadcast %214 : vector<8x8x1xf32> to vector<8x8x8xf32>
    %216 = arith.mulf %211, %215 : vector<8x8x8xf32>
    %cst_57 = arith.constant dense<0.000000e+00> : vector<8x8x8xf32>
    %217 = tpu.matmul %216, %203, %cst_57 {dimension_numbers = #tpu.dot_dimension_numbers<[2], [1], [1], [2], [0, 0, 0, 1, 1, 2], [0], [0]>} : vector<8x8x8xf32>, vector<8x8x8xf32>, vector<8x8x8xf32> -> vector<8x8x8xf32>
    %218 = vector.extract_strided_slice %217 {offsets = [0, 0, 0], sizes = [2, 8, 8], strides = [1, 1, 1]} : vector<8x8x8xf32> to vector<2x8x8xf32>
    %219 = vector.shape_cast %218 : vector<2x8x8xf32> to vector<16x8xf32>
    %220 = vector.extract_strided_slice %217 {offsets = [2, 0, 0], sizes = [2, 8, 8], strides = [1, 1, 1]} : vector<8x8x8xf32> to vector<2x8x8xf32>
    %221 = vector.shape_cast %220 : vector<2x8x8xf32> to vector<16x8xf32>
    %222 = vector.extract_strided_slice %217 {offsets = [4, 0, 0], sizes = [2, 8, 8], strides = [1, 1, 1]} : vector<8x8x8xf32> to vector<2x8x8xf32>
    %223 = vector.shape_cast %222 : vector<2x8x8xf32> to vector<16x8xf32>
    %224 = vector.extract_strided_slice %217 {offsets = [6, 0, 0], sizes = [2, 8, 8], strides = [1, 1, 1]} : vector<8x8x8xf32> to vector<2x8x8xf32>
    %225 = vector.shape_cast %224 : vector<2x8x8xf32> to vector<16x8xf32>
    %226 = tpu.concatenate %219, %221, %223, %225 in 1 : vector<16x8xf32>, vector<16x8xf32>, vector<16x8xf32>, vector<16x8xf32> -> vector<16x32xf32>
    %c384 = arith.constant 384 : index
    %c0_58 = arith.constant 0 : index
    %227 = vector.load %arg2[%c384, %c0_58] : memref<512x128xf32, #tpu.memory_space<vmem>>, vector<32x32xf32>
    %cst_59 = arith.constant dense<0.000000e+00> : vector<16x32xf32>
    %228 = tpu.matmul %226, %227, %cst_59 {dimension_numbers = #tpu.dot_dimension_numbers<[1], [0], [0], [1], [0, 0, 1, 1], [], []>} : vector<16x32xf32>, vector<32x32xf32>, vector<16x32xf32> -> vector<16x32xf32>
    %c15 = arith.constant 15 : index
    %c0_60 = arith.constant 0 : index
    %229 = vector.load %arg3[%c15, %c0_60] : memref<24x128xf32, #tpu.memory_space<vmem>>, vector<1x32xf32>
    %230 = vector.broadcast %229 : vector<1x32xf32> to vector<16x32xf32>
    %231 = arith.addf %228, %230 : vector<16x32xf32>
    %232 = arith.addf %171, %231 : vector<16x32xf32>
    %c16 = arith.constant 16 : index
    %c0_61 = arith.constant 0 : index
    %233 = vector.load %arg3[%c16, %c0_61] : memref<24x128xf32, #tpu.memory_space<vmem>>, vector<1x32xf32>
    %c17 = arith.constant 17 : index
    %c0_62 = arith.constant 0 : index
    %234 = vector.load %arg3[%c17, %c0_62] : memref<24x128xf32, #tpu.memory_space<vmem>>, vector<1x32xf32>
    %cst_63 = arith.constant dense<0.000000e+00> : vector<16xf32>
    %235 = vector.multi_reduction <add>, %232, %cst_63 [1] : vector<16x32xf32> to vector<16xf32>
    %236 = vector.shape_cast %235 : vector<16xf32> to vector<16x1xf32>
    %cst_64 = arith.constant 3.200000e+01 : f32
    %237 = vector.broadcast %cst_64 : f32 to vector<16x1xf32>
    %238 = arith.divf %236, %237 : vector<16x1xf32>
    %239 = vector.broadcast %238 : vector<16x1xf32> to vector<16x32xf32>
    %240 = arith.subf %232, %239 : vector<16x32xf32>
    %241 = arith.mulf %240, %240 : vector<16x32xf32>
    %cst_65 = arith.constant dense<0.000000e+00> : vector<16xf32>
    %242 = vector.multi_reduction <add>, %241, %cst_65 [1] : vector<16x32xf32> to vector<16xf32>
    %243 = vector.shape_cast %242 : vector<16xf32> to vector<16x1xf32>
    %cst_66 = arith.constant 3.200000e+01 : f32
    %244 = vector.broadcast %cst_66 : f32 to vector<16x1xf32>
    %245 = arith.divf %243, %244 : vector<16x1xf32>
    %cst_67 = arith.constant 9.99999996E-13 : f32
    %246 = vector.broadcast %cst_67 : f32 to vector<16x1xf32>
    %247 = arith.addf %245, %246 : vector<16x1xf32>
    %248 = math.rsqrt %247 : vector<16x1xf32>
    %249 = vector.broadcast %248 : vector<16x1xf32> to vector<16x32xf32>
    %250 = arith.mulf %240, %249 : vector<16x32xf32>
    %251 = vector.broadcast %233 : vector<1x32xf32> to vector<16x32xf32>
    %252 = arith.mulf %250, %251 : vector<16x32xf32>
    %253 = vector.broadcast %234 : vector<1x32xf32> to vector<16x32xf32>
    %254 = arith.addf %252, %253 : vector<16x32xf32>
    %c416 = arith.constant 416 : index
    %c0_68 = arith.constant 0 : index
    %255 = vector.load %arg2[%c416, %c0_68] : memref<512x128xf32, #tpu.memory_space<vmem>>, vector<32x64xf32>
    %cst_69 = arith.constant dense<0.000000e+00> : vector<16x64xf32>
    %256 = tpu.matmul %254, %255, %cst_69 {dimension_numbers = #tpu.dot_dimension_numbers<[1], [0], [0], [1], [0, 0, 1, 1], [], []>} : vector<16x32xf32>, vector<32x64xf32>, vector<16x64xf32> -> vector<16x64xf32>
    %c18 = arith.constant 18 : index
    %c0_70 = arith.constant 0 : index
    %257 = vector.load %arg3[%c18, %c0_70] : memref<24x128xf32, #tpu.memory_space<vmem>>, vector<1x64xf32>
    %258 = vector.broadcast %257 : vector<1x64xf32> to vector<16x64xf32>
    %259 = arith.addf %256, %258 : vector<16x64xf32>
    %260 = arith.mulf %259, %259 : vector<16x64xf32>
    %261 = arith.mulf %259, %260 : vector<16x64xf32>
    %cst_71 = arith.constant 4.471500e-02 : f32
    %262 = vector.broadcast %cst_71 : f32 to vector<16x64xf32>
    %263 = arith.mulf %262, %261 : vector<16x64xf32>
    %264 = arith.addf %259, %263 : vector<16x64xf32>
    %cst_72 = arith.constant 0.797884583 : f32
    %265 = vector.broadcast %cst_72 : f32 to vector<16x64xf32>
    %266 = arith.mulf %265, %264 : vector<16x64xf32>
    %267 = math.tanh %266 : vector<16x64xf32>
    %cst_73 = arith.constant 1.000000e+00 : f32
    %268 = vector.broadcast %cst_73 : f32 to vector<16x64xf32>
    %269 = arith.addf %268, %267 : vector<16x64xf32>
    %cst_74 = arith.constant 5.000000e-01 : f32
    %270 = vector.broadcast %cst_74 : f32 to vector<16x64xf32>
    %271 = arith.mulf %270, %269 : vector<16x64xf32>
    %272 = arith.mulf %259, %271 : vector<16x64xf32>
    %c448 = arith.constant 448 : index
    %c0_75 = arith.constant 0 : index
    %273 = vector.load %arg2[%c448, %c0_75] : memref<512x128xf32, #tpu.memory_space<vmem>>, vector<64x32xf32>
    %cst_76 = arith.constant dense<0.000000e+00> : vector<16x32xf32>
    %274 = tpu.matmul %272, %273, %cst_76 {dimension_numbers = #tpu.dot_dimension_numbers<[1], [0], [0], [1], [0, 0, 1, 1], [], []>} : vector<16x64xf32>, vector<64x32xf32>, vector<16x32xf32> -> vector<16x32xf32>
    %c19 = arith.constant 19 : index
    %c0_77 = arith.constant 0 : index
    %275 = vector.load %arg3[%c19, %c0_77] : memref<24x128xf32, #tpu.memory_space<vmem>>, vector<1x32xf32>
    %276 = vector.broadcast %275 : vector<1x32xf32> to vector<16x32xf32>
    %277 = arith.addf %274, %276 : vector<16x32xf32>
    %278 = arith.addf %254, %277 : vector<16x32xf32>
    %c20 = arith.constant 20 : index
    %c0_78 = arith.constant 0 : index
    %279 = vector.load %arg3[%c20, %c0_78] : memref<24x128xf32, #tpu.memory_space<vmem>>, vector<1x32xf32>
    %c21 = arith.constant 21 : index
    %c0_79 = arith.constant 0 : index
    %280 = vector.load %arg3[%c21, %c0_79] : memref<24x128xf32, #tpu.memory_space<vmem>>, vector<1x32xf32>
    %cst_80 = arith.constant dense<0.000000e+00> : vector<16xf32>
    %281 = vector.multi_reduction <add>, %278, %cst_80 [1] : vector<16x32xf32> to vector<16xf32>
    %282 = vector.shape_cast %281 : vector<16xf32> to vector<16x1xf32>
    %cst_81 = arith.constant 3.200000e+01 : f32
    %283 = vector.broadcast %cst_81 : f32 to vector<16x1xf32>
    %284 = arith.divf %282, %283 : vector<16x1xf32>
    %285 = vector.broadcast %284 : vector<16x1xf32> to vector<16x32xf32>
    %286 = arith.subf %278, %285 : vector<16x32xf32>
    %287 = arith.mulf %286, %286 : vector<16x32xf32>
    %cst_82 = arith.constant dense<0.000000e+00> : vector<16xf32>
    %288 = vector.multi_reduction <add>, %287, %cst_82 [1] : vector<16x32xf32> to vector<16xf32>
    %289 = vector.shape_cast %288 : vector<16xf32> to vector<16x1xf32>
    %cst_83 = arith.constant 3.200000e+01 : f32
    %290 = vector.broadcast %cst_83 : f32 to vector<16x1xf32>
    %291 = arith.divf %289, %290 : vector<16x1xf32>
    %cst_84 = arith.constant 9.99999996E-13 : f32
    %292 = vector.broadcast %cst_84 : f32 to vector<16x1xf32>
    %293 = arith.addf %291, %292 : vector<16x1xf32>
    %294 = math.rsqrt %293 : vector<16x1xf32>
    %295 = vector.broadcast %294 : vector<16x1xf32> to vector<16x32xf32>
    %296 = arith.mulf %286, %295 : vector<16x32xf32>
    %297 = vector.broadcast %279 : vector<1x32xf32> to vector<16x32xf32>
    %298 = arith.mulf %296, %297 : vector<16x32xf32>
    %299 = vector.broadcast %280 : vector<1x32xf32> to vector<16x32xf32>
    %300 = arith.addf %298, %299 : vector<16x32xf32>
    %c3 = arith.constant 3 : index
    %c0_85 = arith.constant 0 : index
    %301 = vector.load %arg3[%c3, %c0_85] : memref<24x128xf32, #tpu.memory_space<vmem>>, vector<2x32xf32>
    %cst_86 = arith.constant dense<0.000000e+00> : vector<16x2xf32>
    %302 = tpu.matmul %300, %301, %cst_86 {dimension_numbers = #tpu.dot_dimension_numbers<[1], [1], [0], [0], [0, 0, 1, 0], [], []>} : vector<16x32xf32>, vector<2x32xf32>, vector<16x2xf32> -> vector<16x2xf32>
    %c5 = arith.constant 5 : index
    %c0_87 = arith.constant 0 : index
    %303 = vector.load %arg3[%c5, %c0_87] : memref<24x128xf32, #tpu.memory_space<vmem>>, vector<1x2xf32>
    %304 = vector.broadcast %303 : vector<1x2xf32> to vector<16x2xf32>
    %305 = arith.addf %302, %304 : vector<16x2xf32>
    %c0_88 = arith.constant 0 : index
    %c0_89 = arith.constant 0 : index
    %306 = vector.load %arg4[%c0_88, %c0_89] : memref<16x2xf32, #tpu.memory_space<vmem>>, vector<16x2xf32>
    tpu.vector_store %arg4[%c0_88, %c0_89], %305 {strides = array<i32>} : memref<16x2xf32, #tpu.memory_space<vmem>>, vector<16x2xf32>,
    return
  }
}

</mosaic_0001>

<llo_original>
// kernel: bert_wrapper_forward.1
$region0: #{bert_wrapper_forward.1}
  #allocation0 [shape = 'u32[]', space=smem, size = 0x4, offset = 0x4, fixed_abs, tag = 'smem constant byte address 0x4 - core index']
  #allocation1 [shape = 'u32[144,128]{1,0:T(1,128)}', space=vmem, size = 0x12000, scoped, tag = 'internal scratch']
  %s0 = inlined_call_operand.vmem [shape: s32[16,1], index: 0, kind: input, shape index: {}]
  %s1 = inlined_call_operand.vmem [shape: f32[2,8], index: 1, kind: input, shape index: {}]
  %s2 = inlined_call_operand.hbm [shape: f32[512,128], index: 2, kind: input, shape index: {}]
  %s3 = inlined_call_operand.hbm [shape: f32[24,128], index: 3, kind: input, shape index: {}]
  %s4 = inlined_call_operand.vmem [shape: f32[16,2], index: 4, kind: output, shape index: {}]
  %s5 = sld [smem:[#allocation0]]
  $region34: #{bert_wrapper_forward.1} parent=0
    _
  %s7 = ssub.s32 1, %s5
  %s8 = scalar_select 0, %s7, %s5
  $region1: #{bert_wrapper_forward.1} parent=0
    #allocation2 [shape = 'u8[262144]{0}', space=vmem, size = 0x40000, scoped, tag = 'input window, operand 2, single buffered']
    #allocation3 [shape = 's32[1]{0}', space=sflag, size = 0x4, scoped, tag = 'scoped memory for bert_wrapper_forward.1']
    #allocation4 [shape = 'u8[12288]{0}', space=vmem, size = 0x3000, scoped, tag = 'input window, operand 3, single buffered']
    #allocation5 [shape = 's32[1]{0}', space=sflag, size = 0x4, scoped, tag = 'scoped memory for bert_wrapper_forward.1']
    %9 = vsyncpa [#allocation3], 0
    %10 = vsyncpa [#allocation5], 0
    // Predicated region
    $region2: #{bert_wrapper_forward.1} parent=1 // pred_check
      _
    $region3: #{bert_wrapper_forward.1} parent=1 // pred_check_branch
      %12 = sbr.rel (0) target = $region5
    $region4: #{bert_wrapper_forward.1} parent=1 // pred_region
      _
    $region5: #{bert_wrapper_forward.1} parent=1 // pred_fallthru
      _
    // Predicated region
    $region6: #{bert_wrapper_forward.1} parent=1 // pred_check
      _
    $region7: #{bert_wrapper_forward.1} parent=1 // pred_check_branch
      %14 = sbr.rel (0) target = $region9
    $region8: #{bert_wrapper_forward.1} parent=1 // pred_region
      _
    $region9: #{bert_wrapper_forward.1} parent=1 // pred_fallthru
      _
    // Predicated region
    $region10: #{bert_wrapper_forward.1} parent=1 // pred_check
      _
    $region11: #{bert_wrapper_forward.1} parent=1 // pred_check_branch
      %16 = sbr.rel (0) target = $region13
    $region12: #{bert_wrapper_forward.1} parent=1 // pred_region
      %s18 = ssub.s32 8192, 8192
      %19 = vsyncadd [#allocation3], %s18
      %s20 = sshll.u32 [#allocation2], 4
      %s21 = int_to_ptr.vmem [resolvable:$true] %s20
      %26 = dma.hbm_to_vmem [thread:$0]  %s2, 8192, %s21, [#allocation3], 128, 128, 8
    $region13: #{bert_wrapper_forward.1} parent=1 // pred_fallthru
      _
    // Predicated region
    $region14: #{bert_wrapper_forward.1} parent=1 // pred_check
      _
    $region15: #{bert_wrapper_forward.1} parent=1 // pred_check_branch
      %28 = sbr.rel (0) target = $region17
    $region16: #{bert_wrapper_forward.1} parent=1 // pred_region
      %s30 = ssub.s32 384, 384
      %31 = vsyncadd [#allocation5], %s30
      %s32 = sshll.u32 [#allocation4], 4
      %s33 = int_to_ptr.vmem [resolvable:$true] %s32
      %38 = dma.hbm_to_vmem [thread:$0]  %s3, 384, %s33, [#allocation5], 128, 128, 8
    $region17: #{bert_wrapper_forward.1} parent=1 // pred_fallthru
      _
    // Predicated region
    $region18: #{bert_wrapper_forward.1} parent=1 // pred_check
      _
    $region19: #{bert_wrapper_forward.1} parent=1 // pred_check_branch
      %40 = sbr.rel (0) target = $region21
    $region20: #{bert_wrapper_forward.1} parent=1 // pred_region
      %41 = dma.done [#allocation3], 8192
    $region21: #{bert_wrapper_forward.1} parent=1 // pred_fallthru
      _
    // Predicated region
    $region22: #{bert_wrapper_forward.1} parent=1 // pred_check
      _
    $region23: #{bert_wrapper_forward.1} parent=1 // pred_check_branch
      %43 = sbr.rel (0) target = $region25
    $region24: #{bert_wrapper_forward.1} parent=1 // pred_region
      %44 = dma.done [#allocation5], 384
    $region25: #{bert_wrapper_forward.1} parent=1 // pred_fallthru
      _
    %v45 = vld [vmem:[%s0] sm:$0xff]
    %v46 = vld [vmem:[%s0 + $0x8] sm:$0xff]
    %v47 = vlaneseq
    %v48 = vand.u32 %v47, 127
    %49 = vset.pattern.permute.xlu0 0
    %50 = vperm.xlu0 %49, %v45
    %v51 = vpop.permute.xlu0 %50
    %52 = vset.pattern.permute.xlu0 0
    %53 = vperm.xlu0 %52, %v46
    %v54 = vpop.permute.xlu0 %53
    %vm55 = vcmp.eq.s32.totalorder %v51, %v48
    %vm56 = vcmp.eq.s32.totalorder %v54, %v48
    %v57 = vsel %vm55, 1, 0
    %v58 = vsel %vm56, 1, 0
    %v59 = vcvt.s32.f32 %v57
    %v60 = vcvt.s32.f32 %v58
    %v61 = vld [vmem:[#allocation2] sm:$0xff]
    %v62 = vld [vmem:[#allocation2 + $0x8] sm:$0xff]
    %v63 = vld [vmem:[#allocation2 + $0x10] sm:$0xff]
    %v64 = vld [vmem:[#allocation2 + $0x18] sm:$0xff]
    %v65 = vld [vmem:[#allocation2 + $0x20] sm:$0xff]
    %v66 = vld [vmem:[#allocation2 + $0x28] sm:$0xff]
    %v67 = vld [vmem:[#allocation2 + $0x30] sm:$0xff]
    %v68 = vld [vmem:[#allocation2 + $0x38] sm:$0xff]
    %v69 = vld [vmem:[#allocation2 + $0x40] sm:$0xff]
    %v70 = vld [vmem:[#allocation2 + $0x48] sm:$0xff]
    %v71 = vld [vmem:[#allocation2 + $0x50] sm:$0xff]
    %v72 = vld [vmem:[#allocation2 + $0x58] sm:$0xff]
    %v73 = vld [vmem:[#allocation2 + $0x60] sm:$0xff]
    %v74 = vld [vmem:[#allocation2 + $0x68] sm:$0xff]
    %v75 = vld [vmem:[#allocation2 + $0x70] sm:$0xff]
    %v76 = vld [vmem:[#allocation2 + $0x78] sm:$0xff]
    %v77 = vld [vmem:[#allocation2 + $0x80] sm:$0xff]
    %78 = vmatprep.subr.mxu0 0.0
    %79 = vmatpush1.msra.mxu0 %v76
    %80 = vmatprep.subr.mxu0 0.0
    %81 = vmatpush1.msra.mxu0 %v75
    %82 = vmatprep.subr.mxu0 0.0
    %83 = vmatpush1.msra.mxu0 %v74
    %84 = vmatprep.subr.mxu0 0.0
    %85 = vmatpush1.msra.mxu0 %v73
    %86 = vmatprep.subr.mxu0 0.0
    %87 = vmatpush1.msra.mxu0 %v72
    %88 = vmatprep.subr.mxu0 0.0
    %89 = vmatpush1.msra.mxu0 %v71
    %90 = vmatprep.subr.mxu0 0.0
    %91 = vmatpush1.msra.mxu0 %v70
    %92 = vmatprep.subr.mxu0 0.0
    %93 = vmatpush1.msra.mxu0 %v69
    %94 = vmatprep.subr.mxu0 0.0
    %95 = vmatpush1.msra.mxu0 %v68
    %96 = vmatprep.subr.mxu0 0.0
    %97 = vmatpush1.msra.mxu0 %v67
    %98 = vmatprep.subr.mxu0 0.0
    %99 = vmatpush1.msra.mxu0 %v66
    %100 = vmatprep.subr.mxu0 0.0
    %101 = vmatpush1.msra.mxu0 %v65
    %102 = vmatprep.subr.mxu0 0.0
    %103 = vmatpush1.msra.mxu0 %v64
    %104 = vmatprep.subr.mxu0 0.0
    %105 = vmatpush1.msra.mxu0 %v63
    %106 = vmatprep.subr.mxu0 0.0
    %107 = vmatpush1.msra.mxu0 %v62
    %108 = vmatprep.subr.mxu0 0.0
    %109 = vmatpush1.msra.mxu0 %v61
    %110 = vmatprep.subr.mxu0 0.0
    %111 = vmatpush2.msra.mxu0 0.0
    %112 = vmatprep.subr.mxu0 0.0
    %113 = vmatpush2.msra.mxu0 0.0
    %114 = vmatprep.subr.mxu0 0.0
    %115 = vmatpush2.msra.mxu0 0.0
    %116 = vmatprep.subr.mxu0 0.0
    %117 = vmatpush2.msra.mxu0 0.0
    %118 = vmatprep.subr.mxu0 0.0
    %119 = vmatpush2.msra.mxu0 0.0
    %120 = vmatprep.subr.mxu0 0.0
    %121 = vmatpush2.msra.mxu0 0.0
    %122 = vmatprep.subr.mxu0 0.0
    %123 = vmatpush2.msra.mxu0 0.0
    %124 = vmatprep.subr.mxu0 0.0
    %125 = vmatpush2.msra.mxu0 0.0
    %126 = vmatprep.subr.mxu0 0.0
    %127 = vmatpush2.msra.mxu0 0.0
    %128 = vmatprep.subr.mxu0 0.0
    %129 = vmatpush2.msra.mxu0 0.0
    %130 = vmatprep.subr.mxu0 0.0
    %131 = vmatpush2.msra.mxu0 0.0
    %132 = vmatprep.subr.mxu0 0.0
    %133 = vmatpush2.msra.mxu0 0.0
    %134 = vmatprep.subr.mxu0 0.0
    %135 = vmatpush2.msra.mxu0 0.0
    %136 = vmatprep.subr.mxu0 0.0
    %137 = vmatpush2.msra.mxu0 0.0
    %138 = vmatprep.subr.mxu0 0.0
    %139 = vmatpush2.msra.mxu0 0.0
    %140 = vmatprep.subr.mxu0 0.0
    %141 = vmatpush2.msra.mxu0 0.0
    %142 = vmatprep.mubr.f32.mxu0 0.0
    %143 = vmatmul.mubr.f32.gmra.mxu0 %v59
    %v144 = vpop.f32.mrf.mxu0
    %v145 = vadd.f32 %v77, %v144
    %v146 = vpop.f32.mrf.mxu0
    %147 = vmatprep.mubr.f32.mxu0 0.0
    %148 = vmatmul.mubr.f32.gmra.mxu0 %v60
    %v149 = vpop.f32.mrf.mxu0
    %v150 = vadd.f32 %v77, %v149
    %v151 = vpop.f32.mrf.mxu0
    %152 = vdwg.mxu0
    %v153 = vld [vmem:[#allocation4 + $0x2] sm:$0x1]
    %v154 = vlaneseq
    %v155 = vshrl.u32 %v154, 7
    %v156 = vsub.s32 0, %v155
    %v157 = vrot.slane %v153, %v156
    %v158 = vadd.f32 %v145, %v157
    %v159 = vadd.f32 %v150, %v157
    %v160 = vld [vmem:[#allocation4] sm:$0x1]
    %v161 = vld [vmem:[#allocation4 + $0x1] sm:$0x1]
    %vm162 = vcmask 261120
    %v163 = vsel %vm162, %v158, 0.0
    %164 = vadd.xlane.f32.xlu0 %v163
    %v165 = vpop.xlane.xlu0 %164
    %v166 = vsel %vm162, %v159, 0.0
    %167 = vadd.xlane.f32.xlu0 %v166
    %v168 = vpop.xlane.xlu0 %167
    %v169 = vrcp.pop 32.0
    %v170 = vmul.f32 %v165, %v169
    %v171 = vmul.f32 %v168, %v169
    %v172 = vsub.f32 %v158, %v170
    %v173 = vsub.f32 %v159, %v171
    %v174 = vmul.f32 %v172, %v172
    %v175 = vmul.f32 %v173, %v173
    %v176 = vsel %vm162, %v174, 0.0
    %177 = vadd.xlane.f32.xlu0 %v176
    %v178 = vpop.xlane.xlu0 %177
    %v179 = vsel %vm162, %v175, 0.0
    %180 = vadd.xlane.f32.xlu0 %v179
    %v181 = vpop.xlane.xlu0 %180
    %v182 = vmul.f32 %v178, %v169
    %v183 = vmul.f32 %v181, %v169
    %v184 = vadd.f32 %v182, 1e-12
    %v185 = vadd.f32 %v183, 1e-12
    %v186 = vrsqrt.pop %v184
    %v187 = vrsqrt.pop %v185
    %v188 = vmul.f32 %v172, %v186
    %v189 = vmul.f32 %v173, %v187
    %v190 = vlaneseq
    %v191 = vshrl.u32 %v190, 7
    %v192 = vsub.s32 0, %v191
    %v193 = vrot.slane %v160, %v192
    %v194 = vmul.f32 %v188, %v193
    %v195 = vmul.f32 %v189, %v193
    %v196 = vlaneseq
    %v197 = vshrl.u32 %v196, 7
    %v198 = vsub.s32 0, %v197
    %v199 = vrot.slane %v161, %v198
    %v200 = vadd.f32 %v194, %v199
    %v201 = vadd.f32 %v195, %v199
    %v202 = vld [vmem:[%s1] sm:$0x3]
    %v203 = vsub.f32 1.0, %v202
    %v204 = vmul.f32 %v203, -1e+09
    %v206 = vrot.slane %v204, 6
    %v208 = vrot.slane %v204, 4
    %v210 = vrot.slane %v204, 2
    %vm212 = vcmask 1041408
    %v213 = vsel %vm212, %v204, %v206
    %vm214 = vcmask 1043456
    %v215 = vsel %vm214, %v213, %v208
    %vm216 = vcmask 1045504
    %v217 = vsel %vm216, %v215, %v210
    %v219 = vcombine.high %v217, %v217
    %v221 = vunpack.c.l.s4 1966171168
    %v222 = vunpack.c.0.s8 %v221
    %v223 = vlaneseq
    %v224 = vshrl.u32 %v223, 7
    %v225 = vsub.s32 %v222, %v224
    %v226 = vrot.slane %v217, %v225
    %v228 = vunpack.c.l.s4 1966171168
    %v229 = vunpack.c.0.s8 %v228
    %v230 = vlaneseq
    %v231 = vshrl.u32 %v230, 7
    %v232 = vsub.s32 %v229, %v231
    %v233 = vrot.slane %v219, %v232
    %v234 = vcombine.high %v226, %v226
    %v235 = vcombine.high %v233, %v233
    %v237 = vunpack.c.l.s4 1966171168
    %v238 = vunpack.c.0.s8 %v237
    %v239 = vlaneseq
    %v240 = vshrl.u32 %v239, 7
    %v241 = vsub.s32 %v238, %v240
    %v242 = vrot.slane %v226, %v241
    %v244 = vunpack.c.l.s4 1966171168
    %v245 = vunpack.c.0.s8 %v244
    %v246 = vlaneseq
    %v247 = vshrl.u32 %v246, 7
    %v248 = vsub.s32 %v245, %v247
    %v249 = vrot.slane %v233, %v248
    %v251 = vunpack.c.l.s4 1966171168
    %v252 = vunpack.c.0.s8 %v251
    %v253 = vlaneseq
    %v254 = vshrl.u32 %v253, 7
    %v255 = vsub.s32 %v252, %v254
    %v256 = vrot.slane %v234, %v255
    %v258 = vunpack.c.l.s4 1966171168
    %v259 = vunpack.c.0.s8 %v258
    %v260 = vlaneseq
    %v261 = vshrl.u32 %v260, 7
    %v262 = vsub.s32 %v259, %v261
    %v263 = vrot.slane %v235, %v262
    %v264 = vcombine.high %v242, %v242
    %v265 = vcombine.high %v249, %v249
    %v266 = vcombine.high %v256, %v256
    %v267 = vcombine.high %v263, %v263
    %v268 = vld [vmem:[#allocation2 + $0xc0] sm:$0xff]
    %v269 = vld [vmem:[#allocation2 + $0xc8] sm:$0xff]
    %v270 = vld [vmem:[#allocation2 + $0xd0] sm:$0xff]
    %v271 = vld [vmem:[#allocation2 + $0xd8] sm:$0xff]
    %v272 = vld [vmem:[#allocation4 + $0x6] sm:$0x1]
    %v273 = vlaneseq
    %v274 = vshrl.u32 %v273, 7
    %v275 = vsub.s32 0, %v274
    %v276 = vrot.slane %v272, %v275
    %v278 = vsel %vm162, %v200, 0
    %v281 = vsel %vm162, %v201, 0
    %283 = vmatprep.subr.mxu0 0.0
    %284 = vmatpush1.msra.mxu0 0.0
    %285 = vmatprep.subr.mxu0 0.0
    %286 = vmatpush1.msra.mxu0 0.0
    %287 = vmatprep.subr.mxu0 0.0
    %288 = vmatpush1.msra.mxu0 0.0
    %289 = vmatprep.subr.mxu0 0.0
    %290 = vmatpush1.msra.mxu0 0.0
    %291 = vmatprep.subr.mxu0 0.0
    %292 = vmatpush1.msra.mxu0 0.0
    %293 = vmatprep.subr.mxu0 0.0
    %294 = vmatpush1.msra.mxu0 0.0
    %295 = vmatprep.subr.mxu0 0.0
    %296 = vmatpush1.msra.mxu0 0.0
    %297 = vmatprep.subr.mxu0 0.0
    %298 = vmatpush1.msra.mxu0 0.0
    %299 = vmatprep.subr.mxu0 0.0
    %300 = vmatpush1.msra.mxu0 0.0
    %301 = vmatprep.subr.mxu0 0.0
    %302 = vmatpush1.msra.mxu0 0.0
    %303 = vmatprep.subr.mxu0 0.0
    %304 = vmatpush1.msra.mxu0 0.0
    %305 = vmatprep.subr.mxu0 0.0
    %306 = vmatpush1.msra.mxu0 0.0
    %307 = vmatprep.subr.mxu0 0.0
    %308 = vmatpush1.msra.mxu0 %v271
    %309 = vmatprep.subr.mxu0 0.0
    %310 = vmatpush1.msra.mxu0 %v270
    %311 = vmatprep.subr.mxu0 0.0
    %312 = vmatpush1.msra.mxu0 %v269
    %313 = vmatprep.subr.mxu0 0.0
    %314 = vmatpush1.msra.mxu0 %v268
    %315 = vmatprep.subr.mxu0 0.0
    %316 = vmatpush2.msra.mxu0 0.0
    %317 = vmatprep.subr.mxu0 0.0
    %318 = vmatpush2.msra.mxu0 0.0
    %319 = vmatprep.subr.mxu0 0.0
    %320 = vmatpush2.msra.mxu0 0.0
    %321 = vmatprep.subr.mxu0 0.0
    %322 = vmatpush2.msra.mxu0 0.0
    %323 = vmatprep.subr.mxu0 0.0
    %324 = vmatpush2.msra.mxu0 0.0
    %325 = vmatprep.subr.mxu0 0.0
    %326 = vmatpush2.msra.mxu0 0.0
    %327 = vmatprep.subr.mxu0 0.0
    %328 = vmatpush2.msra.mxu0 0.0
    %329 = vmatprep.subr.mxu0 0.0
    %330 = vmatpush2.msra.mxu0 0.0
    %331 = vmatprep.subr.mxu0 0.0
    %332 = vmatpush2.msra.mxu0 0.0
    %333 = vmatprep.subr.mxu0 0.0
    %334 = vmatpush2.msra.mxu0 0.0
    %335 = vmatprep.subr.mxu0 0.0
    %336 = vmatpush2.msra.mxu0 0.0
    %337 = vmatprep.subr.mxu0 0.0
    %338 = vmatpush2.msra.mxu0 0.0
    %339 = vmatprep.subr.mxu0 0.0
    %340 = vmatpush2.msra.mxu0 0.0
    %341 = vmatprep.subr.mxu0 0.0
    %342 = vmatpush2.msra.mxu0 0.0
    %343 = vmatprep.subr.mxu0 0.0
    %344 = vmatpush2.msra.mxu0 0.0
    %345 = vmatprep.subr.mxu0 0.0
    %346 = vmatpush2.msra.mxu0 0.0
    %347 = vmatprep.mubr.f32.mxu0 0.0
    %348 = vmatmul.mubr.f32.gmra.mxu0 %v278
    %v349 = vpop.f32.mrf.mxu0
    %v350 = vadd.f32 %v276, %v349
    %v351 = vpop.f32.mrf.mxu0
    %352 = vmatprep.mubr.f32.mxu0 0.0
    %353 = vmatmul.mubr.f32.gmra.mxu0 %v281
    %v354 = vpop.f32.mrf.mxu0
    %v355 = vadd.f32 %v276, %v354
    %v356 = vpop.f32.mrf.mxu0
    %357 = vdwg.mxu0
    %360 = vrot.lane.b32.xlu0 %v350, 120
    %v361 = vpop.permute.xlu0 %360
    %362 = vrot.lane.b32.xlu0 %v355, 120
    %v363 = vpop.permute.xlu0 %362
    %364 = vrot.lane.b32.xlu0 %v350, 112
    %v365 = vpop.permute.xlu0 %364
    %366 = vrot.lane.b32.xlu0 %v355, 112
    %v367 = vpop.permute.xlu0 %366
    %368 = vrot.lane.b32.xlu0 %v350, 104
    %v369 = vpop.permute.xlu0 %368
    %370 = vrot.lane.b32.xlu0 %v355, 104
    %v371 = vpop.permute.xlu0 %370
    %v372 = vlaneseq
    %v373 = vshrl.u32 %v372, 7
    %v374 = vsub.s32 0, %v373
    %v375 = vrot.slane %v242, %v374
    %v376 = vlaneseq
    %v377 = vshrl.u32 %v376, 7
    %v378 = vsub.s32 0, %v377
    %v379 = vrot.slane %v256, %v378
    %v380 = vlaneseq
    %v381 = vshrl.u32 %v380, 7
    %v382 = vsub.s32 0, %v381
    %v383 = vrot.slane %v264, %v382
    %v384 = vlaneseq
    %v385 = vshrl.u32 %v384, 7
    %v386 = vsub.s32 0, %v385
    %v387 = vrot.slane %v266, %v386
    %v388 = vlaneseq
    %v389 = vshrl.u32 %v388, 7
    %v390 = vsub.s32 0, %v389
    %v391 = vrot.slane %v249, %v390
    %v392 = vlaneseq
    %v393 = vshrl.u32 %v392, 7
    %v394 = vsub.s32 0, %v393
    %v395 = vrot.slane %v263, %v394
    %v396 = vlaneseq
    %v397 = vshrl.u32 %v396, 7
    %v398 = vsub.s32 0, %v397
    %v399 = vrot.slane %v265, %v398
    %v400 = vlaneseq
    %v401 = vshrl.u32 %v400, 7
    %v402 = vsub.s32 0, %v401
    %v403 = vrot.slane %v267, %v402
    %412 = vrot.lane.b32.xlu0 %v350, 96
    %v413 = vpop.permute.xlu0 %412
    %vm414 = vcmask 64512
    %v415 = vsel %vm414, %v350, 0
    %v417 = vsel %vm414, %v413, 0
    %419 = vmatprep.subr.mxu0 0.0
    %420 = vmatpush1.xpose.msra.mxu0 0.0
    %421 = vmatprep.subr.mxu0 0.0
    %422 = vmatpush1.xpose.msra.mxu0 0.0
    %423 = vmatprep.subr.mxu0 0.0
    %424 = vmatpush1.xpose.msra.mxu0 0.0
    %425 = vmatprep.subr.mxu0 0.0
    %426 = vmatpush1.xpose.msra.mxu0 0.0
    %427 = vmatprep.subr.mxu0 0.0
    %428 = vmatpush1.xpose.msra.mxu0 0.0
    %429 = vmatprep.subr.mxu0 0.0
    %430 = vmatpush1.xpose.msra.mxu0 0.0
    %431 = vmatprep.subr.mxu0 0.0
    %432 = vmatpush1.xpose.msra.mxu0 0.0
    %433 = vmatprep.subr.mxu0 0.0
    %434 = vmatpush1.xpose.msra.mxu0 0.0
    %435 = vmatprep.subr.mxu0 0.0
    %436 = vmatpush1.xpose.msra.mxu0 0.0
    %437 = vmatprep.subr.mxu0 0.0
    %438 = vmatpush1.xpose.msra.mxu0 0.0
    %439 = vmatprep.subr.mxu0 0.0
    %440 = vmatpush1.xpose.msra.mxu0 0.0
    %441 = vmatprep.subr.mxu0 0.0
    %442 = vmatpush1.xpose.msra.mxu0 0.0
    %443 = vmatprep.subr.mxu0 0.0
    %444 = vmatpush1.xpose.msra.mxu0 0.0
    %445 = vmatprep.subr.mxu0 0.0
    %446 = vmatpush1.xpose.msra.mxu0 0.0
    %447 = vmatprep.subr.mxu0 0.0
    %448 = vmatpush1.xpose.msra.mxu0 0.0
    %449 = vmatprep.subr.mxu0 0.0
    %450 = vmatpush1.xpose.msra.mxu0 %v417
    %451 = vmatprep.subr.mxu0 0.0
    %452 = vmatpush2.xpose.msra.mxu0 0.0
    %453 = vmatprep.subr.mxu0 0.0
    %454 = vmatpush2.xpose.msra.mxu0 0.0
    %455 = vmatprep.subr.mxu0 0.0
    %456 = vmatpush2.xpose.msra.mxu0 0.0
    %457 = vmatprep.subr.mxu0 0.0
    %458 = vmatpush2.xpose.msra.mxu0 0.0
    %459 = vmatprep.subr.mxu0 0.0
    %460 = vmatpush2.xpose.msra.mxu0 0.0
    %461 = vmatprep.subr.mxu0 0.0
    %462 = vmatpush2.xpose.msra.mxu0 0.0
    %463 = vmatprep.subr.mxu0 0.0
    %464 = vmatpush2.xpose.msra.mxu0 0.0
    %465 = vmatprep.subr.mxu0 0.0
    %466 = vmatpush2.xpose.msra.mxu0 0.0
    %467 = vmatprep.subr.mxu0 0.0
    %468 = vmatpush2.xpose.msra.mxu0 0.0
    %469 = vmatprep.subr.mxu0 0.0
    %470 = vmatpush2.xpose.msra.mxu0 0.0
    %471 = vmatprep.subr.mxu0 0.0
    %472 = vmatpush2.xpose.msra.mxu0 0.0
    %473 = vmatprep.subr.mxu0 0.0
    %474 = vmatpush2.xpose.msra.mxu0 0.0
    %475 = vmatprep.subr.mxu0 0.0
    %476 = vmatpush2.xpose.msra.mxu0 0.0
    %477 = vmatprep.subr.mxu0 0.0
    %478 = vmatpush2.xpose.msra.mxu0 0.0
    %479 = vmatprep.subr.mxu0 0.0
    %480 = vmatpush2.xpose.msra.mxu0 0.0
    %481 = vmatprep.subr.mxu0 0.0
    %482 = vmatpush2.xpose.msra.mxu0 0.0
    %483 = vmatprep.mubr.f32.mxu0 0.0
    %484 = vmatmul.mubr.f32.gmra.mxu0 %v415
    %v485 = vpop.f32.mrf.mxu0
    %v486 = vadd.f32 %v375, %v485
    %v487 = vpop.f32.mrf.mxu0
    %488 = vdwg.mxu0
    %489 = vrot.lane.b32.xlu0 %v355, 96
    %v490 = vpop.permute.xlu0 %489
    %v491 = vsel %vm414, %v355, 0
    %v493 = vsel %vm414, %v490, 0
    %495 = vmatprep.subr.mxu0 0.0
    %496 = vmatpush1.xpose.msra.mxu0 0.0
    %497 = vmatprep.subr.mxu0 0.0
    %498 = vmatpush1.xpose.msra.mxu0 0.0
    %499 = vmatprep.subr.mxu0 0.0
    %500 = vmatpush1.xpose.msra.mxu0 0.0
    %501 = vmatprep.subr.mxu0 0.0
    %502 = vmatpush1.xpose.msra.mxu0 0.0
    %503 = vmatprep.subr.mxu0 0.0
    %504 = vmatpush1.xpose.msra.mxu0 0.0
    %505 = vmatprep.subr.mxu0 0.0
    %506 = vmatpush1.xpose.msra.mxu0 0.0
    %507 = vmatprep.subr.mxu0 0.0
    %508 = vmatpush1.xpose.msra.mxu0 0.0
    %509 = vmatprep.subr.mxu0 0.0
    %510 = vmatpush1.xpose.msra.mxu0 0.0
    %511 = vmatprep.subr.mxu0 0.0
    %512 = vmatpush1.xpose.msra.mxu0 0.0
    %513 = vmatprep.subr.mxu0 0.0
    %514 = vmatpush1.xpose.msra.mxu0 0.0
    %515 = vmatprep.subr.mxu0 0.0
    %516 = vmatpush1.xpose.msra.mxu0 0.0
    %517 = vmatprep.subr.mxu0 0.0
    %518 = vmatpush1.xpose.msra.mxu0 0.0
    %519 = vmatprep.subr.mxu0 0.0
    %520 = vmatpush1.xpose.msra.mxu0 0.0
    %521 = vmatprep.subr.mxu0 0.0
    %522 = vmatpush1.xpose.msra.mxu0 0.0
    %523 = vmatprep.subr.mxu0 0.0
    %524 = vmatpush1.xpose.msra.mxu0 0.0
    %525 = vmatprep.subr.mxu0 0.0
    %526 = vmatpush1.xpose.msra.mxu0 %v493
    %527 = vmatprep.subr.mxu0 0.0
    %528 = vmatpush2.xpose.msra.mxu0 0.0
    %529 = vmatprep.subr.mxu0 0.0
    %530 = vmatpush2.xpose.msra.mxu0 0.0
    %531 = vmatprep.subr.mxu0 0.0
    %532 = vmatpush2.xpose.msra.mxu0 0.0
    %533 = vmatprep.subr.mxu0 0.0
    %534 = vmatpush2.xpose.msra.mxu0 0.0
    %535 = vmatprep.subr.mxu0 0.0
    %536 = vmatpush2.xpose.msra.mxu0 0.0
    %537 = vmatprep.subr.mxu0 0.0
    %538 = vmatpush2.xpose.msra.mxu0 0.0
    %539 = vmatprep.subr.mxu0 0.0
    %540 = vmatpush2.xpose.msra.mxu0 0.0
    %541 = vmatprep.subr.mxu0 0.0
    %542 = vmatpush2.xpose.msra.mxu0 0.0
    %543 = vmatprep.subr.mxu0 0.0
    %544 = vmatpush2.xpose.msra.mxu0 0.0
    %545 = vmatprep.subr.mxu0 0.0
    %546 = vmatpush2.xpose.msra.mxu0 0.0
    %547 = vmatprep.subr.mxu0 0.0
    %548 = vmatpush2.xpose.msra.mxu0 0.0
    %549 = vmatprep.subr.mxu0 0.0
    %550 = vmatpush2.xpose.msra.mxu0 0.0
    %551 = vmatprep.subr.mxu0 0.0
    %552 = vmatpush2.xpose.msra.mxu0 0.0
    %553 = vmatprep.subr.mxu0 0.0
    %554 = vmatpush2.xpose.msra.mxu0 0.0
    %555 = vmatprep.subr.mxu0 0.0
    %556 = vmatpush2.xpose.msra.mxu0 0.0
    %557 = vmatprep.subr.mxu0 0.0
    %558 = vmatpush2.xpose.msra.mxu0 0.0
    %559 = vmatprep.mubr.f32.mxu0 0.0
    %560 = vmatmul.mubr.f32.gmra.mxu0 %v491
    %v561 = vpop.f32.mrf.mxu0
    %v562 = vadd.f32 %v379, %v561
    %v563 = vpop.f32.mrf.mxu0
    %564 = vdwg.mxu0
    %565 = vrot.lane.b32.xlu0 %v361, 96
    %v566 = vpop.permute.xlu0 %565
    %v567 = vsel %vm414, %v361, 0
    %v569 = vsel %vm414, %v566, 0
    %571 = vmatprep.subr.mxu0 0.0
    %572 = vmatpush1.xpose.msra.mxu0 0.0
    %573 = vmatprep.subr.mxu0 0.0
    %574 = vmatpush1.xpose.msra.mxu0 0.0
    %575 = vmatprep.subr.mxu0 0.0
    %576 = vmatpush1.xpose.msra.mxu0 0.0
    %577 = vmatprep.subr.mxu0 0.0
    %578 = vmatpush1.xpose.msra.mxu0 0.0
    %579 = vmatprep.subr.mxu0 0.0
    %580 = vmatpush1.xpose.msra.mxu0 0.0
    %581 = vmatprep.subr.mxu0 0.0
    %582 = vmatpush1.xpose.msra.mxu0 0.0
    %583 = vmatprep.subr.mxu0 0.0
    %584 = vmatpush1.xpose.msra.mxu0 0.0
    %585 = vmatprep.subr.mxu0 0.0
    %586 = vmatpush1.xpose.msra.mxu0 0.0
    %587 = vmatprep.subr.mxu0 0.0
    %588 = vmatpush1.xpose.msra.mxu0 0.0
    %589 = vmatprep.subr.mxu0 0.0
    %590 = vmatpush1.xpose.msra.mxu0 0.0
    %591 = vmatprep.subr.mxu0 0.0
    %592 = vmatpush1.xpose.msra.mxu0 0.0
    %593 = vmatprep.subr.mxu0 0.0
    %594 = vmatpush1.xpose.msra.mxu0 0.0
    %595 = vmatprep.subr.mxu0 0.0
    %596 = vmatpush1.xpose.msra.mxu0 0.0
    %597 = vmatprep.subr.mxu0 0.0
    %598 = vmatpush1.xpose.msra.mxu0 0.0
    %599 = vmatprep.subr.mxu0 0.0
    %600 = vmatpush1.xpose.msra.mxu0 0.0
    %601 = vmatprep.subr.mxu0 0.0
    %602 = vmatpush1.xpose.msra.mxu0 %v569
    %603 = vmatprep.subr.mxu0 0.0
    %604 = vmatpush2.xpose.msra.mxu0 0.0
    %605 = vmatprep.subr.mxu0 0.0
    %606 = vmatpush2.xpose.msra.mxu0 0.0
    %607 = vmatprep.subr.mxu0 0.0
    %608 = vmatpush2.xpose.msra.mxu0 0.0
    %609 = vmatprep.subr.mxu0 0.0
    %610 = vmatpush2.xpose.msra.mxu0 0.0
    %611 = vmatprep.subr.mxu0 0.0
    %612 = vmatpush2.xpose.msra.mxu0 0.0
    %613 = vmatprep.subr.mxu0 0.0
    %614 = vmatpush2.xpose.msra.mxu0 0.0
    %615 = vmatprep.subr.mxu0 0.0
    %616 = vmatpush2.xpose.msra.mxu0 0.0
    %617 = vmatprep.subr.mxu0 0.0
    %618 = vmatpush2.xpose.msra.mxu0 0.0
    %619 = vmatprep.subr.mxu0 0.0
    %620 = vmatpush2.xpose.msra.mxu0 0.0
    %621 = vmatprep.subr.mxu0 0.0
    %622 = vmatpush2.xpose.msra.mxu0 0.0
    %623 = vmatprep.subr.mxu0 0.0
    %624 = vmatpush2.xpose.msra.mxu0 0.0
    %625 = vmatprep.subr.mxu0 0.0
    %626 = vmatpush2.xpose.msra.mxu0 0.0
    %627 = vmatprep.subr.mxu0 0.0
    %628 = vmatpush2.xpose.msra.mxu0 0.0
    %629 = vmatprep.subr.mxu0 0.0
    %630 = vmatpush2.xpose.msra.mxu0 0.0
    %631 = vmatprep.subr.mxu0 0.0
    %632 = vmatpush2.xpose.msra.mxu0 0.0
    %633 = vmatprep.subr.mxu0 0.0
    %634 = vmatpush2.xpose.msra.mxu0 0.0
    %635 = vmatprep.mubr.f32.mxu0 0.0
    %636 = vmatmul.mubr.f32.gmra.mxu0 %v567
    %v637 = vpop.f32.mrf.mxu0
    %v638 = vadd.f32 %v383, %v637
    %v639 = vpop.f32.mrf.mxu0
    %640 = vdwg.mxu0
    %641 = vrot.lane.b32.xlu0 %v363, 96
    %v642 = vpop.permute.xlu0 %641
    %v643 = vsel %vm414, %v363, 0
    %v645 = vsel %vm414, %v642, 0
    %647 = vmatprep.subr.mxu0 0.0
    %648 = vmatpush1.xpose.msra.mxu0 0.0
    %649 = vmatprep.subr.mxu0 0.0
    %650 = vmatpush1.xpose.msra.mxu0 0.0
    %651 = vmatprep.subr.mxu0 0.0
    %652 = vmatpush1.xpose.msra.mxu0 0.0
    %653 = vmatprep.subr.mxu0 0.0
    %654 = vmatpush1.xpose.msra.mxu0 0.0
    %655 = vmatprep.subr.mxu0 0.0
    %656 = vmatpush1.xpose.msra.mxu0 0.0
    %657 = vmatprep.subr.mxu0 0.0
    %658 = vmatpush1.xpose.msra.mxu0 0.0
    %659 = vmatprep.subr.mxu0 0.0
    %660 = vmatpush1.xpose.msra.mxu0 0.0
    %661 = vmatprep.subr.mxu0 0.0
    %662 = vmatpush1.xpose.msra.mxu0 0.0
    %663 = vmatprep.subr.mxu0 0.0
    %664 = vmatpush1.xpose.msra.mxu0 0.0
    %665 = vmatprep.subr.mxu0 0.0
    %666 = vmatpush1.xpose.msra.mxu0 0.0
    %667 = vmatprep.subr.mxu0 0.0
    %668 = vmatpush1.xpose.msra.mxu0 0.0
    %669 = vmatprep.subr.mxu0 0.0
    %670 = vmatpush1.xpose.msra.mxu0 0.0
    %671 = vmatprep.subr.mxu0 0.0
    %672 = vmatpush1.xpose.msra.mxu0 0.0
    %673 = vmatprep.subr.mxu0 0.0
    %674 = vmatpush1.xpose.msra.mxu0 0.0
    %675 = vmatprep.subr.mxu0 0.0
    %676 = vmatpush1.xpose.msra.mxu0 0.0
    %677 = vmatprep.subr.mxu0 0.0
    %678 = vmatpush1.xpose.msra.mxu0 %v645
    %679 = vmatprep.subr.mxu0 0.0
    %680 = vmatpush2.xpose.msra.mxu0 0.0
    %681 = vmatprep.subr.mxu0 0.0
    %682 = vmatpush2.xpose.msra.mxu0 0.0
    %683 = vmatprep.subr.mxu0 0.0
    %684 = vmatpush2.xpose.msra.mxu0 0.0
    %685 = vmatprep.subr.mxu0 0.0
    %686 = vmatpush2.xpose.msra.mxu0 0.0
    %687 = vmatprep.subr.mxu0 0.0
    %688 = vmatpush2.xpose.msra.mxu0 0.0
    %689 = vmatprep.subr.mxu0 0.0
    %690 = vmatpush2.xpose.msra.mxu0 0.0
    %691 = vmatprep.subr.mxu0 0.0
    %692 = vmatpush2.xpose.msra.mxu0 0.0
    %693 = vmatprep.subr.mxu0 0.0
    %694 = vmatpush2.xpose.msra.mxu0 0.0
    %695 = vmatprep.subr.mxu0 0.0
    %696 = vmatpush2.xpose.msra.mxu0 0.0
    %697 = vmatprep.subr.mxu0 0.0
    %698 = vmatpush2.xpose.msra.mxu0 0.0
    %699 = vmatprep.subr.mxu0 0.0
    %700 = vmatpush2.xpose.msra.mxu0 0.0
    %701 = vmatprep.subr.mxu0 0.0
    %702 = vmatpush2.xpose.msra.mxu0 0.0
    %703 = vmatprep.subr.mxu0 0.0
    %704 = vmatpush2.xpose.msra.mxu0 0.0
    %705 = vmatprep.subr.mxu0 0.0
    %706 = vmatpush2.xpose.msra.mxu0 0.0
    %707 = vmatprep.subr.mxu0 0.0
    %708 = vmatpush2.xpose.msra.mxu0 0.0
    %709 = vmatprep.subr.mxu0 0.0
    %710 = vmatpush2.xpose.msra.mxu0 0.0
    %711 = vmatprep.mubr.f32.mxu0 0.0
    %712 = vmatmul.mubr.f32.gmra.mxu0 %v643
    %v713 = vpop.f32.mrf.mxu0
    %v714 = vadd.f32 %v387, %v713
    %v715 = vpop.f32.mrf.mxu0
    %716 = vdwg.mxu0
    %717 = vrot.lane.b32.xlu0 %v365, 96
    %v718 = vpop.permute.xlu0 %717
    %v719 = vsel %vm414, %v365, 0
    %v721 = vsel %vm414, %v718, 0
    %723 = vmatprep.subr.mxu0 0.0
    %724 = vmatpush1.xpose.msra.mxu0 0.0
    %725 = vmatprep.subr.mxu0 0.0
    %726 = vmatpush1.xpose.msra.mxu0 0.0
    %727 = vmatprep.subr.mxu0 0.0
    %728 = vmatpush1.xpose.msra.mxu0 0.0
    %729 = vmatprep.subr.mxu0 0.0
    %730 = vmatpush1.xpose.msra.mxu0 0.0
    %731 = vmatprep.subr.mxu0 0.0
    %732 = vmatpush1.xpose.msra.mxu0 0.0
    %733 = vmatprep.subr.mxu0 0.0
    %734 = vmatpush1.xpose.msra.mxu0 0.0
    %735 = vmatprep.subr.mxu0 0.0
    %736 = vmatpush1.xpose.msra.mxu0 0.0
    %737 = vmatprep.subr.mxu0 0.0
    %738 = vmatpush1.xpose.msra.mxu0 0.0
    %739 = vmatprep.subr.mxu0 0.0
    %740 = vmatpush1.xpose.msra.mxu0 0.0
    %741 = vmatprep.subr.mxu0 0.0
    %742 = vmatpush1.xpose.msra.mxu0 0.0
    %743 = vmatprep.subr.mxu0 0.0
    %744 = vmatpush1.xpose.msra.mxu0 0.0
    %745 = vmatprep.subr.mxu0 0.0
    %746 = vmatpush1.xpose.msra.mxu0 0.0
    %747 = vmatprep.subr.mxu0 0.0
    %748 = vmatpush1.xpose.msra.mxu0 0.0
    %749 = vmatprep.subr.mxu0 0.0
    %750 = vmatpush1.xpose.msra.mxu0 0.0
    %751 = vmatprep.subr.mxu0 0.0
    %752 = vmatpush1.xpose.msra.mxu0 0.0
    %753 = vmatprep.subr.mxu0 0.0
    %754 = vmatpush1.xpose.msra.mxu0 %v721
    %755 = vmatprep.subr.mxu0 0.0
    %756 = vmatpush2.xpose.msra.mxu0 0.0
    %757 = vmatprep.subr.mxu0 0.0
    %758 = vmatpush2.xpose.msra.mxu0 0.0
    %759 = vmatprep.subr.mxu0 0.0
    %760 = vmatpush2.xpose.msra.mxu0 0.0
    %761 = vmatprep.subr.mxu0 0.0
    %762 = vmatpush2.xpose.msra.mxu0 0.0
    %763 = vmatprep.subr.mxu0 0.0
    %764 = vmatpush2.xpose.msra.mxu0 0.0
    %765 = vmatprep.subr.mxu0 0.0
    %766 = vmatpush2.xpose.msra.mxu0 0.0
    %767 = vmatprep.subr.mxu0 0.0
    %768 = vmatpush2.xpose.msra.mxu0 0.0
    %769 = vmatprep.subr.mxu0 0.0
    %770 = vmatpush2.xpose.msra.mxu0 0.0
    %771 = vmatprep.subr.mxu0 0.0
    %772 = vmatpush2.xpose.msra.mxu0 0.0
    %773 = vmatprep.subr.mxu0 0.0
    %774 = vmatpush2.xpose.msra.mxu0 0.0
    %775 = vmatprep.subr.mxu0 0.0
    %776 = vmatpush2.xpose.msra.mxu0 0.0
    %777 = vmatprep.subr.mxu0 0.0
    %778 = vmatpush2.xpose.msra.mxu0 0.0
    %779 = vmatprep.subr.mxu0 0.0
    %780 = vmatpush2.xpose.msra.mxu0 0.0
    %781 = vmatprep.subr.mxu0 0.0
    %782 = vmatpush2.xpose.msra.mxu0 0.0
    %783 = vmatprep.subr.mxu0 0.0
    %784 = vmatpush2.xpose.msra.mxu0 0.0
    %785 = vmatprep.subr.mxu0 0.0
    %786 = vmatpush2.xpose.msra.mxu0 0.0
    %787 = vmatprep.mubr.f32.mxu0 0.0
    %788 = vmatmul.mubr.f32.gmra.mxu0 %v719
    %v789 = vpop.f32.mrf.mxu0
    %v790 = vadd.f32 %v391, %v789
    %v791 = vpop.f32.mrf.mxu0
    %792 = vdwg.mxu0
    %793 = vrot.lane.b32.xlu0 %v367, 96
    %v794 = vpop.permute.xlu0 %793
    %v795 = vsel %vm414, %v367, 0
    %v797 = vsel %vm414, %v794, 0
    %799 = vmatprep.subr.mxu0 0.0
    %800 = vmatpush1.xpose.msra.mxu0 0.0
    %801 = vmatprep.subr.mxu0 0.0
    %802 = vmatpush1.xpose.msra.mxu0 0.0
    %803 = vmatprep.subr.mxu0 0.0
    %804 = vmatpush1.xpose.msra.mxu0 0.0
    %805 = vmatprep.subr.mxu0 0.0
    %806 = vmatpush1.xpose.msra.mxu0 0.0
    %807 = vmatprep.subr.mxu0 0.0
    %808 = vmatpush1.xpose.msra.mxu0 0.0
    %809 = vmatprep.subr.mxu0 0.0
    %810 = vmatpush1.xpose.msra.mxu0 0.0
    %811 = vmatprep.subr.mxu0 0.0
    %812 = vmatpush1.xpose.msra.mxu0 0.0
    %813 = vmatprep.subr.mxu0 0.0
    %814 = vmatpush1.xpose.msra.mxu0 0.0
    %815 = vmatprep.subr.mxu0 0.0
    %816 = vmatpush1.xpose.msra.mxu0 0.0
    %817 = vmatprep.subr.mxu0 0.0
    %818 = vmatpush1.xpose.msra.mxu0 0.0
    %819 = vmatprep.subr.mxu0 0.0
    %820 = vmatpush1.xpose.msra.mxu0 0.0
    %821 = vmatprep.subr.mxu0 0.0
    %822 = vmatpush1.xpose.msra.mxu0 0.0
    %823 = vmatprep.subr.mxu0 0.0
    %824 = vmatpush1.xpose.msra.mxu0 0.0
    %825 = vmatprep.subr.mxu0 0.0
    %826 = vmatpush1.xpose.msra.mxu0 0.0
    %827 = vmatprep.subr.mxu0 0.0
    %828 = vmatpush1.xpose.msra.mxu0 0.0
    %829 = vmatprep.subr.mxu0 0.0
    %830 = vmatpush1.xpose.msra.mxu0 %v797
    %831 = vmatprep.subr.mxu0 0.0
    %832 = vmatpush2.xpose.msra.mxu0 0.0
    %833 = vmatprep.subr.mxu0 0.0
    %834 = vmatpush2.xpose.msra.mxu0 0.0
    %835 = vmatprep.subr.mxu0 0.0
    %836 = vmatpush2.xpose.msra.mxu0 0.0
    %837 = vmatprep.subr.mxu0 0.0
    %838 = vmatpush2.xpose.msra.mxu0 0.0
    %839 = vmatprep.subr.mxu0 0.0
    %840 = vmatpush2.xpose.msra.mxu0 0.0
    %841 = vmatprep.subr.mxu0 0.0
    %842 = vmatpush2.xpose.msra.mxu0 0.0
    %843 = vmatprep.subr.mxu0 0.0
    %844 = vmatpush2.xpose.msra.mxu0 0.0
    %845 = vmatprep.subr.mxu0 0.0
    %846 = vmatpush2.xpose.msra.mxu0 0.0
    %847 = vmatprep.subr.mxu0 0.0
    %848 = vmatpush2.xpose.msra.mxu0 0.0
    %849 = vmatprep.subr.mxu0 0.0
    %850 = vmatpush2.xpose.msra.mxu0 0.0
    %851 = vmatprep.subr.mxu0 0.0
    %852 = vmatpush2.xpose.msra.mxu0 0.0
    %853 = vmatprep.subr.mxu0 0.0
    %854 = vmatpush2.xpose.msra.mxu0 0.0
    %855 = vmatprep.subr.mxu0 0.0
    %856 = vmatpush2.xpose.msra.mxu0 0.0
    %857 = vmatprep.subr.mxu0 0.0
    %858 = vmatpush2.xpose.msra.mxu0 0.0
    %859 = vmatprep.subr.mxu0 0.0
    %860 = vmatpush2.xpose.msra.mxu0 0.0
    %861 = vmatprep.subr.mxu0 0.0
    %862 = vmatpush2.xpose.msra.mxu0 0.0
    %863 = vmatprep.mubr.f32.mxu0 0.0
    %864 = vmatmul.mubr.f32.gmra.mxu0 %v795
    %v865 = vpop.f32.mrf.mxu0
    %v866 = vadd.f32 %v395, %v865
    %v867 = vpop.f32.mrf.mxu0
    %868 = vdwg.mxu0
    %869 = vrot.lane.b32.xlu0 %v369, 96
    %v870 = vpop.permute.xlu0 %869
    %v871 = vsel %vm414, %v369, 0
    %v873 = vsel %vm414, %v870, 0
    %875 = vmatprep.subr.mxu0 0.0
    %876 = vmatpush1.xpose.msra.mxu0 0.0
    %877 = vmatprep.subr.mxu0 0.0
    %878 = vmatpush1.xpose.msra.mxu0 0.0
    %879 = vmatprep.subr.mxu0 0.0
    %880 = vmatpush1.xpose.msra.mxu0 0.0
    %881 = vmatprep.subr.mxu0 0.0
    %882 = vmatpush1.xpose.msra.mxu0 0.0
    %883 = vmatprep.subr.mxu0 0.0
    %884 = vmatpush1.xpose.msra.mxu0 0.0
    %885 = vmatprep.subr.mxu0 0.0
    %886 = vmatpush1.xpose.msra.mxu0 0.0
    %887 = vmatprep.subr.mxu0 0.0
    %888 = vmatpush1.xpose.msra.mxu0 0.0
    %889 = vmatprep.subr.mxu0 0.0
    %890 = vmatpush1.xpose.msra.mxu0 0.0
    %891 = vmatprep.subr.mxu0 0.0
    %892 = vmatpush1.xpose.msra.mxu0 0.0
    %893 = vmatprep.subr.mxu0 0.0
    %894 = vmatpush1.xpose.msra.mxu0 0.0
    %895 = vmatprep.subr.mxu0 0.0
    %896 = vmatpush1.xpose.msra.mxu0 0.0
    %897 = vmatprep.subr.mxu0 0.0
    %898 = vmatpush1.xpose.msra.mxu0 0.0
    %899 = vmatprep.subr.mxu0 0.0
    %900 = vmatpush1.xpose.msra.mxu0 0.0
    %901 = vmatprep.subr.mxu0 0.0
    %902 = vmatpush1.xpose.msra.mxu0 0.0
    %903 = vmatprep.subr.mxu0 0.0
    %904 = vmatpush1.xpose.msra.mxu0 0.0
    %905 = vmatprep.subr.mxu0 0.0
    %906 = vmatpush1.xpose.msra.mxu0 %v873
    %907 = vmatprep.subr.mxu0 0.0
    %908 = vmatpush2.xpose.msra.mxu0 0.0
    %909 = vmatprep.subr.mxu0 0.0
    %910 = vmatpush2.xpose.msra.mxu0 0.0
    %911 = vmatprep.subr.mxu0 0.0
    %912 = vmatpush2.xpose.msra.mxu0 0.0
    %913 = vmatprep.subr.mxu0 0.0
    %914 = vmatpush2.xpose.msra.mxu0 0.0
    %915 = vmatprep.subr.mxu0 0.0
    %916 = vmatpush2.xpose.msra.mxu0 0.0
    %917 = vmatprep.subr.mxu0 0.0
    %918 = vmatpush2.xpose.msra.mxu0 0.0
    %919 = vmatprep.subr.mxu0 0.0
    %920 = vmatpush2.xpose.msra.mxu0 0.0
    %921 = vmatprep.subr.mxu0 0.0
    %922 = vmatpush2.xpose.msra.mxu0 0.0
    %923 = vmatprep.subr.mxu0 0.0
    %924 = vmatpush2.xpose.msra.mxu0 0.0
    %925 = vmatprep.subr.mxu0 0.0
    %926 = vmatpush2.xpose.msra.mxu0 0.0
    %927 = vmatprep.subr.mxu0 0.0
    %928 = vmatpush2.xpose.msra.mxu0 0.0
    %929 = vmatprep.subr.mxu0 0.0
    %930 = vmatpush2.xpose.msra.mxu0 0.0
    %931 = vmatprep.subr.mxu0 0.0
    %932 = vmatpush2.xpose.msra.mxu0 0.0
    %933 = vmatprep.subr.mxu0 0.0
    %934 = vmatpush2.xpose.msra.mxu0 0.0
    %935 = vmatprep.subr.mxu0 0.0
    %936 = vmatpush2.xpose.msra.mxu0 0.0
    %937 = vmatprep.subr.mxu0 0.0
    %938 = vmatpush2.xpose.msra.mxu0 0.0
    %939 = vmatprep.mubr.f32.mxu0 0.0
    %940 = vmatmul.mubr.f32.gmra.mxu0 %v871
    %v941 = vpop.f32.mrf.mxu0
    %v942 = vadd.f32 %v399, %v941
    %v943 = vpop.f32.mrf.mxu0
    %944 = vdwg.mxu0
    %945 = vrot.lane.b32.xlu0 %v371, 96
    %v946 = vpop.permute.xlu0 %945
    %v947 = vsel %vm414, %v371, 0
    %v949 = vsel %vm414, %v946, 0
    %951 = vmatprep.subr.mxu0 0.0
    %952 = vmatpush1.xpose.msra.mxu0 0.0
    %953 = vmatprep.subr.mxu0 0.0
    %954 = vmatpush1.xpose.msra.mxu0 0.0
    %955 = vmatprep.subr.mxu0 0.0
    %956 = vmatpush1.xpose.msra.mxu0 0.0
    %957 = vmatprep.subr.mxu0 0.0
    %958 = vmatpush1.xpose.msra.mxu0 0.0
    %959 = vmatprep.subr.mxu0 0.0
    %960 = vmatpush1.xpose.msra.mxu0 0.0
    %961 = vmatprep.subr.mxu0 0.0
    %962 = vmatpush1.xpose.msra.mxu0 0.0
    %963 = vmatprep.subr.mxu0 0.0
    %964 = vmatpush1.xpose.msra.mxu0 0.0
    %965 = vmatprep.subr.mxu0 0.0
    %966 = vmatpush1.xpose.msra.mxu0 0.0
    %967 = vmatprep.subr.mxu0 0.0
    %968 = vmatpush1.xpose.msra.mxu0 0.0
    %969 = vmatprep.subr.mxu0 0.0
    %970 = vmatpush1.xpose.msra.mxu0 0.0
    %971 = vmatprep.subr.mxu0 0.0
    %972 = vmatpush1.xpose.msra.mxu0 0.0
    %973 = vmatprep.subr.mxu0 0.0
    %974 = vmatpush1.xpose.msra.mxu0 0.0
    %975 = vmatprep.subr.mxu0 0.0
    %976 = vmatpush1.xpose.msra.mxu0 0.0
    %977 = vmatprep.subr.mxu0 0.0
    %978 = vmatpush1.xpose.msra.mxu0 0.0
    %979 = vmatprep.subr.mxu0 0.0
    %980 = vmatpush1.xpose.msra.mxu0 0.0
    %981 = vmatprep.subr.mxu0 0.0
    %982 = vmatpush1.xpose.msra.mxu0 %v949
    %983 = vmatprep.subr.mxu0 0.0
    %984 = vmatpush2.xpose.msra.mxu0 0.0
    %985 = vmatprep.subr.mxu0 0.0
    %986 = vmatpush2.xpose.msra.mxu0 0.0
    %987 = vmatprep.subr.mxu0 0.0
    %988 = vmatpush2.xpose.msra.mxu0 0.0
    %989 = vmatprep.subr.mxu0 0.0
    %990 = vmatpush2.xpose.msra.mxu0 0.0
    %991 = vmatprep.subr.mxu0 0.0
    %992 = vmatpush2.xpose.msra.mxu0 0.0
    %993 = vmatprep.subr.mxu0 0.0
    %994 = vmatpush2.xpose.msra.mxu0 0.0
    %995 = vmatprep.subr.mxu0 0.0
    %996 = vmatpush2.xpose.msra.mxu0 0.0
    %997 = vmatprep.subr.mxu0 0.0
    %998 = vmatpush2.xpose.msra.mxu0 0.0
    %999 = vmatprep.subr.mxu0 0.0
    %1000 = vmatpush2.xpose.msra.mxu0 0.0
    %1001 = vmatprep.subr.mxu0 0.0
    %1002 = vmatpush2.xpose.msra.mxu0 0.0
    %1003 = vmatprep.subr.mxu0 0.0
    %1004 = vmatpush2.xpose.msra.mxu0 0.0
    %1005 = vmatprep.subr.mxu0 0.0
    %1006 = vmatpush2.xpose.msra.mxu0 0.0
    %1007 = vmatprep.subr.mxu0 0.0
    %1008 = vmatpush2.xpose.msra.mxu0 0.0
    %1009 = vmatprep.subr.mxu0 0.0
    %1010 = vmatpush2.xpose.msra.mxu0 0.0
    %1011 = vmatprep.subr.mxu0 0.0
    %1012 = vmatpush2.xpose.msra.mxu0 0.0
    %1013 = vmatprep.subr.mxu0 0.0
    %1014 = vmatpush2.xpose.msra.mxu0 0.0
    %1015 = vmatprep.mubr.f32.mxu0 0.0
    %1016 = vmatmul.mubr.f32.gmra.mxu0 %v947
    %v1017 = vpop.f32.mrf.mxu0
    %v1018 = vadd.f32 %v403, %v1017
    %v1019 = vpop.f32.mrf.mxu0
    %1020 = vdwg.mxu0
    %v1021 = vsel %vm414, %v486, -inf
    %1022 = vmax.xlane.f32.xlu0 %v1021
    %v1023 = vpop.xlane.xlu0 %1022
    %v1024 = vsel %vm414, %v562, -inf
    %1025 = vmax.xlane.f32.xlu0 %v1024
    %v1026 = vpop.xlane.xlu0 %1025
    %v1027 = vsel %vm414, %v638, -inf
    %1028 = vmax.xlane.f32.xlu0 %v1027
    %v1029 = vpop.xlane.xlu0 %1028
    %v1030 = vsel %vm414, %v714, -inf
    %1031 = vmax.xlane.f32.xlu0 %v1030
    %v1032 = vpop.xlane.xlu0 %1031
    %v1033 = vsel %vm414, %v790, -inf
    %1034 = vmax.xlane.f32.xlu0 %v1033
    %v1035 = vpop.xlane.xlu0 %1034
    %v1036 = vsel %vm414, %v866, -inf
    %1037 = vmax.xlane.f32.xlu0 %v1036
    %v1038 = vpop.xlane.xlu0 %1037
    %v1039 = vsel %vm414, %v942, -inf
    %1040 = vmax.xlane.f32.xlu0 %v1039
    %v1041 = vpop.xlane.xlu0 %1040
    %v1042 = vsel %vm414, %v1018, -inf
    %1043 = vmax.xlane.f32.xlu0 %v1042
    %v1044 = vpop.xlane.xlu0 %1043
    %v1045 = vsub.f32 %v486, %v1023
    %v1046 = vsub.f32 %v562, %v1026
    %v1047 = vsub.f32 %v638, %v1029
    %v1048 = vsub.f32 %v714, %v1032
    %v1049 = vsub.f32 %v790, %v1035
    %v1050 = vsub.f32 %v866, %v1038
    %v1051 = vsub.f32 %v942, %v1041
    %v1052 = vsub.f32 %v1018, %v1044
    %v1053 = vmul.f32 %v1045, 1.442695
    %v1054 = vpow.pop %v1053
    %v1055 = vmul.f32 %v1046, 1.442695
    %v1056 = vpow.pop %v1055
    %v1057 = vmul.f32 %v1047, 1.442695
    %v1058 = vpow.pop %v1057
    %v1059 = vmul.f32 %v1048, 1.442695
    %v1060 = vpow.pop %v1059
    %v1061 = vmul.f32 %v1049, 1.442695
    %v1062 = vpow.pop %v1061
    %v1063 = vmul.f32 %v1050, 1.442695
    %v1064 = vpow.pop %v1063
    %v1065 = vmul.f32 %v1051, 1.442695
    %v1066 = vpow.pop %v1065
    %v1067 = vmul.f32 %v1052, 1.442695
    %v1068 = vpow.pop %v1067
    %v1069 = vsel %vm414, %v1054, 0.0
    %1070 = vadd.xlane.f32.xlu0 %v1069
    %v1071 = vpop.xlane.xlu0 %1070
    %v1072 = vsel %vm414, %v1056, 0.0
    %1073 = vadd.xlane.f32.xlu0 %v1072
    %v1074 = vpop.xlane.xlu0 %1073
    %v1075 = vsel %vm414, %v1058, 0.0
    %1076 = vadd.xlane.f32.xlu0 %v1075
    %v1077 = vpop.xlane.xlu0 %1076
    %v1078 = vsel %vm414, %v1060, 0.0
    %1079 = vadd.xlane.f32.xlu0 %v1078
    %v1080 = vpop.xlane.xlu0 %1079
    %v1081 = vsel %vm414, %v1062, 0.0
    %1082 = vadd.xlane.f32.xlu0 %v1081
    %v1083 = vpop.xlane.xlu0 %1082
    %v1084 = vsel %vm414, %v1064, 0.0
    %1085 = vadd.xlane.f32.xlu0 %v1084
    %v1086 = vpop.xlane.xlu0 %1085
    %v1087 = vsel %vm414, %v1066, 0.0
    %1088 = vadd.xlane.f32.xlu0 %v1087
    %v1089 = vpop.xlane.xlu0 %1088
    %v1090 = vsel %vm414, %v1068, 0.0
    %1091 = vadd.xlane.f32.xlu0 %v1090
    %v1092 = vpop.xlane.xlu0 %1091
    %v1093 = vrcp.pop %v1071
    %v1094 = vrcp.pop %v1074
    %v1095 = vrcp.pop %v1077
    %v1096 = vrcp.pop %v1080
    %v1097 = vrcp.pop %v1083
    %v1098 = vrcp.pop %v1086
    %v1099 = vrcp.pop %v1089
    %v1100 = vrcp.pop %v1092
    %v1101 = vmul.f32 %v1054, %v1093
    %v1102 = vmul.f32 %v1056, %v1094
    %v1103 = vmul.f32 %v1058, %v1095
    %v1104 = vmul.f32 %v1060, %v1096
    %v1105 = vmul.f32 %v1062, %v1097
    %v1106 = vmul.f32 %v1064, %v1098
    %v1107 = vmul.f32 %v1066, %v1099
    %v1108 = vmul.f32 %v1068, %v1100
    %1109 = vrot.lane.b32.xlu0 %v350, 64
    %v1110 = vpop.permute.xlu0 %1109
    %v1113 = vsel %vm414, %v1101, 0
    %1115 = vmatprep.subr.mxu0 0.0
    %1116 = vmatpush1.msra.mxu0 0.0
    %1117 = vmatprep.subr.mxu0 0.0
    %1118 = vmatpush1.msra.mxu0 0.0
    %1119 = vmatprep.subr.mxu0 0.0
    %1120 = vmatpush1.msra.mxu0 0.0
    %1121 = vmatprep.subr.mxu0 0.0
    %1122 = vmatpush1.msra.mxu0 0.0
    %1123 = vmatprep.subr.mxu0 0.0
    %1124 = vmatpush1.msra.mxu0 0.0
    %1125 = vmatprep.subr.mxu0 0.0
    %1126 = vmatpush1.msra.mxu0 0.0
    %1127 = vmatprep.subr.mxu0 0.0
    %1128 = vmatpush1.msra.mxu0 0.0
    %1129 = vmatprep.subr.mxu0 0.0
    %1130 = vmatpush1.msra.mxu0 0.0
    %1131 = vmatprep.subr.mxu0 0.0
    %1132 = vmatpush1.msra.mxu0 0.0
    %1133 = vmatprep.subr.mxu0 0.0
    %1134 = vmatpush1.msra.mxu0 0.0
    %1135 = vmatprep.subr.mxu0 0.0
    %1136 = vmatpush1.msra.mxu0 0.0
    %1137 = vmatprep.subr.mxu0 0.0
    %1138 = vmatpush1.msra.mxu0 0.0
    %1139 = vmatprep.subr.mxu0 0.0
    %1140 = vmatpush1.msra.mxu0 0.0
    %1141 = vmatprep.subr.mxu0 0.0
    %1142 = vmatpush1.msra.mxu0 0.0
    %1143 = vmatprep.subr.mxu0 0.0
    %1144 = vmatpush1.msra.mxu0 0.0
    %1145 = vmatprep.subr.mxu0 0.0
    %1146 = vmatpush1.msra.mxu0 %v1110
    %1147 = vmatprep.subr.mxu0 0.0
    %1148 = vmatpush2.msra.mxu0 0.0
    %1149 = vmatprep.subr.mxu0 0.0
    %1150 = vmatpush2.msra.mxu0 0.0
    %1151 = vmatprep.subr.mxu0 0.0
    %1152 = vmatpush2.msra.mxu0 0.0
    %1153 = vmatprep.subr.mxu0 0.0
    %1154 = vmatpush2.msra.mxu0 0.0
    %1155 = vmatprep.subr.mxu0 0.0
    %1156 = vmatpush2.msra.mxu0 0.0
    %1157 = vmatprep.subr.mxu0 0.0
    %1158 = vmatpush2.msra.mxu0 0.0
    %1159 = vmatprep.subr.mxu0 0.0
    %1160 = vmatpush2.msra.mxu0 0.0
    %1161 = vmatprep.subr.mxu0 0.0
    %1162 = vmatpush2.msra.mxu0 0.0
    %1163 = vmatprep.subr.mxu0 0.0
    %1164 = vmatpush2.msra.mxu0 0.0
    %1165 = vmatprep.subr.mxu0 0.0
    %1166 = vmatpush2.msra.mxu0 0.0
    %1167 = vmatprep.subr.mxu0 0.0
    %1168 = vmatpush2.msra.mxu0 0.0
    %1169 = vmatprep.subr.mxu0 0.0
    %1170 = vmatpush2.msra.mxu0 0.0
    %1171 = vmatprep.subr.mxu0 0.0
    %1172 = vmatpush2.msra.mxu0 0.0
    %1173 = vmatprep.subr.mxu0 0.0
    %1174 = vmatpush2.msra.mxu0 0.0
    %1175 = vmatprep.subr.mxu0 0.0
    %1176 = vmatpush2.msra.mxu0 0.0
    %1177 = vmatprep.subr.mxu0 0.0
    %1178 = vmatpush2.msra.mxu0 0.0
    %1179 = vmatprep.mubr.f32.mxu0 0.0
    %1180 = vmatmul.mubr.f32.gmra.mxu0 %v1113
    %v1181 = vpop.f32.mrf.mxu0
    %v1182 = vadd.f32 0.0, %v1181
    %v1183 = vpop.f32.mrf.mxu0
    %1184 = vdwg.mxu0
    %1185 = vrot.lane.b32.xlu0 %v355, 64
    %v1186 = vpop.permute.xlu0 %1185
    %v1189 = vsel %vm414, %v1102, 0
    %1191 = vmatprep.subr.mxu0 0.0
    %1192 = vmatpush1.msra.mxu0 0.0
    %1193 = vmatprep.subr.mxu0 0.0
    %1194 = vmatpush1.msra.mxu0 0.0
    %1195 = vmatprep.subr.mxu0 0.0
    %1196 = vmatpush1.msra.mxu0 0.0
    %1197 = vmatprep.subr.mxu0 0.0
    %1198 = vmatpush1.msra.mxu0 0.0
    %1199 = vmatprep.subr.mxu0 0.0
    %1200 = vmatpush1.msra.mxu0 0.0
    %1201 = vmatprep.subr.mxu0 0.0
    %1202 = vmatpush1.msra.mxu0 0.0
    %1203 = vmatprep.subr.mxu0 0.0
    %1204 = vmatpush1.msra.mxu0 0.0
    %1205 = vmatprep.subr.mxu0 0.0
    %1206 = vmatpush1.msra.mxu0 0.0
    %1207 = vmatprep.subr.mxu0 0.0
    %1208 = vmatpush1.msra.mxu0 0.0
    %1209 = vmatprep.subr.mxu0 0.0
    %1210 = vmatpush1.msra.mxu0 0.0
    %1211 = vmatprep.subr.mxu0 0.0
    %1212 = vmatpush1.msra.mxu0 0.0
    %1213 = vmatprep.subr.mxu0 0.0
    %1214 = vmatpush1.msra.mxu0 0.0
    %1215 = vmatprep.subr.mxu0 0.0
    %1216 = vmatpush1.msra.mxu0 0.0
    %1217 = vmatprep.subr.mxu0 0.0
    %1218 = vmatpush1.msra.mxu0 0.0
    %1219 = vmatprep.subr.mxu0 0.0
    %1220 = vmatpush1.msra.mxu0 0.0
    %1221 = vmatprep.subr.mxu0 0.0
    %1222 = vmatpush1.msra.mxu0 %v1186
    %1223 = vmatprep.subr.mxu0 0.0
    %1224 = vmatpush2.msra.mxu0 0.0
    %1225 = vmatprep.subr.mxu0 0.0
    %1226 = vmatpush2.msra.mxu0 0.0
    %1227 = vmatprep.subr.mxu0 0.0
    %1228 = vmatpush2.msra.mxu0 0.0
    %1229 = vmatprep.subr.mxu0 0.0
    %1230 = vmatpush2.msra.mxu0 0.0
    %1231 = vmatprep.subr.mxu0 0.0
    %1232 = vmatpush2.msra.mxu0 0.0
    %1233 = vmatprep.subr.mxu0 0.0
    %1234 = vmatpush2.msra.mxu0 0.0
    %1235 = vmatprep.subr.mxu0 0.0
    %1236 = vmatpush2.msra.mxu0 0.0
    %1237 = vmatprep.subr.mxu0 0.0
    %1238 = vmatpush2.msra.mxu0 0.0
    %1239 = vmatprep.subr.mxu0 0.0
    %1240 = vmatpush2.msra.mxu0 0.0
    %1241 = vmatprep.subr.mxu0 0.0
    %1242 = vmatpush2.msra.mxu0 0.0
    %1243 = vmatprep.subr.mxu0 0.0
    %1244 = vmatpush2.msra.mxu0 0.0
    %1245 = vmatprep.subr.mxu0 0.0
    %1246 = vmatpush2.msra.mxu0 0.0
    %1247 = vmatprep.subr.mxu0 0.0
    %1248 = vmatpush2.msra.mxu0 0.0
    %1249 = vmatprep.subr.mxu0 0.0
    %1250 = vmatpush2.msra.mxu0 0.0
    %1251 = vmatprep.subr.mxu0 0.0
    %1252 = vmatpush2.msra.mxu0 0.0
    %1253 = vmatprep.subr.mxu0 0.0
    %1254 = vmatpush2.msra.mxu0 0.0
    %1255 = vmatprep.mubr.f32.mxu0 0.0
    %1256 = vmatmul.mubr.f32.gmra.mxu0 %v1189
    %v1257 = vpop.f32.mrf.mxu0
    %v1258 = vadd.f32 0.0, %v1257
    %v1259 = vpop.f32.mrf.mxu0
    %1260 = vdwg.mxu0
    %1261 = vrot.lane.b32.xlu0 %v361, 64
    %v1262 = vpop.permute.xlu0 %1261
    %v1265 = vsel %vm414, %v1103, 0
    %1267 = vmatprep.subr.mxu0 0.0
    %1268 = vmatpush1.msra.mxu0 0.0
    %1269 = vmatprep.subr.mxu0 0.0
    %1270 = vmatpush1.msra.mxu0 0.0
    %1271 = vmatprep.subr.mxu0 0.0
    %1272 = vmatpush1.msra.mxu0 0.0
    %1273 = vmatprep.subr.mxu0 0.0
    %1274 = vmatpush1.msra.mxu0 0.0
    %1275 = vmatprep.subr.mxu0 0.0
    %1276 = vmatpush1.msra.mxu0 0.0
    %1277 = vmatprep.subr.mxu0 0.0
    %1278 = vmatpush1.msra.mxu0 0.0
    %1279 = vmatprep.subr.mxu0 0.0
    %1280 = vmatpush1.msra.mxu0 0.0
    %1281 = vmatprep.subr.mxu0 0.0
    %1282 = vmatpush1.msra.mxu0 0.0
    %1283 = vmatprep.subr.mxu0 0.0
    %1284 = vmatpush1.msra.mxu0 0.0
    %1285 = vmatprep.subr.mxu0 0.0
    %1286 = vmatpush1.msra.mxu0 0.0
    %1287 = vmatprep.subr.mxu0 0.0
    %1288 = vmatpush1.msra.mxu0 0.0
    %1289 = vmatprep.subr.mxu0 0.0
    %1290 = vmatpush1.msra.mxu0 0.0
    %1291 = vmatprep.subr.mxu0 0.0
    %1292 = vmatpush1.msra.mxu0 0.0
    %1293 = vmatprep.subr.mxu0 0.0
    %1294 = vmatpush1.msra.mxu0 0.0
    %1295 = vmatprep.subr.mxu0 0.0
    %1296 = vmatpush1.msra.mxu0 0.0
    %1297 = vmatprep.subr.mxu0 0.0
    %1298 = vmatpush1.msra.mxu0 %v1262
    %1299 = vmatprep.subr.mxu0 0.0
    %1300 = vmatpush2.msra.mxu0 0.0
    %1301 = vmatprep.subr.mxu0 0.0
    %1302 = vmatpush2.msra.mxu0 0.0
    %1303 = vmatprep.subr.mxu0 0.0
    %1304 = vmatpush2.msra.mxu0 0.0
    %1305 = vmatprep.subr.mxu0 0.0
    %1306 = vmatpush2.msra.mxu0 0.0
    %1307 = vmatprep.subr.mxu0 0.0
    %1308 = vmatpush2.msra.mxu0 0.0
    %1309 = vmatprep.subr.mxu0 0.0
    %1310 = vmatpush2.msra.mxu0 0.0
    %1311 = vmatprep.subr.mxu0 0.0
    %1312 = vmatpush2.msra.mxu0 0.0
    %1313 = vmatprep.subr.mxu0 0.0
    %1314 = vmatpush2.msra.mxu0 0.0
    %1315 = vmatprep.subr.mxu0 0.0
    %1316 = vmatpush2.msra.mxu0 0.0
    %1317 = vmatprep.subr.mxu0 0.0
    %1318 = vmatpush2.msra.mxu0 0.0
    %1319 = vmatprep.subr.mxu0 0.0
    %1320 = vmatpush2.msra.mxu0 0.0
    %1321 = vmatprep.subr.mxu0 0.0
    %1322 = vmatpush2.msra.mxu0 0.0
    %1323 = vmatprep.subr.mxu0 0.0
    %1324 = vmatpush2.msra.mxu0 0.0
    %1325 = vmatprep.subr.mxu0 0.0
    %1326 = vmatpush2.msra.mxu0 0.0
    %1327 = vmatprep.subr.mxu0 0.0
    %1328 = vmatpush2.msra.mxu0 0.0
    %1329 = vmatprep.subr.mxu0 0.0
    %1330 = vmatpush2.msra.mxu0 0.0
    %1331 = vmatprep.mubr.f32.mxu0 0.0
    %1332 = vmatmul.mubr.f32.gmra.mxu0 %v1265
    %v1333 = vpop.f32.mrf.mxu0
    %v1334 = vadd.f32 0.0, %v1333
    %v1335 = vpop.f32.mrf.mxu0
    %1336 = vdwg.mxu0
    %1337 = vrot.lane.b32.xlu0 %v363, 64
    %v1338 = vpop.permute.xlu0 %1337
    %v1341 = vsel %vm414, %v1104, 0
    %1343 = vmatprep.subr.mxu0 0.0
    %1344 = vmatpush1.msra.mxu0 0.0
    %1345 = vmatprep.subr.mxu0 0.0
    %1346 = vmatpush1.msra.mxu0 0.0
    %1347 = vmatprep.subr.mxu0 0.0
    %1348 = vmatpush1.msra.mxu0 0.0
    %1349 = vmatprep.subr.mxu0 0.0
    %1350 = vmatpush1.msra.mxu0 0.0
    %1351 = vmatprep.subr.mxu0 0.0
    %1352 = vmatpush1.msra.mxu0 0.0
    %1353 = vmatprep.subr.mxu0 0.0
    %1354 = vmatpush1.msra.mxu0 0.0
    %1355 = vmatprep.subr.mxu0 0.0
    %1356 = vmatpush1.msra.mxu0 0.0
    %1357 = vmatprep.subr.mxu0 0.0
    %1358 = vmatpush1.msra.mxu0 0.0
    %1359 = vmatprep.subr.mxu0 0.0
    %1360 = vmatpush1.msra.mxu0 0.0
    %1361 = vmatprep.subr.mxu0 0.0
    %1362 = vmatpush1.msra.mxu0 0.0
    %1363 = vmatprep.subr.mxu0 0.0
    %1364 = vmatpush1.msra.mxu0 0.0
    %1365 = vmatprep.subr.mxu0 0.0
    %1366 = vmatpush1.msra.mxu0 0.0
    %1367 = vmatprep.subr.mxu0 0.0
    %1368 = vmatpush1.msra.mxu0 0.0
    %1369 = vmatprep.subr.mxu0 0.0
    %1370 = vmatpush1.msra.mxu0 0.0
    %1371 = vmatprep.subr.mxu0 0.0
    %1372 = vmatpush1.msra.mxu0 0.0
    %1373 = vmatprep.subr.mxu0 0.0
    %1374 = vmatpush1.msra.mxu0 %v1338
    %1375 = vmatprep.subr.mxu0 0.0
    %1376 = vmatpush2.msra.mxu0 0.0
    %1377 = vmatprep.subr.mxu0 0.0
    %1378 = vmatpush2.msra.mxu0 0.0
    %1379 = vmatprep.subr.mxu0 0.0
    %1380 = vmatpush2.msra.mxu0 0.0
    %1381 = vmatprep.subr.mxu0 0.0
    %1382 = vmatpush2.msra.mxu0 0.0
    %1383 = vmatprep.subr.mxu0 0.0
    %1384 = vmatpush2.msra.mxu0 0.0
    %1385 = vmatprep.subr.mxu0 0.0
    %1386 = vmatpush2.msra.mxu0 0.0
    %1387 = vmatprep.subr.mxu0 0.0
    %1388 = vmatpush2.msra.mxu0 0.0
    %1389 = vmatprep.subr.mxu0 0.0
    %1390 = vmatpush2.msra.mxu0 0.0
    %1391 = vmatprep.subr.mxu0 0.0
    %1392 = vmatpush2.msra.mxu0 0.0
    %1393 = vmatprep.subr.mxu0 0.0
    %1394 = vmatpush2.msra.mxu0 0.0
    %1395 = vmatprep.subr.mxu0 0.0
    %1396 = vmatpush2.msra.mxu0 0.0
    %1397 = vmatprep.subr.mxu0 0.0
    %1398 = vmatpush2.msra.mxu0 0.0
    %1399 = vmatprep.subr.mxu0 0.0
    %1400 = vmatpush2.msra.mxu0 0.0
    %1401 = vmatprep.subr.mxu0 0.0
    %1402 = vmatpush2.msra.mxu0 0.0
    %1403 = vmatprep.subr.mxu0 0.0
    %1404 = vmatpush2.msra.mxu0 0.0
    %1405 = vmatprep.subr.mxu0 0.0
    %1406 = vmatpush2.msra.mxu0 0.0
    %1407 = vmatprep.mubr.f32.mxu0 0.0
    %1408 = vmatmul.mubr.f32.gmra.mxu0 %v1341
    %v1409 = vpop.f32.mrf.mxu0
    %v1410 = vadd.f32 0.0, %v1409
    %v1411 = vpop.f32.mrf.mxu0
    %1412 = vdwg.mxu0
    %1413 = vrot.lane.b32.xlu0 %v365, 64
    %v1414 = vpop.permute.xlu0 %1413
    %v1417 = vsel %vm414, %v1105, 0
    %1419 = vmatprep.subr.mxu0 0.0
    %1420 = vmatpush1.msra.mxu0 0.0
    %1421 = vmatprep.subr.mxu0 0.0
    %1422 = vmatpush1.msra.mxu0 0.0
    %1423 = vmatprep.subr.mxu0 0.0
    %1424 = vmatpush1.msra.mxu0 0.0
    %1425 = vmatprep.subr.mxu0 0.0
    %1426 = vmatpush1.msra.mxu0 0.0
    %1427 = vmatprep.subr.mxu0 0.0
    %1428 = vmatpush1.msra.mxu0 0.0
    %1429 = vmatprep.subr.mxu0 0.0
    %1430 = vmatpush1.msra.mxu0 0.0
    %1431 = vmatprep.subr.mxu0 0.0
    %1432 = vmatpush1.msra.mxu0 0.0
    %1433 = vmatprep.subr.mxu0 0.0
    %1434 = vmatpush1.msra.mxu0 0.0
    %1435 = vmatprep.subr.mxu0 0.0
    %1436 = vmatpush1.msra.mxu0 0.0
    %1437 = vmatprep.subr.mxu0 0.0
    %1438 = vmatpush1.msra.mxu0 0.0
    %1439 = vmatprep.subr.mxu0 0.0
    %1440 = vmatpush1.msra.mxu0 0.0
    %1441 = vmatprep.subr.mxu0 0.0
    %1442 = vmatpush1.msra.mxu0 0.0
    %1443 = vmatprep.subr.mxu0 0.0
    %1444 = vmatpush1.msra.mxu0 0.0
    %1445 = vmatprep.subr.mxu0 0.0
    %1446 = vmatpush1.msra.mxu0 0.0
    %1447 = vmatprep.subr.mxu0 0.0
    %1448 = vmatpush1.msra.mxu0 0.0
    %1449 = vmatprep.subr.mxu0 0.0
    %1450 = vmatpush1.msra.mxu0 %v1414
    %1451 = vmatprep.subr.mxu0 0.0
    %1452 = vmatpush2.msra.mxu0 0.0
    %1453 = vmatprep.subr.mxu0 0.0
    %1454 = vmatpush2.msra.mxu0 0.0
    %1455 = vmatprep.subr.mxu0 0.0
    %1456 = vmatpush2.msra.mxu0 0.0
    %1457 = vmatprep.subr.mxu0 0.0
    %1458 = vmatpush2.msra.mxu0 0.0
    %1459 = vmatprep.subr.mxu0 0.0
    %1460 = vmatpush2.msra.mxu0 0.0
    %1461 = vmatprep.subr.mxu0 0.0
    %1462 = vmatpush2.msra.mxu0 0.0
    %1463 = vmatprep.subr.mxu0 0.0
    %1464 = vmatpush2.msra.mxu0 0.0
    %1465 = vmatprep.subr.mxu0 0.0
    %1466 = vmatpush2.msra.mxu0 0.0
    %1467 = vmatprep.subr.mxu0 0.0
    %1468 = vmatpush2.msra.mxu0 0.0
    %1469 = vmatprep.subr.mxu0 0.0
    %1470 = vmatpush2.msra.mxu0 0.0
    %1471 = vmatprep.subr.mxu0 0.0
    %1472 = vmatpush2.msra.mxu0 0.0
    %1473 = vmatprep.subr.mxu0 0.0
    %1474 = vmatpush2.msra.mxu0 0.0
    %1475 = vmatprep.subr.mxu0 0.0
    %1476 = vmatpush2.msra.mxu0 0.0
    %1477 = vmatprep.subr.mxu0 0.0
    %1478 = vmatpush2.msra.mxu0 0.0
    %1479 = vmatprep.subr.mxu0 0.0
    %1480 = vmatpush2.msra.mxu0 0.0
    %1481 = vmatprep.subr.mxu0 0.0
    %1482 = vmatpush2.msra.mxu0 0.0
    %1483 = vmatprep.mubr.f32.mxu0 0.0
    %1484 = vmatmul.mubr.f32.gmra.mxu0 %v1417
    %v1485 = vpop.f32.mrf.mxu0
    %v1486 = vadd.f32 0.0, %v1485
    %v1487 = vpop.f32.mrf.mxu0
    %1488 = vdwg.mxu0
    %1489 = vrot.lane.b32.xlu0 %v367, 64
    %v1490 = vpop.permute.xlu0 %1489
    %v1493 = vsel %vm414, %v1106, 0
    %1495 = vmatprep.subr.mxu0 0.0
    %1496 = vmatpush1.msra.mxu0 0.0
    %1497 = vmatprep.subr.mxu0 0.0
    %1498 = vmatpush1.msra.mxu0 0.0
    %1499 = vmatprep.subr.mxu0 0.0
    %1500 = vmatpush1.msra.mxu0 0.0
    %1501 = vmatprep.subr.mxu0 0.0
    %1502 = vmatpush1.msra.mxu0 0.0
    %1503 = vmatprep.subr.mxu0 0.0
    %1504 = vmatpush1.msra.mxu0 0.0
    %1505 = vmatprep.subr.mxu0 0.0
    %1506 = vmatpush1.msra.mxu0 0.0
    %1507 = vmatprep.subr.mxu0 0.0
    %1508 = vmatpush1.msra.mxu0 0.0
    %1509 = vmatprep.subr.mxu0 0.0
    %1510 = vmatpush1.msra.mxu0 0.0
    %1511 = vmatprep.subr.mxu0 0.0
    %1512 = vmatpush1.msra.mxu0 0.0
    %1513 = vmatprep.subr.mxu0 0.0
    %1514 = vmatpush1.msra.mxu0 0.0
    %1515 = vmatprep.subr.mxu0 0.0
    %1516 = vmatpush1.msra.mxu0 0.0
    %1517 = vmatprep.subr.mxu0 0.0
    %1518 = vmatpush1.msra.mxu0 0.0
    %1519 = vmatprep.subr.mxu0 0.0
    %1520 = vmatpush1.msra.mxu0 0.0
    %1521 = vmatprep.subr.mxu0 0.0
    %1522 = vmatpush1.msra.mxu0 0.0
    %1523 = vmatprep.subr.mxu0 0.0
    %1524 = vmatpush1.msra.mxu0 0.0
    %1525 = vmatprep.subr.mxu0 0.0
    %1526 = vmatpush1.msra.mxu0 %v1490
    %1527 = vmatprep.subr.mxu0 0.0
    %1528 = vmatpush2.msra.mxu0 0.0
    %1529 = vmatprep.subr.mxu0 0.0
    %1530 = vmatpush2.msra.mxu0 0.0
    %1531 = vmatprep.subr.mxu0 0.0
    %1532 = vmatpush2.msra.mxu0 0.0
    %1533 = vmatprep.subr.mxu0 0.0
    %1534 = vmatpush2.msra.mxu0 0.0
    %1535 = vmatprep.subr.mxu0 0.0
    %1536 = vmatpush2.msra.mxu0 0.0
    %1537 = vmatprep.subr.mxu0 0.0
    %1538 = vmatpush2.msra.mxu0 0.0
    %1539 = vmatprep.subr.mxu0 0.0
    %1540 = vmatpush2.msra.mxu0 0.0
    %1541 = vmatprep.subr.mxu0 0.0
    %1542 = vmatpush2.msra.mxu0 0.0
    %1543 = vmatprep.subr.mxu0 0.0
    %1544 = vmatpush2.msra.mxu0 0.0
    %1545 = vmatprep.subr.mxu0 0.0
    %1546 = vmatpush2.msra.mxu0 0.0
    %1547 = vmatprep.subr.mxu0 0.0
    %1548 = vmatpush2.msra.mxu0 0.0
    %1549 = vmatprep.subr.mxu0 0.0
    %1550 = vmatpush2.msra.mxu0 0.0
    %1551 = vmatprep.subr.mxu0 0.0
    %1552 = vmatpush2.msra.mxu0 0.0
    %1553 = vmatprep.subr.mxu0 0.0
    %1554 = vmatpush2.msra.mxu0 0.0
    %1555 = vmatprep.subr.mxu0 0.0
    %1556 = vmatpush2.msra.mxu0 0.0
    %1557 = vmatprep.subr.mxu0 0.0
    %1558 = vmatpush2.msra.mxu0 0.0
    %1559 = vmatprep.mubr.f32.mxu0 0.0
    %1560 = vmatmul.mubr.f32.gmra.mxu0 %v1493
    %v1561 = vpop.f32.mrf.mxu0
    %v1562 = vadd.f32 0.0, %v1561
    %v1563 = vpop.f32.mrf.mxu0
    %1564 = vdwg.mxu0
    %1565 = vrot.lane.b32.xlu0 %v369, 64
    %v1566 = vpop.permute.xlu0 %1565
    %v1569 = vsel %vm414, %v1107, 0
    %1571 = vmatprep.subr.mxu0 0.0
    %1572 = vmatpush1.msra.mxu0 0.0
    %1573 = vmatprep.subr.mxu0 0.0
    %1574 = vmatpush1.msra.mxu0 0.0
    %1575 = vmatprep.subr.mxu0 0.0
    %1576 = vmatpush1.msra.mxu0 0.0
    %1577 = vmatprep.subr.mxu0 0.0
    %1578 = vmatpush1.msra.mxu0 0.0
    %1579 = vmatprep.subr.mxu0 0.0
    %1580 = vmatpush1.msra.mxu0 0.0
    %1581 = vmatprep.subr.mxu0 0.0
    %1582 = vmatpush1.msra.mxu0 0.0
    %1583 = vmatprep.subr.mxu0 0.0
    %1584 = vmatpush1.msra.mxu0 0.0
    %1585 = vmatprep.subr.mxu0 0.0
    %1586 = vmatpush1.msra.mxu0 0.0
    %1587 = vmatprep.subr.mxu0 0.0
    %1588 = vmatpush1.msra.mxu0 0.0
    %1589 = vmatprep.subr.mxu0 0.0
    %1590 = vmatpush1.msra.mxu0 0.0
    %1591 = vmatprep.subr.mxu0 0.0
    %1592 = vmatpush1.msra.mxu0 0.0
    %1593 = vmatprep.subr.mxu0 0.0
    %1594 = vmatpush1.msra.mxu0 0.0
    %1595 = vmatprep.subr.mxu0 0.0
    %1596 = vmatpush1.msra.mxu0 0.0
    %1597 = vmatprep.subr.mxu0 0.0
    %1598 = vmatpush1.msra.mxu0 0.0
    %1599 = vmatprep.subr.mxu0 0.0
    %1600 = vmatpush1.msra.mxu0 0.0
    %1601 = vmatprep.subr.mxu0 0.0
    %1602 = vmatpush1.msra.mxu0 %v1566
    %1603 = vmatprep.subr.mxu0 0.0
    %1604 = vmatpush2.msra.mxu0 0.0
    %1605 = vmatprep.subr.mxu0 0.0
    %1606 = vmatpush2.msra.mxu0 0.0
    %1607 = vmatprep.subr.mxu0 0.0
    %1608 = vmatpush2.msra.mxu0 0.0
    %1609 = vmatprep.subr.mxu0 0.0
    %1610 = vmatpush2.msra.mxu0 0.0
    %1611 = vmatprep.subr.mxu0 0.0
    %1612 = vmatpush2.msra.mxu0 0.0
    %1613 = vmatprep.subr.mxu0 0.0
    %1614 = vmatpush2.msra.mxu0 0.0
    %1615 = vmatprep.subr.mxu0 0.0
    %1616 = vmatpush2.msra.mxu0 0.0
    %1617 = vmatprep.subr.mxu0 0.0
    %1618 = vmatpush2.msra.mxu0 0.0
    %1619 = vmatprep.subr.mxu0 0.0
    %1620 = vmatpush2.msra.mxu0 0.0
    %1621 = vmatprep.subr.mxu0 0.0
    %1622 = vmatpush2.msra.mxu0 0.0
    %1623 = vmatprep.subr.mxu0 0.0
    %1624 = vmatpush2.msra.mxu0 0.0
    %1625 = vmatprep.subr.mxu0 0.0
    %1626 = vmatpush2.msra.mxu0 0.0
    %1627 = vmatprep.subr.mxu0 0.0
    %1628 = vmatpush2.msra.mxu0 0.0
    %1629 = vmatprep.subr.mxu0 0.0
    %1630 = vmatpush2.msra.mxu0 0.0
    %1631 = vmatprep.subr.mxu0 0.0
    %1632 = vmatpush2.msra.mxu0 0.0
    %1633 = vmatprep.subr.mxu0 0.0
    %1634 = vmatpush2.msra.mxu0 0.0
    %1635 = vmatprep.mubr.f32.mxu0 0.0
    %1636 = vmatmul.mubr.f32.gmra.mxu0 %v1569
    %v1637 = vpop.f32.mrf.mxu0
    %v1638 = vadd.f32 0.0, %v1637
    %v1639 = vpop.f32.mrf.mxu0
    %1640 = vdwg.mxu0
    %1641 = vrot.lane.b32.xlu0 %v371, 64
    %v1642 = vpop.permute.xlu0 %1641
    %v1645 = vsel %vm414, %v1108, 0
    %1647 = vmatprep.subr.mxu0 0.0
    %1648 = vmatpush1.msra.mxu0 0.0
    %1649 = vmatprep.subr.mxu0 0.0
    %1650 = vmatpush1.msra.mxu0 0.0
    %1651 = vmatprep.subr.mxu0 0.0
    %1652 = vmatpush1.msra.mxu0 0.0
    %1653 = vmatprep.subr.mxu0 0.0
    %1654 = vmatpush1.msra.mxu0 0.0
    %1655 = vmatprep.subr.mxu0 0.0
    %1656 = vmatpush1.msra.mxu0 0.0
    %1657 = vmatprep.subr.mxu0 0.0
    %1658 = vmatpush1.msra.mxu0 0.0
    %1659 = vmatprep.subr.mxu0 0.0
    %1660 = vmatpush1.msra.mxu0 0.0
    %1661 = vmatprep.subr.mxu0 0.0
    %1662 = vmatpush1.msra.mxu0 0.0
    %1663 = vmatprep.subr.mxu0 0.0
    %1664 = vmatpush1.msra.mxu0 0.0
    %1665 = vmatprep.subr.mxu0 0.0
    %1666 = vmatpush1.msra.mxu0 0.0
    %1667 = vmatprep.subr.mxu0 0.0
    %1668 = vmatpush1.msra.mxu0 0.0
    %1669 = vmatprep.subr.mxu0 0.0
    %1670 = vmatpush1.msra.mxu0 0.0
    %1671 = vmatprep.subr.mxu0 0.0
    %1672 = vmatpush1.msra.mxu0 0.0
    %1673 = vmatprep.subr.mxu0 0.0
    %1674 = vmatpush1.msra.mxu0 0.0
    %1675 = vmatprep.subr.mxu0 0.0
    %1676 = vmatpush1.msra.mxu0 0.0
    %1677 = vmatprep.subr.mxu0 0.0
    %1678 = vmatpush1.msra.mxu0 %v1642
    %1679 = vmatprep.subr.mxu0 0.0
    %1680 = vmatpush2.msra.mxu0 0.0
    %1681 = vmatprep.subr.mxu0 0.0
    %1682 = vmatpush2.msra.mxu0 0.0
    %1683 = vmatprep.subr.mxu0 0.0
    %1684 = vmatpush2.msra.mxu0 0.0
    %1685 = vmatprep.subr.mxu0 0.0
    %1686 = vmatpush2.msra.mxu0 0.0
    %1687 = vmatprep.subr.mxu0 0.0
    %1688 = vmatpush2.msra.mxu0 0.0
    %1689 = vmatprep.subr.mxu0 0.0
    %1690 = vmatpush2.msra.mxu0 0.0
    %1691 = vmatprep.subr.mxu0 0.0
    %1692 = vmatpush2.msra.mxu0 0.0
    %1693 = vmatprep.subr.mxu0 0.0
    %1694 = vmatpush2.msra.mxu0 0.0
    %1695 = vmatprep.subr.mxu0 0.0
    %1696 = vmatpush2.msra.mxu0 0.0
    %1697 = vmatprep.subr.mxu0 0.0
    %1698 = vmatpush2.msra.mxu0 0.0
    %1699 = vmatprep.subr.mxu0 0.0
    %1700 = vmatpush2.msra.mxu0 0.0
    %1701 = vmatprep.subr.mxu0 0.0
    %1702 = vmatpush2.msra.mxu0 0.0
    %1703 = vmatprep.subr.mxu0 0.0
    %1704 = vmatpush2.msra.mxu0 0.0
    %1705 = vmatprep.subr.mxu0 0.0
    %1706 = vmatpush2.msra.mxu0 0.0
    %1707 = vmatprep.subr.mxu0 0.0
    %1708 = vmatpush2.msra.mxu0 0.0
    %1709 = vmatprep.subr.mxu0 0.0
    %1710 = vmatpush2.msra.mxu0 0.0
    %1711 = vmatprep.mubr.f32.mxu0 0.0
    %1712 = vmatmul.mubr.f32.gmra.mxu0 %v1645
    %v1713 = vpop.f32.mrf.mxu0
    %v1714 = vadd.f32 0.0, %v1713
    %v1715 = vpop.f32.mrf.mxu0
    %1716 = vdwg.mxu0
    %1719 = vrot.lane.b32.xlu0 %v1334, 8
    %v1720 = vpop.permute.xlu0 %1719
    %1721 = vrot.lane.b32.xlu0 %v1410, 8
    %v1722 = vpop.permute.xlu0 %1721
    %1727 = vrot.lane.b32.xlu0 %v1486, 16
    %v1728 = vpop.permute.xlu0 %1727
    %1729 = vrot.lane.b32.xlu0 %v1562, 16
    %v1730 = vpop.permute.xlu0 %1729
    %1735 = vrot.lane.b32.xlu0 %v1638, 24
    %v1736 = vpop.permute.xlu0 %1735
    %1737 = vrot.lane.b32.xlu0 %v1714, 24
    %v1738 = vpop.permute.xlu0 %1737
    %v1741 = vsel %vm414, %v1182, %v1720
    %v1742 = vsel %vm414, %v1258, %v1722
    %vm1743 = vcmask 130048
    %v1744 = vsel %vm1743, %v1741, %v1728
    %v1745 = vsel %vm1743, %v1742, %v1730
    %vm1746 = vcmask 195584
    %v1747 = vsel %vm1746, %v1744, %v1736
    %v1748 = vsel %vm1746, %v1745, %v1738
    %v1749 = vld [vmem:[#allocation2 + $0xe0] sm:$0xff]
    %v1750 = vld [vmem:[#allocation2 + $0xe8] sm:$0xff]
    %v1751 = vld [vmem:[#allocation2 + $0xf0] sm:$0xff]
    %v1752 = vld [vmem:[#allocation2 + $0xf8] sm:$0xff]
    %v1753 = vld [vmem:[#allocation4 + $0x7] sm:$0x1]
    %v1754 = vlaneseq
    %v1755 = vshrl.u32 %v1754, 7
    %v1756 = vsub.s32 0, %v1755
    %v1757 = vrot.slane %v1753, %v1756
    %v1759 = vsel %vm162, %v1747, 0
    %v1762 = vsel %vm162, %v1748, 0
    %1764 = vmatprep.subr.mxu0 0.0
    %1765 = vmatpush1.msra.mxu0 0.0
    %1766 = vmatprep.subr.mxu0 0.0
    %1767 = vmatpush1.msra.mxu0 0.0
    %1768 = vmatprep.subr.mxu0 0.0
    %1769 = vmatpush1.msra.mxu0 0.0
    %1770 = vmatprep.subr.mxu0 0.0
    %1771 = vmatpush1.msra.mxu0 0.0
    %1772 = vmatprep.subr.mxu0 0.0
    %1773 = vmatpush1.msra.mxu0 0.0
    %1774 = vmatprep.subr.mxu0 0.0
    %1775 = vmatpush1.msra.mxu0 0.0
    %1776 = vmatprep.subr.mxu0 0.0
    %1777 = vmatpush1.msra.mxu0 0.0
    %1778 = vmatprep.subr.mxu0 0.0
    %1779 = vmatpush1.msra.mxu0 0.0
    %1780 = vmatprep.subr.mxu0 0.0
    %1781 = vmatpush1.msra.mxu0 0.0
    %1782 = vmatprep.subr.mxu0 0.0
    %1783 = vmatpush1.msra.mxu0 0.0
    %1784 = vmatprep.subr.mxu0 0.0
    %1785 = vmatpush1.msra.mxu0 0.0
    %1786 = vmatprep.subr.mxu0 0.0
    %1787 = vmatpush1.msra.mxu0 0.0
    %1788 = vmatprep.subr.mxu0 0.0
    %1789 = vmatpush1.msra.mxu0 %v1752
    %1790 = vmatprep.subr.mxu0 0.0
    %1791 = vmatpush1.msra.mxu0 %v1751
    %1792 = vmatprep.subr.mxu0 0.0
    %1793 = vmatpush1.msra.mxu0 %v1750
    %1794 = vmatprep.subr.mxu0 0.0
    %1795 = vmatpush1.msra.mxu0 %v1749
    %1796 = vmatprep.subr.mxu0 0.0
    %1797 = vmatpush2.msra.mxu0 0.0
    %1798 = vmatprep.subr.mxu0 0.0
    %1799 = vmatpush2.msra.mxu0 0.0
    %1800 = vmatprep.subr.mxu0 0.0
    %1801 = vmatpush2.msra.mxu0 0.0
    %1802 = vmatprep.subr.mxu0 0.0
    %1803 = vmatpush2.msra.mxu0 0.0
    %1804 = vmatprep.subr.mxu0 0.0
    %1805 = vmatpush2.msra.mxu0 0.0
    %1806 = vmatprep.subr.mxu0 0.0
    %1807 = vmatpush2.msra.mxu0 0.0
    %1808 = vmatprep.subr.mxu0 0.0
    %1809 = vmatpush2.msra.mxu0 0.0
    %1810 = vmatprep.subr.mxu0 0.0
    %1811 = vmatpush2.msra.mxu0 0.0
    %1812 = vmatprep.subr.mxu0 0.0
    %1813 = vmatpush2.msra.mxu0 0.0
    %1814 = vmatprep.subr.mxu0 0.0
    %1815 = vmatpush2.msra.mxu0 0.0
    %1816 = vmatprep.subr.mxu0 0.0
    %1817 = vmatpush2.msra.mxu0 0.0
    %1818 = vmatprep.subr.mxu0 0.0
    %1819 = vmatpush2.msra.mxu0 0.0
    %1820 = vmatprep.subr.mxu0 0.0
    %1821 = vmatpush2.msra.mxu0 0.0
    %1822 = vmatprep.subr.mxu0 0.0
    %1823 = vmatpush2.msra.mxu0 0.0
    %1824 = vmatprep.subr.mxu0 0.0
    %1825 = vmatpush2.msra.mxu0 0.0
    %1826 = vmatprep.subr.mxu0 0.0
    %1827 = vmatpush2.msra.mxu0 0.0
    %1828 = vmatprep.mubr.f32.mxu0 0.0
    %1829 = vmatmul.mubr.f32.gmra.mxu0 %v1759
    %v1830 = vpop.f32.mrf.mxu0
    %v1831 = vadd.f32 %v1757, %v1830
    %v1832 = vpop.f32.mrf.mxu0
    %1833 = vmatprep.mubr.f32.mxu0 0.0
    %1834 = vmatmul.mubr.f32.gmra.mxu0 %v1762
    %v1835 = vpop.f32.mrf.mxu0
    %v1836 = vadd.f32 %v1757, %v1835
    %v1837 = vpop.f32.mrf.mxu0
    %1838 = vdwg.mxu0
    %v1839 = vadd.f32 %v200, %v1831
    %v1840 = vadd.f32 %v201, %v1836
    %v1841 = vld [vmem:[#allocation4 + $0x8] sm:$0x1]
    %v1842 = vld [vmem:[#allocation4 + $0x9] sm:$0x1]
    %v1843 = vsel %vm162, %v1839, 0.0
    %1844 = vadd.xlane.f32.xlu0 %v1843
    %v1845 = vpop.xlane.xlu0 %1844
    %v1846 = vsel %vm162, %v1840, 0.0
    %1847 = vadd.xlane.f32.xlu0 %v1846
    %v1848 = vpop.xlane.xlu0 %1847
    %v1849 = vmul.f32 %v1845, %v169
    %v1850 = vmul.f32 %v1848, %v169
    %v1851 = vsub.f32 %v1839, %v1849
    %v1852 = vsub.f32 %v1840, %v1850
    %v1853 = vmul.f32 %v1851, %v1851
    %v1854 = vmul.f32 %v1852, %v1852
    %v1855 = vsel %vm162, %v1853, 0.0
    %1856 = vadd.xlane.f32.xlu0 %v1855
    %v1857 = vpop.xlane.xlu0 %1856
    %v1858 = vsel %vm162, %v1854, 0.0
    %1859 = vadd.xlane.f32.xlu0 %v1858
    %v1860 = vpop.xlane.xlu0 %1859
    %v1861 = vmul.f32 %v1857, %v169
    %v1862 = vmul.f32 %v1860, %v169
    %v1863 = vadd.f32 %v1861, 1e-12
    %v1864 = vadd.f32 %v1862, 1e-12
    %v1865 = vrsqrt.pop %v1863
    %v1866 = vrsqrt.pop %v1864
    %v1867 = vmul.f32 %v1851, %v1865
    %v1868 = vmul.f32 %v1852, %v1866
    %v1869 = vlaneseq
    %v1870 = vshrl.u32 %v1869, 7
    %v1871 = vsub.s32 0, %v1870
    %v1872 = vrot.slane %v1841, %v1871
    %v1873 = vmul.f32 %v1867, %v1872
    %v1874 = vmul.f32 %v1868, %v1872
    %v1875 = vlaneseq
    %v1876 = vshrl.u32 %v1875, 7
    %v1877 = vsub.s32 0, %v1876
    %v1878 = vrot.slane %v1842, %v1877
    %v1879 = vadd.f32 %v1873, %v1878
    %v1880 = vadd.f32 %v1874, %v1878
    %v1881 = vld [vmem:[#allocation2 + $0x100] sm:$0xff]
    %v1882 = vld [vmem:[#allocation2 + $0x108] sm:$0xff]
    %v1883 = vld [vmem:[#allocation2 + $0x110] sm:$0xff]
    %v1884 = vld [vmem:[#allocation2 + $0x118] sm:$0xff]
    %v1885 = vld [vmem:[#allocation4 + $0xa] sm:$0x1]
    %v1886 = vlaneseq
    %v1887 = vshrl.u32 %v1886, 7
    %v1888 = vsub.s32 0, %v1887
    %v1889 = vrot.slane %v1885, %v1888
    %v1891 = vsel %vm162, %v1879, 0
    %v1894 = vsel %vm162, %v1880, 0
    %1896 = vmatprep.subr.mxu0 0.0
    %1897 = vmatpush1.msra.mxu0 0.0
    %1898 = vmatprep.subr.mxu0 0.0
    %1899 = vmatpush1.msra.mxu0 0.0
    %1900 = vmatprep.subr.mxu0 0.0
    %1901 = vmatpush1.msra.mxu0 0.0
    %1902 = vmatprep.subr.mxu0 0.0
    %1903 = vmatpush1.msra.mxu0 0.0
    %1904 = vmatprep.subr.mxu0 0.0
    %1905 = vmatpush1.msra.mxu0 0.0
    %1906 = vmatprep.subr.mxu0 0.0
    %1907 = vmatpush1.msra.mxu0 0.0
    %1908 = vmatprep.subr.mxu0 0.0
    %1909 = vmatpush1.msra.mxu0 0.0
    %1910 = vmatprep.subr.mxu0 0.0
    %1911 = vmatpush1.msra.mxu0 0.0
    %1912 = vmatprep.subr.mxu0 0.0
    %1913 = vmatpush1.msra.mxu0 0.0
    %1914 = vmatprep.subr.mxu0 0.0
    %1915 = vmatpush1.msra.mxu0 0.0
    %1916 = vmatprep.subr.mxu0 0.0
    %1917 = vmatpush1.msra.mxu0 0.0
    %1918 = vmatprep.subr.mxu0 0.0
    %1919 = vmatpush1.msra.mxu0 0.0
    %1920 = vmatprep.subr.mxu0 0.0
    %1921 = vmatpush1.msra.mxu0 %v1884
    %1922 = vmatprep.subr.mxu0 0.0
    %1923 = vmatpush1.msra.mxu0 %v1883
    %1924 = vmatprep.subr.mxu0 0.0
    %1925 = vmatpush1.msra.mxu0 %v1882
    %1926 = vmatprep.subr.mxu0 0.0
    %1927 = vmatpush1.msra.mxu0 %v1881
    %1928 = vmatprep.subr.mxu0 0.0
    %1929 = vmatpush2.msra.mxu0 0.0
    %1930 = vmatprep.subr.mxu0 0.0
    %1931 = vmatpush2.msra.mxu0 0.0
    %1932 = vmatprep.subr.mxu0 0.0
    %1933 = vmatpush2.msra.mxu0 0.0
    %1934 = vmatprep.subr.mxu0 0.0
    %1935 = vmatpush2.msra.mxu0 0.0
    %1936 = vmatprep.subr.mxu0 0.0
    %1937 = vmatpush2.msra.mxu0 0.0
    %1938 = vmatprep.subr.mxu0 0.0
    %1939 = vmatpush2.msra.mxu0 0.0
    %1940 = vmatprep.subr.mxu0 0.0
    %1941 = vmatpush2.msra.mxu0 0.0
    %1942 = vmatprep.subr.mxu0 0.0
    %1943 = vmatpush2.msra.mxu0 0.0
    %1944 = vmatprep.subr.mxu0 0.0
    %1945 = vmatpush2.msra.mxu0 0.0
    %1946 = vmatprep.subr.mxu0 0.0
    %1947 = vmatpush2.msra.mxu0 0.0
    %1948 = vmatprep.subr.mxu0 0.0
    %1949 = vmatpush2.msra.mxu0 0.0
    %1950 = vmatprep.subr.mxu0 0.0
    %1951 = vmatpush2.msra.mxu0 0.0
    %1952 = vmatprep.subr.mxu0 0.0
    %1953 = vmatpush2.msra.mxu0 0.0
    %1954 = vmatprep.subr.mxu0 0.0
    %1955 = vmatpush2.msra.mxu0 0.0
    %1956 = vmatprep.subr.mxu0 0.0
    %1957 = vmatpush2.msra.mxu0 0.0
    %1958 = vmatprep.subr.mxu0 0.0
    %1959 = vmatpush2.msra.mxu0 0.0
    %1960 = vmatprep.mubr.f32.mxu0 0.0
    %1961 = vmatmul.mubr.f32.gmra.mxu0 %v1891
    %v1962 = vpop.f32.mrf.mxu0
    %v1963 = vadd.f32 %v1889, %v1962
    %v1964 = vpop.f32.mrf.mxu0
    %1965 = vmatprep.mubr.f32.mxu0 0.0
    %1966 = vmatmul.mubr.f32.gmra.mxu0 %v1894
    %v1967 = vpop.f32.mrf.mxu0
    %v1968 = vadd.f32 %v1889, %v1967
    %v1969 = vpop.f32.mrf.mxu0
    %1970 = vdwg.mxu0
    %v1971 = vmul.f32 %v1963, %v1963
    %v1972 = vmul.f32 %v1968, %v1968
    %v1973 = vmul.f32 %v1963, %v1971
    %v1974 = vmul.f32 %v1968, %v1972
    %v1975 = vmul.f32 %v1973, 0.044715
    %v1976 = vmul.f32 %v1974, 0.044715
    %v1977 = vadd.f32 %v1963, %v1975
    %v1978 = vadd.f32 %v1968, %v1976
    %v1979 = vmul.f32 %v1977, 0.7978846
    %v1980 = vmul.f32 %v1978, 0.7978846
    %v1981 = vtanh.pop %v1979
    %v1982 = vtanh.pop %v1980
    %v1983 = vadd.f32 %v1981, 1.0
    %v1984 = vadd.f32 %v1982, 1.0
    %v1985 = vmul.f32 %v1983, 0.5
    %v1986 = vmul.f32 %v1984, 0.5
    %v1987 = vmul.f32 %v1963, %v1985
    %v1988 = vmul.f32 %v1968, %v1986
    %v1989 = vld [vmem:[#allocation2 + $0x120] sm:$0xff]
    %v1990 = vld [vmem:[#allocation2 + $0x128] sm:$0xff]
    %v1991 = vld [vmem:[#allocation2 + $0x130] sm:$0xff]
    %v1992 = vld [vmem:[#allocation2 + $0x138] sm:$0xff]
    %v1993 = vld [vmem:[#allocation2 + $0x140] sm:$0xff]
    %v1994 = vld [vmem:[#allocation2 + $0x148] sm:$0xff]
    %v1995 = vld [vmem:[#allocation2 + $0x150] sm:$0xff]
    %v1996 = vld [vmem:[#allocation2 + $0x158] sm:$0xff]
    %v1997 = vld [vmem:[#allocation4 + $0xb] sm:$0x1]
    %v1998 = vlaneseq
    %v1999 = vshrl.u32 %v1998, 7
    %v2000 = vsub.s32 0, %v1999
    %v2001 = vrot.slane %v1997, %v2000
    %vm2002 = vcmask 523264
    %v2004 = vsel %vm2002, %v1987, 0
    %v2007 = vsel %vm2002, %v1988, 0
    %2009 = vmatprep.subr.mxu0 0.0
    %2010 = vmatpush1.msra.mxu0 0.0
    %2011 = vmatprep.subr.mxu0 0.0
    %2012 = vmatpush1.msra.mxu0 0.0
    %2013 = vmatprep.subr.mxu0 0.0
    %2014 = vmatpush1.msra.mxu0 0.0
    %2015 = vmatprep.subr.mxu0 0.0
    %2016 = vmatpush1.msra.mxu0 0.0
    %2017 = vmatprep.subr.mxu0 0.0
    %2018 = vmatpush1.msra.mxu0 0.0
    %2019 = vmatprep.subr.mxu0 0.0
    %2020 = vmatpush1.msra.mxu0 0.0
    %2021 = vmatprep.subr.mxu0 0.0
    %2022 = vmatpush1.msra.mxu0 0.0
    %2023 = vmatprep.subr.mxu0 0.0
    %2024 = vmatpush1.msra.mxu0 0.0
    %2025 = vmatprep.subr.mxu0 0.0
    %2026 = vmatpush1.msra.mxu0 %v1996
    %2027 = vmatprep.subr.mxu0 0.0
    %2028 = vmatpush1.msra.mxu0 %v1995
    %2029 = vmatprep.subr.mxu0 0.0
    %2030 = vmatpush1.msra.mxu0 %v1994
    %2031 = vmatprep.subr.mxu0 0.0
    %2032 = vmatpush1.msra.mxu0 %v1993
    %2033 = vmatprep.subr.mxu0 0.0
    %2034 = vmatpush1.msra.mxu0 %v1992
    %2035 = vmatprep.subr.mxu0 0.0
    %2036 = vmatpush1.msra.mxu0 %v1991
    %2037 = vmatprep.subr.mxu0 0.0
    %2038 = vmatpush1.msra.mxu0 %v1990
    %2039 = vmatprep.subr.mxu0 0.0
    %2040 = vmatpush1.msra.mxu0 %v1989
    %2041 = vmatprep.subr.mxu0 0.0
    %2042 = vmatpush2.msra.mxu0 0.0
    %2043 = vmatprep.subr.mxu0 0.0
    %2044 = vmatpush2.msra.mxu0 0.0
    %2045 = vmatprep.subr.mxu0 0.0
    %2046 = vmatpush2.msra.mxu0 0.0
    %2047 = vmatprep.subr.mxu0 0.0
    %2048 = vmatpush2.msra.mxu0 0.0
    %2049 = vmatprep.subr.mxu0 0.0
    %2050 = vmatpush2.msra.mxu0 0.0
    %2051 = vmatprep.subr.mxu0 0.0
    %2052 = vmatpush2.msra.mxu0 0.0
    %2053 = vmatprep.subr.mxu0 0.0
    %2054 = vmatpush2.msra.mxu0 0.0
    %2055 = vmatprep.subr.mxu0 0.0
    %2056 = vmatpush2.msra.mxu0 0.0
    %2057 = vmatprep.subr.mxu0 0.0
    %2058 = vmatpush2.msra.mxu0 0.0
    %2059 = vmatprep.subr.mxu0 0.0
    %2060 = vmatpush2.msra.mxu0 0.0
    %2061 = vmatprep.subr.mxu0 0.0
    %2062 = vmatpush2.msra.mxu0 0.0
    %2063 = vmatprep.subr.mxu0 0.0
    %2064 = vmatpush2.msra.mxu0 0.0
    %2065 = vmatprep.subr.mxu0 0.0
    %2066 = vmatpush2.msra.mxu0 0.0
    %2067 = vmatprep.subr.mxu0 0.0
    %2068 = vmatpush2.msra.mxu0 0.0
    %2069 = vmatprep.subr.mxu0 0.0
    %2070 = vmatpush2.msra.mxu0 0.0
    %2071 = vmatprep.subr.mxu0 0.0
    %2072 = vmatpush2.msra.mxu0 0.0
    %2073 = vmatprep.mubr.f32.mxu0 0.0
    %2074 = vmatmul.mubr.f32.gmra.mxu0 %v2004
    %v2075 = vpop.f32.mrf.mxu0
    %v2076 = vadd.f32 %v2001, %v2075
    %v2077 = vpop.f32.mrf.mxu0
    %2078 = vmatprep.mubr.f32.mxu0 0.0
    %2079 = vmatmul.mubr.f32.gmra.mxu0 %v2007
    %v2080 = vpop.f32.mrf.mxu0
    %v2081 = vadd.f32 %v2001, %v2080
    %v2082 = vpop.f32.mrf.mxu0
    %2083 = vdwg.mxu0
    %v2084 = vadd.f32 %v1879, %v2076
    %v2085 = vadd.f32 %v1880, %v2081
    %v2086 = vld [vmem:[#allocation4 + $0xc] sm:$0x1]
    %v2087 = vld [vmem:[#allocation4 + $0xd] sm:$0x1]
    %v2088 = vsel %vm162, %v2084, 0.0
    %2089 = vadd.xlane.f32.xlu0 %v2088
    %v2090 = vpop.xlane.xlu0 %2089
    %v2091 = vsel %vm162, %v2085, 0.0
    %2092 = vadd.xlane.f32.xlu0 %v2091
    %v2093 = vpop.xlane.xlu0 %2092
    %v2094 = vmul.f32 %v2090, %v169
    %v2095 = vmul.f32 %v2093, %v169
    %v2096 = vsub.f32 %v2084, %v2094
    %v2097 = vsub.f32 %v2085, %v2095
    %v2098 = vmul.f32 %v2096, %v2096
    %v2099 = vmul.f32 %v2097, %v2097
    %v2100 = vsel %vm162, %v2098, 0.0
    %2101 = vadd.xlane.f32.xlu0 %v2100
    %v2102 = vpop.xlane.xlu0 %2101
    %v2103 = vsel %vm162, %v2099, 0.0
    %2104 = vadd.xlane.f32.xlu0 %v2103
    %v2105 = vpop.xlane.xlu0 %2104
    %v2106 = vmul.f32 %v2102, %v169
    %v2107 = vmul.f32 %v2105, %v169
    %v2108 = vadd.f32 %v2106, 1e-12
    %v2109 = vadd.f32 %v2107, 1e-12
    %v2110 = vrsqrt.pop %v2108
    %v2111 = vrsqrt.pop %v2109
    %v2112 = vmul.f32 %v2096, %v2110
    %v2113 = vmul.f32 %v2097, %v2111
    %v2114 = vlaneseq
    %v2115 = vshrl.u32 %v2114, 7
    %v2116 = vsub.s32 0, %v2115
    %v2117 = vrot.slane %v2086, %v2116
    %v2118 = vmul.f32 %v2112, %v2117
    %v2119 = vmul.f32 %v2113, %v2117
    %v2120 = vlaneseq
    %v2121 = vshrl.u32 %v2120, 7
    %v2122 = vsub.s32 0, %v2121
    %v2123 = vrot.slane %v2087, %v2122
    %v2124 = vadd.f32 %v2118, %v2123
    %v2125 = vadd.f32 %v2119, %v2123
    %v2126 = vld [vmem:[#allocation2 + $0x160] sm:$0xff]
    %v2127 = vld [vmem:[#allocation2 + $0x168] sm:$0xff]
    %v2128 = vld [vmem:[#allocation2 + $0x170] sm:$0xff]
    %v2129 = vld [vmem:[#allocation2 + $0x178] sm:$0xff]
    %v2130 = vld [vmem:[#allocation4 + $0xe] sm:$0x1]
    %v2131 = vlaneseq
    %v2132 = vshrl.u32 %v2131, 7
    %v2133 = vsub.s32 0, %v2132
    %v2134 = vrot.slane %v2130, %v2133
    %v2136 = vsel %vm162, %v2124, 0
    %v2139 = vsel %vm162, %v2125, 0
    %2141 = vmatprep.subr.mxu0 0.0
    %2142 = vmatpush1.msra.mxu0 0.0
    %2143 = vmatprep.subr.mxu0 0.0
    %2144 = vmatpush1.msra.mxu0 0.0
    %2145 = vmatprep.subr.mxu0 0.0
    %2146 = vmatpush1.msra.mxu0 0.0
    %2147 = vmatprep.subr.mxu0 0.0
    %2148 = vmatpush1.msra.mxu0 0.0
    %2149 = vmatprep.subr.mxu0 0.0
    %2150 = vmatpush1.msra.mxu0 0.0
    %2151 = vmatprep.subr.mxu0 0.0
    %2152 = vmatpush1.msra.mxu0 0.0
    %2153 = vmatprep.subr.mxu0 0.0
    %2154 = vmatpush1.msra.mxu0 0.0
    %2155 = vmatprep.subr.mxu0 0.0
    %2156 = vmatpush1.msra.mxu0 0.0
    %2157 = vmatprep.subr.mxu0 0.0
    %2158 = vmatpush1.msra.mxu0 0.0
    %2159 = vmatprep.subr.mxu0 0.0
    %2160 = vmatpush1.msra.mxu0 0.0
    %2161 = vmatprep.subr.mxu0 0.0
    %2162 = vmatpush1.msra.mxu0 0.0
    %2163 = vmatprep.subr.mxu0 0.0
    %2164 = vmatpush1.msra.mxu0 0.0
    %2165 = vmatprep.subr.mxu0 0.0
    %2166 = vmatpush1.msra.mxu0 %v2129
    %2167 = vmatprep.subr.mxu0 0.0
    %2168 = vmatpush1.msra.mxu0 %v2128
    %2169 = vmatprep.subr.mxu0 0.0
    %2170 = vmatpush1.msra.mxu0 %v2127
    %2171 = vmatprep.subr.mxu0 0.0
    %2172 = vmatpush1.msra.mxu0 %v2126
    %2173 = vmatprep.subr.mxu0 0.0
    %2174 = vmatpush2.msra.mxu0 0.0
    %2175 = vmatprep.subr.mxu0 0.0
    %2176 = vmatpush2.msra.mxu0 0.0
    %2177 = vmatprep.subr.mxu0 0.0
    %2178 = vmatpush2.msra.mxu0 0.0
    %2179 = vmatprep.subr.mxu0 0.0
    %2180 = vmatpush2.msra.mxu0 0.0
    %2181 = vmatprep.subr.mxu0 0.0
    %2182 = vmatpush2.msra.mxu0 0.0
    %2183 = vmatprep.subr.mxu0 0.0
    %2184 = vmatpush2.msra.mxu0 0.0
    %2185 = vmatprep.subr.mxu0 0.0
    %2186 = vmatpush2.msra.mxu0 0.0
    %2187 = vmatprep.subr.mxu0 0.0
    %2188 = vmatpush2.msra.mxu0 0.0
    %2189 = vmatprep.subr.mxu0 0.0
    %2190 = vmatpush2.msra.mxu0 0.0
    %2191 = vmatprep.subr.mxu0 0.0
    %2192 = vmatpush2.msra.mxu0 0.0
    %2193 = vmatprep.subr.mxu0 0.0
    %2194 = vmatpush2.msra.mxu0 0.0
    %2195 = vmatprep.subr.mxu0 0.0
    %2196 = vmatpush2.msra.mxu0 0.0
    %2197 = vmatprep.subr.mxu0 0.0
    %2198 = vmatpush2.msra.mxu0 0.0
    %2199 = vmatprep.subr.mxu0 0.0
    %2200 = vmatpush2.msra.mxu0 0.0
    %2201 = vmatprep.subr.mxu0 0.0
    %2202 = vmatpush2.msra.mxu0 0.0
    %2203 = vmatprep.subr.mxu0 0.0
    %2204 = vmatpush2.msra.mxu0 0.0
    %2205 = vmatprep.mubr.f32.mxu0 0.0
    %2206 = vmatmul.mubr.f32.gmra.mxu0 %v2136
    %v2207 = vpop.f32.mrf.mxu0
    %v2208 = vadd.f32 %v2134, %v2207
    %v2209 = vpop.f32.mrf.mxu0
    %2210 = vmatprep.mubr.f32.mxu0 0.0
    %2211 = vmatmul.mubr.f32.gmra.mxu0 %v2139
    %v2212 = vpop.f32.mrf.mxu0
    %v2213 = vadd.f32 %v2134, %v2212
    %v2214 = vpop.f32.mrf.mxu0
    %2215 = vdwg.mxu0
    %2218 = vrot.lane.b32.xlu0 %v2208, 120
    %v2219 = vpop.permute.xlu0 %2218
    %2220 = vrot.lane.b32.xlu0 %v2213, 120
    %v2221 = vpop.permute.xlu0 %2220
    %2222 = vrot.lane.b32.xlu0 %v2208, 112
    %v2223 = vpop.permute.xlu0 %2222
    %2224 = vrot.lane.b32.xlu0 %v2213, 112
    %v2225 = vpop.permute.xlu0 %2224
    %2226 = vrot.lane.b32.xlu0 %v2208, 104
    %v2227 = vpop.permute.xlu0 %2226
    %2228 = vrot.lane.b32.xlu0 %v2213, 104
    %v2229 = vpop.permute.xlu0 %2228
    %2230 = vrot.lane.b32.xlu0 %v2208, 96
    %v2231 = vpop.permute.xlu0 %2230
    %v2232 = vsel %vm414, %v2208, 0
    %v2234 = vsel %vm414, %v2231, 0
    %2236 = vmatprep.subr.mxu0 0.0
    %2237 = vmatpush1.xpose.msra.mxu0 0.0
    %2238 = vmatprep.subr.mxu0 0.0
    %2239 = vmatpush1.xpose.msra.mxu0 0.0
    %2240 = vmatprep.subr.mxu0 0.0
    %2241 = vmatpush1.xpose.msra.mxu0 0.0
    %2242 = vmatprep.subr.mxu0 0.0
    %2243 = vmatpush1.xpose.msra.mxu0 0.0
    %2244 = vmatprep.subr.mxu0 0.0
    %2245 = vmatpush1.xpose.msra.mxu0 0.0
    %2246 = vmatprep.subr.mxu0 0.0
    %2247 = vmatpush1.xpose.msra.mxu0 0.0
    %2248 = vmatprep.subr.mxu0 0.0
    %2249 = vmatpush1.xpose.msra.mxu0 0.0
    %2250 = vmatprep.subr.mxu0 0.0
    %2251 = vmatpush1.xpose.msra.mxu0 0.0
    %2252 = vmatprep.subr.mxu0 0.0
    %2253 = vmatpush1.xpose.msra.mxu0 0.0
    %2254 = vmatprep.subr.mxu0 0.0
    %2255 = vmatpush1.xpose.msra.mxu0 0.0
    %2256 = vmatprep.subr.mxu0 0.0
    %2257 = vmatpush1.xpose.msra.mxu0 0.0
    %2258 = vmatprep.subr.mxu0 0.0
    %2259 = vmatpush1.xpose.msra.mxu0 0.0
    %2260 = vmatprep.subr.mxu0 0.0
    %2261 = vmatpush1.xpose.msra.mxu0 0.0
    %2262 = vmatprep.subr.mxu0 0.0
    %2263 = vmatpush1.xpose.msra.mxu0 0.0
    %2264 = vmatprep.subr.mxu0 0.0
    %2265 = vmatpush1.xpose.msra.mxu0 0.0
    %2266 = vmatprep.subr.mxu0 0.0
    %2267 = vmatpush1.xpose.msra.mxu0 %v2234
    %2268 = vmatprep.subr.mxu0 0.0
    %2269 = vmatpush2.xpose.msra.mxu0 0.0
    %2270 = vmatprep.subr.mxu0 0.0
    %2271 = vmatpush2.xpose.msra.mxu0 0.0
    %2272 = vmatprep.subr.mxu0 0.0
    %2273 = vmatpush2.xpose.msra.mxu0 0.0
    %2274 = vmatprep.subr.mxu0 0.0
    %2275 = vmatpush2.xpose.msra.mxu0 0.0
    %2276 = vmatprep.subr.mxu0 0.0
    %2277 = vmatpush2.xpose.msra.mxu0 0.0
    %2278 = vmatprep.subr.mxu0 0.0
    %2279 = vmatpush2.xpose.msra.mxu0 0.0
    %2280 = vmatprep.subr.mxu0 0.0
    %2281 = vmatpush2.xpose.msra.mxu0 0.0
    %2282 = vmatprep.subr.mxu0 0.0
    %2283 = vmatpush2.xpose.msra.mxu0 0.0
    %2284 = vmatprep.subr.mxu0 0.0
    %2285 = vmatpush2.xpose.msra.mxu0 0.0
    %2286 = vmatprep.subr.mxu0 0.0
    %2287 = vmatpush2.xpose.msra.mxu0 0.0
    %2288 = vmatprep.subr.mxu0 0.0
    %2289 = vmatpush2.xpose.msra.mxu0 0.0
    %2290 = vmatprep.subr.mxu0 0.0
    %2291 = vmatpush2.xpose.msra.mxu0 0.0
    %2292 = vmatprep.subr.mxu0 0.0
    %2293 = vmatpush2.xpose.msra.mxu0 0.0
    %2294 = vmatprep.subr.mxu0 0.0
    %2295 = vmatpush2.xpose.msra.mxu0 0.0
    %2296 = vmatprep.subr.mxu0 0.0
    %2297 = vmatpush2.xpose.msra.mxu0 0.0
    %2298 = vmatprep.subr.mxu0 0.0
    %2299 = vmatpush2.xpose.msra.mxu0 0.0
    %2300 = vmatprep.mubr.f32.mxu0 0.0
    %2301 = vmatmul.mubr.f32.gmra.mxu0 %v2232
    %v2302 = vpop.f32.mrf.mxu0
    %v2303 = vadd.f32 %v375, %v2302
    %v2304 = vpop.f32.mrf.mxu0
    %2305 = vdwg.mxu0
    %2306 = vrot.lane.b32.xlu0 %v2213, 96
    %v2307 = vpop.permute.xlu0 %2306
    %v2308 = vsel %vm414, %v2213, 0
    %v2310 = vsel %vm414, %v2307, 0
    %2312 = vmatprep.subr.mxu0 0.0
    %2313 = vmatpush1.xpose.msra.mxu0 0.0
    %2314 = vmatprep.subr.mxu0 0.0
    %2315 = vmatpush1.xpose.msra.mxu0 0.0
    %2316 = vmatprep.subr.mxu0 0.0
    %2317 = vmatpush1.xpose.msra.mxu0 0.0
    %2318 = vmatprep.subr.mxu0 0.0
    %2319 = vmatpush1.xpose.msra.mxu0 0.0
    %2320 = vmatprep.subr.mxu0 0.0
    %2321 = vmatpush1.xpose.msra.mxu0 0.0
    %2322 = vmatprep.subr.mxu0 0.0
    %2323 = vmatpush1.xpose.msra.mxu0 0.0
    %2324 = vmatprep.subr.mxu0 0.0
    %2325 = vmatpush1.xpose.msra.mxu0 0.0
    %2326 = vmatprep.subr.mxu0 0.0
    %2327 = vmatpush1.xpose.msra.mxu0 0.0
    %2328 = vmatprep.subr.mxu0 0.0
    %2329 = vmatpush1.xpose.msra.mxu0 0.0
    %2330 = vmatprep.subr.mxu0 0.0
    %2331 = vmatpush1.xpose.msra.mxu0 0.0
    %2332 = vmatprep.subr.mxu0 0.0
    %2333 = vmatpush1.xpose.msra.mxu0 0.0
    %2334 = vmatprep.subr.mxu0 0.0
    %2335 = vmatpush1.xpose.msra.mxu0 0.0
    %2336 = vmatprep.subr.mxu0 0.0
    %2337 = vmatpush1.xpose.msra.mxu0 0.0
    %2338 = vmatprep.subr.mxu0 0.0
    %2339 = vmatpush1.xpose.msra.mxu0 0.0
    %2340 = vmatprep.subr.mxu0 0.0
    %2341 = vmatpush1.xpose.msra.mxu0 0.0
    %2342 = vmatprep.subr.mxu0 0.0
    %2343 = vmatpush1.xpose.msra.mxu0 %v2310
    %2344 = vmatprep.subr.mxu0 0.0
    %2345 = vmatpush2.xpose.msra.mxu0 0.0
    %2346 = vmatprep.subr.mxu0 0.0
    %2347 = vmatpush2.xpose.msra.mxu0 0.0
    %2348 = vmatprep.subr.mxu0 0.0
    %2349 = vmatpush2.xpose.msra.mxu0 0.0
    %2350 = vmatprep.subr.mxu0 0.0
    %2351 = vmatpush2.xpose.msra.mxu0 0.0
    %2352 = vmatprep.subr.mxu0 0.0
    %2353 = vmatpush2.xpose.msra.mxu0 0.0
    %2354 = vmatprep.subr.mxu0 0.0
    %2355 = vmatpush2.xpose.msra.mxu0 0.0
    %2356 = vmatprep.subr.mxu0 0.0
    %2357 = vmatpush2.xpose.msra.mxu0 0.0
    %2358 = vmatprep.subr.mxu0 0.0
    %2359 = vmatpush2.xpose.msra.mxu0 0.0
    %2360 = vmatprep.subr.mxu0 0.0
    %2361 = vmatpush2.xpose.msra.mxu0 0.0
    %2362 = vmatprep.subr.mxu0 0.0
    %2363 = vmatpush2.xpose.msra.mxu0 0.0
    %2364 = vmatprep.subr.mxu0 0.0
    %2365 = vmatpush2.xpose.msra.mxu0 0.0
    %2366 = vmatprep.subr.mxu0 0.0
    %2367 = vmatpush2.xpose.msra.mxu0 0.0
    %2368 = vmatprep.subr.mxu0 0.0
    %2369 = vmatpush2.xpose.msra.mxu0 0.0
    %2370 = vmatprep.subr.mxu0 0.0
    %2371 = vmatpush2.xpose.msra.mxu0 0.0
    %2372 = vmatprep.subr.mxu0 0.0
    %2373 = vmatpush2.xpose.msra.mxu0 0.0
    %2374 = vmatprep.subr.mxu0 0.0
    %2375 = vmatpush2.xpose.msra.mxu0 0.0
    %2376 = vmatprep.mubr.f32.mxu0 0.0
    %2377 = vmatmul.mubr.f32.gmra.mxu0 %v2308
    %v2378 = vpop.f32.mrf.mxu0
    %v2379 = vadd.f32 %v379, %v2378
    %v2380 = vpop.f32.mrf.mxu0
    %2381 = vdwg.mxu0
    %2382 = vrot.lane.b32.xlu0 %v2219, 96
    %v2383 = vpop.permute.xlu0 %2382
    %v2384 = vsel %vm414, %v2219, 0
    %v2386 = vsel %vm414, %v2383, 0
    %2388 = vmatprep.subr.mxu0 0.0
    %2389 = vmatpush1.xpose.msra.mxu0 0.0
    %2390 = vmatprep.subr.mxu0 0.0
    %2391 = vmatpush1.xpose.msra.mxu0 0.0
    %2392 = vmatprep.subr.mxu0 0.0
    %2393 = vmatpush1.xpose.msra.mxu0 0.0
    %2394 = vmatprep.subr.mxu0 0.0
    %2395 = vmatpush1.xpose.msra.mxu0 0.0
    %2396 = vmatprep.subr.mxu0 0.0
    %2397 = vmatpush1.xpose.msra.mxu0 0.0
    %2398 = vmatprep.subr.mxu0 0.0
    %2399 = vmatpush1.xpose.msra.mxu0 0.0
    %2400 = vmatprep.subr.mxu0 0.0
    %2401 = vmatpush1.xpose.msra.mxu0 0.0
    %2402 = vmatprep.subr.mxu0 0.0
    %2403 = vmatpush1.xpose.msra.mxu0 0.0
    %2404 = vmatprep.subr.mxu0 0.0
    %2405 = vmatpush1.xpose.msra.mxu0 0.0
    %2406 = vmatprep.subr.mxu0 0.0
    %2407 = vmatpush1.xpose.msra.mxu0 0.0
    %2408 = vmatprep.subr.mxu0 0.0
    %2409 = vmatpush1.xpose.msra.mxu0 0.0
    %2410 = vmatprep.subr.mxu0 0.0
    %2411 = vmatpush1.xpose.msra.mxu0 0.0
    %2412 = vmatprep.subr.mxu0 0.0
    %2413 = vmatpush1.xpose.msra.mxu0 0.0
    %2414 = vmatprep.subr.mxu0 0.0
    %2415 = vmatpush1.xpose.msra.mxu0 0.0
    %2416 = vmatprep.subr.mxu0 0.0
    %2417 = vmatpush1.xpose.msra.mxu0 0.0
    %2418 = vmatprep.subr.mxu0 0.0
    %2419 = vmatpush1.xpose.msra.mxu0 %v2386
    %2420 = vmatprep.subr.mxu0 0.0
    %2421 = vmatpush2.xpose.msra.mxu0 0.0
    %2422 = vmatprep.subr.mxu0 0.0
    %2423 = vmatpush2.xpose.msra.mxu0 0.0
    %2424 = vmatprep.subr.mxu0 0.0
    %2425 = vmatpush2.xpose.msra.mxu0 0.0
    %2426 = vmatprep.subr.mxu0 0.0
    %2427 = vmatpush2.xpose.msra.mxu0 0.0
    %2428 = vmatprep.subr.mxu0 0.0
    %2429 = vmatpush2.xpose.msra.mxu0 0.0
    %2430 = vmatprep.subr.mxu0 0.0
    %2431 = vmatpush2.xpose.msra.mxu0 0.0
    %2432 = vmatprep.subr.mxu0 0.0
    %2433 = vmatpush2.xpose.msra.mxu0 0.0
    %2434 = vmatprep.subr.mxu0 0.0
    %2435 = vmatpush2.xpose.msra.mxu0 0.0
    %2436 = vmatprep.subr.mxu0 0.0
    %2437 = vmatpush2.xpose.msra.mxu0 0.0
    %2438 = vmatprep.subr.mxu0 0.0
    %2439 = vmatpush2.xpose.msra.mxu0 0.0
    %2440 = vmatprep.subr.mxu0 0.0
    %2441 = vmatpush2.xpose.msra.mxu0 0.0
    %2442 = vmatprep.subr.mxu0 0.0
    %2443 = vmatpush2.xpose.msra.mxu0 0.0
    %2444 = vmatprep.subr.mxu0 0.0
    %2445 = vmatpush2.xpose.msra.mxu0 0.0
    %2446 = vmatprep.subr.mxu0 0.0
    %2447 = vmatpush2.xpose.msra.mxu0 0.0
    %2448 = vmatprep.subr.mxu0 0.0
    %2449 = vmatpush2.xpose.msra.mxu0 0.0
    %2450 = vmatprep.subr.mxu0 0.0
    %2451 = vmatpush2.xpose.msra.mxu0 0.0
    %2452 = vmatprep.mubr.f32.mxu0 0.0
    %2453 = vmatmul.mubr.f32.gmra.mxu0 %v2384
    %v2454 = vpop.f32.mrf.mxu0
    %v2455 = vadd.f32 %v383, %v2454
    %v2456 = vpop.f32.mrf.mxu0
    %2457 = vdwg.mxu0
    %2458 = vrot.lane.b32.xlu0 %v2221, 96
    %v2459 = vpop.permute.xlu0 %2458
    %v2460 = vsel %vm414, %v2221, 0
    %v2462 = vsel %vm414, %v2459, 0
    %2464 = vmatprep.subr.mxu0 0.0
    %2465 = vmatpush1.xpose.msra.mxu0 0.0
    %2466 = vmatprep.subr.mxu0 0.0
    %2467 = vmatpush1.xpose.msra.mxu0 0.0
    %2468 = vmatprep.subr.mxu0 0.0
    %2469 = vmatpush1.xpose.msra.mxu0 0.0
    %2470 = vmatprep.subr.mxu0 0.0
    %2471 = vmatpush1.xpose.msra.mxu0 0.0
    %2472 = vmatprep.subr.mxu0 0.0
    %2473 = vmatpush1.xpose.msra.mxu0 0.0
    %2474 = vmatprep.subr.mxu0 0.0
    %2475 = vmatpush1.xpose.msra.mxu0 0.0
    %2476 = vmatprep.subr.mxu0 0.0
    %2477 = vmatpush1.xpose.msra.mxu0 0.0
    %2478 = vmatprep.subr.mxu0 0.0
    %2479 = vmatpush1.xpose.msra.mxu0 0.0
    %2480 = vmatprep.subr.mxu0 0.0
    %2481 = vmatpush1.xpose.msra.mxu0 0.0
    %2482 = vmatprep.subr.mxu0 0.0
    %2483 = vmatpush1.xpose.msra.mxu0 0.0
    %2484 = vmatprep.subr.mxu0 0.0
    %2485 = vmatpush1.xpose.msra.mxu0 0.0
    %2486 = vmatprep.subr.mxu0 0.0
    %2487 = vmatpush1.xpose.msra.mxu0 0.0
    %2488 = vmatprep.subr.mxu0 0.0
    %2489 = vmatpush1.xpose.msra.mxu0 0.0
    %2490 = vmatprep.subr.mxu0 0.0
    %2491 = vmatpush1.xpose.msra.mxu0 0.0
    %2492 = vmatprep.subr.mxu0 0.0
    %2493 = vmatpush1.xpose.msra.mxu0 0.0
    %2494 = vmatprep.subr.mxu0 0.0
    %2495 = vmatpush1.xpose.msra.mxu0 %v2462
    %2496 = vmatprep.subr.mxu0 0.0
    %2497 = vmatpush2.xpose.msra.mxu0 0.0
    %2498 = vmatprep.subr.mxu0 0.0
    %2499 = vmatpush2.xpose.msra.mxu0 0.0
    %2500 = vmatprep.subr.mxu0 0.0
    %2501 = vmatpush2.xpose.msra.mxu0 0.0
    %2502 = vmatprep.subr.mxu0 0.0
    %2503 = vmatpush2.xpose.msra.mxu0 0.0
    %2504 = vmatprep.subr.mxu0 0.0
    %2505 = vmatpush2.xpose.msra.mxu0 0.0
    %2506 = vmatprep.subr.mxu0 0.0
    %2507 = vmatpush2.xpose.msra.mxu0 0.0
    %2508 = vmatprep.subr.mxu0 0.0
    %2509 = vmatpush2.xpose.msra.mxu0 0.0
    %2510 = vmatprep.subr.mxu0 0.0
    %2511 = vmatpush2.xpose.msra.mxu0 0.0
    %2512 = vmatprep.subr.mxu0 0.0
    %2513 = vmatpush2.xpose.msra.mxu0 0.0
    %2514 = vmatprep.subr.mxu0 0.0
    %2515 = vmatpush2.xpose.msra.mxu0 0.0
    %2516 = vmatprep.subr.mxu0 0.0
    %2517 = vmatpush2.xpose.msra.mxu0 0.0
    %2518 = vmatprep.subr.mxu0 0.0
    %2519 = vmatpush2.xpose.msra.mxu0 0.0
    %2520 = vmatprep.subr.mxu0 0.0
    %2521 = vmatpush2.xpose.msra.mxu0 0.0
    %2522 = vmatprep.subr.mxu0 0.0
    %2523 = vmatpush2.xpose.msra.mxu0 0.0
    %2524 = vmatprep.subr.mxu0 0.0
    %2525 = vmatpush2.xpose.msra.mxu0 0.0
    %2526 = vmatprep.subr.mxu0 0.0
    %2527 = vmatpush2.xpose.msra.mxu0 0.0
    %2528 = vmatprep.mubr.f32.mxu0 0.0
    %2529 = vmatmul.mubr.f32.gmra.mxu0 %v2460
    %v2530 = vpop.f32.mrf.mxu0
    %v2531 = vadd.f32 %v387, %v2530
    %v2532 = vpop.f32.mrf.mxu0
    %2533 = vdwg.mxu0
    %2534 = vrot.lane.b32.xlu0 %v2223, 96
    %v2535 = vpop.permute.xlu0 %2534
    %v2536 = vsel %vm414, %v2223, 0
    %v2538 = vsel %vm414, %v2535, 0
    %2540 = vmatprep.subr.mxu0 0.0
    %2541 = vmatpush1.xpose.msra.mxu0 0.0
    %2542 = vmatprep.subr.mxu0 0.0
    %2543 = vmatpush1.xpose.msra.mxu0 0.0
    %2544 = vmatprep.subr.mxu0 0.0
    %2545 = vmatpush1.xpose.msra.mxu0 0.0
    %2546 = vmatprep.subr.mxu0 0.0
    %2547 = vmatpush1.xpose.msra.mxu0 0.0
    %2548 = vmatprep.subr.mxu0 0.0
    %2549 = vmatpush1.xpose.msra.mxu0 0.0
    %2550 = vmatprep.subr.mxu0 0.0
    %2551 = vmatpush1.xpose.msra.mxu0 0.0
    %2552 = vmatprep.subr.mxu0 0.0
    %2553 = vmatpush1.xpose.msra.mxu0 0.0
    %2554 = vmatprep.subr.mxu0 0.0
    %2555 = vmatpush1.xpose.msra.mxu0 0.0
    %2556 = vmatprep.subr.mxu0 0.0
    %2557 = vmatpush1.xpose.msra.mxu0 0.0
    %2558 = vmatprep.subr.mxu0 0.0
    %2559 = vmatpush1.xpose.msra.mxu0 0.0
    %2560 = vmatprep.subr.mxu0 0.0
    %2561 = vmatpush1.xpose.msra.mxu0 0.0
    %2562 = vmatprep.subr.mxu0 0.0
    %2563 = vmatpush1.xpose.msra.mxu0 0.0
    %2564 = vmatprep.subr.mxu0 0.0
    %2565 = vmatpush1.xpose.msra.mxu0 0.0
    %2566 = vmatprep.subr.mxu0 0.0
    %2567 = vmatpush1.xpose.msra.mxu0 0.0
    %2568 = vmatprep.subr.mxu0 0.0
    %2569 = vmatpush1.xpose.msra.mxu0 0.0
    %2570 = vmatprep.subr.mxu0 0.0
    %2571 = vmatpush1.xpose.msra.mxu0 %v2538
    %2572 = vmatprep.subr.mxu0 0.0
    %2573 = vmatpush2.xpose.msra.mxu0 0.0
    %2574 = vmatprep.subr.mxu0 0.0
    %2575 = vmatpush2.xpose.msra.mxu0 0.0
    %2576 = vmatprep.subr.mxu0 0.0
    %2577 = vmatpush2.xpose.msra.mxu0 0.0
    %2578 = vmatprep.subr.mxu0 0.0
    %2579 = vmatpush2.xpose.msra.mxu0 0.0
    %2580 = vmatprep.subr.mxu0 0.0
    %2581 = vmatpush2.xpose.msra.mxu0 0.0
    %2582 = vmatprep.subr.mxu0 0.0
    %2583 = vmatpush2.xpose.msra.mxu0 0.0
    %2584 = vmatprep.subr.mxu0 0.0
    %2585 = vmatpush2.xpose.msra.mxu0 0.0
    %2586 = vmatprep.subr.mxu0 0.0
    %2587 = vmatpush2.xpose.msra.mxu0 0.0
    %2588 = vmatprep.subr.mxu0 0.0
    %2589 = vmatpush2.xpose.msra.mxu0 0.0
    %2590 = vmatprep.subr.mxu0 0.0
    %2591 = vmatpush2.xpose.msra.mxu0 0.0
    %2592 = vmatprep.subr.mxu0 0.0
    %2593 = vmatpush2.xpose.msra.mxu0 0.0
    %2594 = vmatprep.subr.mxu0 0.0
    %2595 = vmatpush2.xpose.msra.mxu0 0.0
    %2596 = vmatprep.subr.mxu0 0.0
    %2597 = vmatpush2.xpose.msra.mxu0 0.0
    %2598 = vmatprep.subr.mxu0 0.0
    %2599 = vmatpush2.xpose.msra.mxu0 0.0
    %2600 = vmatprep.subr.mxu0 0.0
    %2601 = vmatpush2.xpose.msra.mxu0 0.0
    %2602 = vmatprep.subr.mxu0 0.0
    %2603 = vmatpush2.xpose.msra.mxu0 0.0
    %2604 = vmatprep.mubr.f32.mxu0 0.0
    %2605 = vmatmul.mubr.f32.gmra.mxu0 %v2536
    %v2606 = vpop.f32.mrf.mxu0
    %v2607 = vadd.f32 %v391, %v2606
    %v2608 = vpop.f32.mrf.mxu0
    %2609 = vdwg.mxu0
    %2610 = vrot.lane.b32.xlu0 %v2225, 96
    %v2611 = vpop.permute.xlu0 %2610
    %v2612 = vsel %vm414, %v2225, 0
    %v2614 = vsel %vm414, %v2611, 0
    %2616 = vmatprep.subr.mxu0 0.0
    %2617 = vmatpush1.xpose.msra.mxu0 0.0
    %2618 = vmatprep.subr.mxu0 0.0
    %2619 = vmatpush1.xpose.msra.mxu0 0.0
    %2620 = vmatprep.subr.mxu0 0.0
    %2621 = vmatpush1.xpose.msra.mxu0 0.0
    %2622 = vmatprep.subr.mxu0 0.0
    %2623 = vmatpush1.xpose.msra.mxu0 0.0
    %2624 = vmatprep.subr.mxu0 0.0
    %2625 = vmatpush1.xpose.msra.mxu0 0.0
    %2626 = vmatprep.subr.mxu0 0.0
    %2627 = vmatpush1.xpose.msra.mxu0 0.0
    %2628 = vmatprep.subr.mxu0 0.0
    %2629 = vmatpush1.xpose.msra.mxu0 0.0
    %2630 = vmatprep.subr.mxu0 0.0
    %2631 = vmatpush1.xpose.msra.mxu0 0.0
    %2632 = vmatprep.subr.mxu0 0.0
    %2633 = vmatpush1.xpose.msra.mxu0 0.0
    %2634 = vmatprep.subr.mxu0 0.0
    %2635 = vmatpush1.xpose.msra.mxu0 0.0
    %2636 = vmatprep.subr.mxu0 0.0
    %2637 = vmatpush1.xpose.msra.mxu0 0.0
    %2638 = vmatprep.subr.mxu0 0.0
    %2639 = vmatpush1.xpose.msra.mxu0 0.0
    %2640 = vmatprep.subr.mxu0 0.0
    %2641 = vmatpush1.xpose.msra.mxu0 0.0
    %2642 = vmatprep.subr.mxu0 0.0
    %2643 = vmatpush1.xpose.msra.mxu0 0.0
    %2644 = vmatprep.subr.mxu0 0.0
    %2645 = vmatpush1.xpose.msra.mxu0 0.0
    %2646 = vmatprep.subr.mxu0 0.0
    %2647 = vmatpush1.xpose.msra.mxu0 %v2614
    %2648 = vmatprep.subr.mxu0 0.0
    %2649 = vmatpush2.xpose.msra.mxu0 0.0
    %2650 = vmatprep.subr.mxu0 0.0
    %2651 = vmatpush2.xpose.msra.mxu0 0.0
    %2652 = vmatprep.subr.mxu0 0.0
    %2653 = vmatpush2.xpose.msra.mxu0 0.0
    %2654 = vmatprep.subr.mxu0 0.0
    %2655 = vmatpush2.xpose.msra.mxu0 0.0
    %2656 = vmatprep.subr.mxu0 0.0
    %2657 = vmatpush2.xpose.msra.mxu0 0.0
    %2658 = vmatprep.subr.mxu0 0.0
    %2659 = vmatpush2.xpose.msra.mxu0 0.0
    %2660 = vmatprep.subr.mxu0 0.0
    %2661 = vmatpush2.xpose.msra.mxu0 0.0
    %2662 = vmatprep.subr.mxu0 0.0
    %2663 = vmatpush2.xpose.msra.mxu0 0.0
    %2664 = vmatprep.subr.mxu0 0.0
    %2665 = vmatpush2.xpose.msra.mxu0 0.0
    %2666 = vmatprep.subr.mxu0 0.0
    %2667 = vmatpush2.xpose.msra.mxu0 0.0
    %2668 = vmatprep.subr.mxu0 0.0
    %2669 = vmatpush2.xpose.msra.mxu0 0.0
    %2670 = vmatprep.subr.mxu0 0.0
    %2671 = vmatpush2.xpose.msra.mxu0 0.0
    %2672 = vmatprep.subr.mxu0 0.0
    %2673 = vmatpush2.xpose.msra.mxu0 0.0
    %2674 = vmatprep.subr.mxu0 0.0
    %2675 = vmatpush2.xpose.msra.mxu0 0.0
    %2676 = vmatprep.subr.mxu0 0.0
    %2677 = vmatpush2.xpose.msra.mxu0 0.0
    %2678 = vmatprep.subr.mxu0 0.0
    %2679 = vmatpush2.xpose.msra.mxu0 0.0
    %2680 = vmatprep.mubr.f32.mxu0 0.0
    %2681 = vmatmul.mubr.f32.gmra.mxu0 %v2612
    %v2682 = vpop.f32.mrf.mxu0
    %v2683 = vadd.f32 %v395, %v2682
    %v2684 = vpop.f32.mrf.mxu0
    %2685 = vdwg.mxu0
    %2686 = vrot.lane.b32.xlu0 %v2227, 96
    %v2687 = vpop.permute.xlu0 %2686
    %v2688 = vsel %vm414, %v2227, 0
    %v2690 = vsel %vm414, %v2687, 0
    %2692 = vmatprep.subr.mxu0 0.0
    %2693 = vmatpush1.xpose.msra.mxu0 0.0
    %2694 = vmatprep.subr.mxu0 0.0
    %2695 = vmatpush1.xpose.msra.mxu0 0.0
    %2696 = vmatprep.subr.mxu0 0.0
    %2697 = vmatpush1.xpose.msra.mxu0 0.0
    %2698 = vmatprep.subr.mxu0 0.0
    %2699 = vmatpush1.xpose.msra.mxu0 0.0
    %2700 = vmatprep.subr.mxu0 0.0
    %2701 = vmatpush1.xpose.msra.mxu0 0.0
    %2702 = vmatprep.subr.mxu0 0.0
    %2703 = vmatpush1.xpose.msra.mxu0 0.0
    %2704 = vmatprep.subr.mxu0 0.0
    %2705 = vmatpush1.xpose.msra.mxu0 0.0
    %2706 = vmatprep.subr.mxu0 0.0
    %2707 = vmatpush1.xpose.msra.mxu0 0.0
    %2708 = vmatprep.subr.mxu0 0.0
    %2709 = vmatpush1.xpose.msra.mxu0 0.0
    %2710 = vmatprep.subr.mxu0 0.0
    %2711 = vmatpush1.xpose.msra.mxu0 0.0
    %2712 = vmatprep.subr.mxu0 0.0
    %2713 = vmatpush1.xpose.msra.mxu0 0.0
    %2714 = vmatprep.subr.mxu0 0.0
    %2715 = vmatpush1.xpose.msra.mxu0 0.0
    %2716 = vmatprep.subr.mxu0 0.0
    %2717 = vmatpush1.xpose.msra.mxu0 0.0
    %2718 = vmatprep.subr.mxu0 0.0
    %2719 = vmatpush1.xpose.msra.mxu0 0.0
    %2720 = vmatprep.subr.mxu0 0.0
    %2721 = vmatpush1.xpose.msra.mxu0 0.0
    %2722 = vmatprep.subr.mxu0 0.0
    %2723 = vmatpush1.xpose.msra.mxu0 %v2690
    %2724 = vmatprep.subr.mxu0 0.0
    %2725 = vmatpush2.xpose.msra.mxu0 0.0
    %2726 = vmatprep.subr.mxu0 0.0
    %2727 = vmatpush2.xpose.msra.mxu0 0.0
    %2728 = vmatprep.subr.mxu0 0.0
    %2729 = vmatpush2.xpose.msra.mxu0 0.0
    %2730 = vmatprep.subr.mxu0 0.0
    %2731 = vmatpush2.xpose.msra.mxu0 0.0
    %2732 = vmatprep.subr.mxu0 0.0
    %2733 = vmatpush2.xpose.msra.mxu0 0.0
    %2734 = vmatprep.subr.mxu0 0.0
    %2735 = vmatpush2.xpose.msra.mxu0 0.0
    %2736 = vmatprep.subr.mxu0 0.0
    %2737 = vmatpush2.xpose.msra.mxu0 0.0
    %2738 = vmatprep.subr.mxu0 0.0
    %2739 = vmatpush2.xpose.msra.mxu0 0.0
    %2740 = vmatprep.subr.mxu0 0.0
    %2741 = vmatpush2.xpose.msra.mxu0 0.0
    %2742 = vmatprep.subr.mxu0 0.0
    %2743 = vmatpush2.xpose.msra.mxu0 0.0
    %2744 = vmatprep.subr.mxu0 0.0
    %2745 = vmatpush2.xpose.msra.mxu0 0.0
    %2746 = vmatprep.subr.mxu0 0.0
    %2747 = vmatpush2.xpose.msra.mxu0 0.0
    %2748 = vmatprep.subr.mxu0 0.0
    %2749 = vmatpush2.xpose.msra.mxu0 0.0
    %2750 = vmatprep.subr.mxu0 0.0
    %2751 = vmatpush2.xpose.msra.mxu0 0.0
    %2752 = vmatprep.subr.mxu0 0.0
    %2753 = vmatpush2.xpose.msra.mxu0 0.0
    %2754 = vmatprep.subr.mxu0 0.0
    %2755 = vmatpush2.xpose.msra.mxu0 0.0
    %2756 = vmatprep.mubr.f32.mxu0 0.0
    %2757 = vmatmul.mubr.f32.gmra.mxu0 %v2688
    %v2758 = vpop.f32.mrf.mxu0
    %v2759 = vadd.f32 %v399, %v2758
    %v2760 = vpop.f32.mrf.mxu0
    %2761 = vdwg.mxu0
    %2762 = vrot.lane.b32.xlu0 %v2229, 96
    %v2763 = vpop.permute.xlu0 %2762
    %v2764 = vsel %vm414, %v2229, 0
    %v2766 = vsel %vm414, %v2763, 0
    %2768 = vmatprep.subr.mxu0 0.0
    %2769 = vmatpush1.xpose.msra.mxu0 0.0
    %2770 = vmatprep.subr.mxu0 0.0
    %2771 = vmatpush1.xpose.msra.mxu0 0.0
    %2772 = vmatprep.subr.mxu0 0.0
    %2773 = vmatpush1.xpose.msra.mxu0 0.0
    %2774 = vmatprep.subr.mxu0 0.0
    %2775 = vmatpush1.xpose.msra.mxu0 0.0
    %2776 = vmatprep.subr.mxu0 0.0
    %2777 = vmatpush1.xpose.msra.mxu0 0.0
    %2778 = vmatprep.subr.mxu0 0.0
    %2779 = vmatpush1.xpose.msra.mxu0 0.0
    %2780 = vmatprep.subr.mxu0 0.0
    %2781 = vmatpush1.xpose.msra.mxu0 0.0
    %2782 = vmatprep.subr.mxu0 0.0
    %2783 = vmatpush1.xpose.msra.mxu0 0.0
    %2784 = vmatprep.subr.mxu0 0.0
    %2785 = vmatpush1.xpose.msra.mxu0 0.0
    %2786 = vmatprep.subr.mxu0 0.0
    %2787 = vmatpush1.xpose.msra.mxu0 0.0
    %2788 = vmatprep.subr.mxu0 0.0
    %2789 = vmatpush1.xpose.msra.mxu0 0.0
    %2790 = vmatprep.subr.mxu0 0.0
    %2791 = vmatpush1.xpose.msra.mxu0 0.0
    %2792 = vmatprep.subr.mxu0 0.0
    %2793 = vmatpush1.xpose.msra.mxu0 0.0
    %2794 = vmatprep.subr.mxu0 0.0
    %2795 = vmatpush1.xpose.msra.mxu0 0.0
    %2796 = vmatprep.subr.mxu0 0.0
    %2797 = vmatpush1.xpose.msra.mxu0 0.0
    %2798 = vmatprep.subr.mxu0 0.0
    %2799 = vmatpush1.xpose.msra.mxu0 %v2766
    %2800 = vmatprep.subr.mxu0 0.0
    %2801 = vmatpush2.xpose.msra.mxu0 0.0
    %2802 = vmatprep.subr.mxu0 0.0
    %2803 = vmatpush2.xpose.msra.mxu0 0.0
    %2804 = vmatprep.subr.mxu0 0.0
    %2805 = vmatpush2.xpose.msra.mxu0 0.0
    %2806 = vmatprep.subr.mxu0 0.0
    %2807 = vmatpush2.xpose.msra.mxu0 0.0
    %2808 = vmatprep.subr.mxu0 0.0
    %2809 = vmatpush2.xpose.msra.mxu0 0.0
    %2810 = vmatprep.subr.mxu0 0.0
    %2811 = vmatpush2.xpose.msra.mxu0 0.0
    %2812 = vmatprep.subr.mxu0 0.0
    %2813 = vmatpush2.xpose.msra.mxu0 0.0
    %2814 = vmatprep.subr.mxu0 0.0
    %2815 = vmatpush2.xpose.msra.mxu0 0.0
    %2816 = vmatprep.subr.mxu0 0.0
    %2817 = vmatpush2.xpose.msra.mxu0 0.0
    %2818 = vmatprep.subr.mxu0 0.0
    %2819 = vmatpush2.xpose.msra.mxu0 0.0
    %2820 = vmatprep.subr.mxu0 0.0
    %2821 = vmatpush2.xpose.msra.mxu0 0.0
    %2822 = vmatprep.subr.mxu0 0.0
    %2823 = vmatpush2.xpose.msra.mxu0 0.0
    %2824 = vmatprep.subr.mxu0 0.0
    %2825 = vmatpush2.xpose.msra.mxu0 0.0
    %2826 = vmatprep.subr.mxu0 0.0
    %2827 = vmatpush2.xpose.msra.mxu0 0.0
    %2828 = vmatprep.subr.mxu0 0.0
    %2829 = vmatpush2.xpose.msra.mxu0 0.0
    %2830 = vmatprep.subr.mxu0 0.0
    %2831 = vmatpush2.xpose.msra.mxu0 0.0
    %2832 = vmatprep.mubr.f32.mxu0 0.0
    %2833 = vmatmul.mubr.f32.gmra.mxu0 %v2764
    %v2834 = vpop.f32.mrf.mxu0
    %v2835 = vadd.f32 %v403, %v2834
    %v2836 = vpop.f32.mrf.mxu0
    %2837 = vdwg.mxu0
    %v2838 = vsel %vm414, %v2303, -inf
    %2839 = vmax.xlane.f32.xlu0 %v2838
    %v2840 = vpop.xlane.xlu0 %2839
    %v2841 = vsel %vm414, %v2379, -inf
    %2842 = vmax.xlane.f32.xlu0 %v2841
    %v2843 = vpop.xlane.xlu0 %2842
    %v2844 = vsel %vm414, %v2455, -inf
    %2845 = vmax.xlane.f32.xlu0 %v2844
    %v2846 = vpop.xlane.xlu0 %2845
    %v2847 = vsel %vm414, %v2531, -inf
    %2848 = vmax.xlane.f32.xlu0 %v2847
    %v2849 = vpop.xlane.xlu0 %2848
    %v2850 = vsel %vm414, %v2607, -inf
    %2851 = vmax.xlane.f32.xlu0 %v2850
    %v2852 = vpop.xlane.xlu0 %2851
    %v2853 = vsel %vm414, %v2683, -inf
    %2854 = vmax.xlane.f32.xlu0 %v2853
    %v2855 = vpop.xlane.xlu0 %2854
    %v2856 = vsel %vm414, %v2759, -inf
    %2857 = vmax.xlane.f32.xlu0 %v2856
    %v2858 = vpop.xlane.xlu0 %2857
    %v2859 = vsel %vm414, %v2835, -inf
    %2860 = vmax.xlane.f32.xlu0 %v2859
    %v2861 = vpop.xlane.xlu0 %2860
    %v2862 = vsub.f32 %v2303, %v2840
    %v2863 = vsub.f32 %v2379, %v2843
    %v2864 = vsub.f32 %v2455, %v2846
    %v2865 = vsub.f32 %v2531, %v2849
    %v2866 = vsub.f32 %v2607, %v2852
    %v2867 = vsub.f32 %v2683, %v2855
    %v2868 = vsub.f32 %v2759, %v2858
    %v2869 = vsub.f32 %v2835, %v2861
    %v2870 = vmul.f32 %v2862, 1.442695
    %v2871 = vpow.pop %v2870
    %v2872 = vmul.f32 %v2863, 1.442695
    %v2873 = vpow.pop %v2872
    %v2874 = vmul.f32 %v2864, 1.442695
    %v2875 = vpow.pop %v2874
    %v2876 = vmul.f32 %v2865, 1.442695
    %v2877 = vpow.pop %v2876
    %v2878 = vmul.f32 %v2866, 1.442695
    %v2879 = vpow.pop %v2878
    %v2880 = vmul.f32 %v2867, 1.442695
    %v2881 = vpow.pop %v2880
    %v2882 = vmul.f32 %v2868, 1.442695
    %v2883 = vpow.pop %v2882
    %v2884 = vmul.f32 %v2869, 1.442695
    %v2885 = vpow.pop %v2884
    %v2886 = vsel %vm414, %v2871, 0.0
    %2887 = vadd.xlane.f32.xlu0 %v2886
    %v2888 = vpop.xlane.xlu0 %2887
    %v2889 = vsel %vm414, %v2873, 0.0
    %2890 = vadd.xlane.f32.xlu0 %v2889
    %v2891 = vpop.xlane.xlu0 %2890
    %v2892 = vsel %vm414, %v2875, 0.0
    %2893 = vadd.xlane.f32.xlu0 %v2892
    %v2894 = vpop.xlane.xlu0 %2893
    %v2895 = vsel %vm414, %v2877, 0.0
    %2896 = vadd.xlane.f32.xlu0 %v2895
    %v2897 = vpop.xlane.xlu0 %2896
    %v2898 = vsel %vm414, %v2879, 0.0
    %2899 = vadd.xlane.f32.xlu0 %v2898
    %v2900 = vpop.xlane.xlu0 %2899
    %v2901 = vsel %vm414, %v2881, 0.0
    %2902 = vadd.xlane.f32.xlu0 %v2901
    %v2903 = vpop.xlane.xlu0 %2902
    %v2904 = vsel %vm414, %v2883, 0.0
    %2905 = vadd.xlane.f32.xlu0 %v2904
    %v2906 = vpop.xlane.xlu0 %2905
    %v2907 = vsel %vm414, %v2885, 0.0
    %2908 = vadd.xlane.f32.xlu0 %v2907
    %v2909 = vpop.xlane.xlu0 %2908
    %v2910 = vrcp.pop %v2888
    %v2911 = vrcp.pop %v2891
    %v2912 = vrcp.pop %v2894
    %v2913 = vrcp.pop %v2897
    %v2914 = vrcp.pop %v2900
    %v2915 = vrcp.pop %v2903
    %v2916 = vrcp.pop %v2906
    %v2917 = vrcp.pop %v2909
    %v2918 = vmul.f32 %v2871, %v2910
    %v2919 = vmul.f32 %v2873, %v2911
    %v2920 = vmul.f32 %v2875, %v2912
    %v2921 = vmul.f32 %v2877, %v2913
    %v2922 = vmul.f32 %v2879, %v2914
    %v2923 = vmul.f32 %v2881, %v2915
    %v2924 = vmul.f32 %v2883, %v2916
    %v2925 = vmul.f32 %v2885, %v2917
    %2926 = vrot.lane.b32.xlu0 %v2208, 64
    %v2927 = vpop.permute.xlu0 %2926
    %v2930 = vsel %vm414, %v2918, 0
    %2932 = vmatprep.subr.mxu0 0.0
    %2933 = vmatpush1.msra.mxu0 0.0
    %2934 = vmatprep.subr.mxu0 0.0
    %2935 = vmatpush1.msra.mxu0 0.0
    %2936 = vmatprep.subr.mxu0 0.0
    %2937 = vmatpush1.msra.mxu0 0.0
    %2938 = vmatprep.subr.mxu0 0.0
    %2939 = vmatpush1.msra.mxu0 0.0
    %2940 = vmatprep.subr.mxu0 0.0
    %2941 = vmatpush1.msra.mxu0 0.0
    %2942 = vmatprep.subr.mxu0 0.0
    %2943 = vmatpush1.msra.mxu0 0.0
    %2944 = vmatprep.subr.mxu0 0.0
    %2945 = vmatpush1.msra.mxu0 0.0
    %2946 = vmatprep.subr.mxu0 0.0
    %2947 = vmatpush1.msra.mxu0 0.0
    %2948 = vmatprep.subr.mxu0 0.0
    %2949 = vmatpush1.msra.mxu0 0.0
    %2950 = vmatprep.subr.mxu0 0.0
    %2951 = vmatpush1.msra.mxu0 0.0
    %2952 = vmatprep.subr.mxu0 0.0
    %2953 = vmatpush1.msra.mxu0 0.0
    %2954 = vmatprep.subr.mxu0 0.0
    %2955 = vmatpush1.msra.mxu0 0.0
    %2956 = vmatprep.subr.mxu0 0.0
    %2957 = vmatpush1.msra.mxu0 0.0
    %2958 = vmatprep.subr.mxu0 0.0
    %2959 = vmatpush1.msra.mxu0 0.0
    %2960 = vmatprep.subr.mxu0 0.0
    %2961 = vmatpush1.msra.mxu0 0.0
    %2962 = vmatprep.subr.mxu0 0.0
    %2963 = vmatpush1.msra.mxu0 %v2927
    %2964 = vmatprep.subr.mxu0 0.0
    %2965 = vmatpush2.msra.mxu0 0.0
    %2966 = vmatprep.subr.mxu0 0.0
    %2967 = vmatpush2.msra.mxu0 0.0
    %2968 = vmatprep.subr.mxu0 0.0
    %2969 = vmatpush2.msra.mxu0 0.0
    %2970 = vmatprep.subr.mxu0 0.0
    %2971 = vmatpush2.msra.mxu0 0.0
    %2972 = vmatprep.subr.mxu0 0.0
    %2973 = vmatpush2.msra.mxu0 0.0
    %2974 = vmatprep.subr.mxu0 0.0
    %2975 = vmatpush2.msra.mxu0 0.0
    %2976 = vmatprep.subr.mxu0 0.0
    %2977 = vmatpush2.msra.mxu0 0.0
    %2978 = vmatprep.subr.mxu0 0.0
    %2979 = vmatpush2.msra.mxu0 0.0
    %2980 = vmatprep.subr.mxu0 0.0
    %2981 = vmatpush2.msra.mxu0 0.0
    %2982 = vmatprep.subr.mxu0 0.0
    %2983 = vmatpush2.msra.mxu0 0.0
    %2984 = vmatprep.subr.mxu0 0.0
    %2985 = vmatpush2.msra.mxu0 0.0
    %2986 = vmatprep.subr.mxu0 0.0
    %2987 = vmatpush2.msra.mxu0 0.0
    %2988 = vmatprep.subr.mxu0 0.0
    %2989 = vmatpush2.msra.mxu0 0.0
    %2990 = vmatprep.subr.mxu0 0.0
    %2991 = vmatpush2.msra.mxu0 0.0
    %2992 = vmatprep.subr.mxu0 0.0
    %2993 = vmatpush2.msra.mxu0 0.0
    %2994 = vmatprep.subr.mxu0 0.0
    %2995 = vmatpush2.msra.mxu0 0.0
    %2996 = vmatprep.mubr.f32.mxu0 0.0
    %2997 = vmatmul.mubr.f32.gmra.mxu0 %v2930
    %v2998 = vpop.f32.mrf.mxu0
    %v2999 = vadd.f32 0.0, %v2998
    %v3000 = vpop.f32.mrf.mxu0
    %3001 = vdwg.mxu0
    %3002 = vrot.lane.b32.xlu0 %v2213, 64
    %v3003 = vpop.permute.xlu0 %3002
    %v3006 = vsel %vm414, %v2919, 0
    %3008 = vmatprep.subr.mxu0 0.0
    %3009 = vmatpush1.msra.mxu0 0.0
    %3010 = vmatprep.subr.mxu0 0.0
    %3011 = vmatpush1.msra.mxu0 0.0
    %3012 = vmatprep.subr.mxu0 0.0
    %3013 = vmatpush1.msra.mxu0 0.0
    %3014 = vmatprep.subr.mxu0 0.0
    %3015 = vmatpush1.msra.mxu0 0.0
    %3016 = vmatprep.subr.mxu0 0.0
    %3017 = vmatpush1.msra.mxu0 0.0
    %3018 = vmatprep.subr.mxu0 0.0
    %3019 = vmatpush1.msra.mxu0 0.0
    %3020 = vmatprep.subr.mxu0 0.0
    %3021 = vmatpush1.msra.mxu0 0.0
    %3022 = vmatprep.subr.mxu0 0.0
    %3023 = vmatpush1.msra.mxu0 0.0
    %3024 = vmatprep.subr.mxu0 0.0
    %3025 = vmatpush1.msra.mxu0 0.0
    %3026 = vmatprep.subr.mxu0 0.0
    %3027 = vmatpush1.msra.mxu0 0.0
    %3028 = vmatprep.subr.mxu0 0.0
    %3029 = vmatpush1.msra.mxu0 0.0
    %3030 = vmatprep.subr.mxu0 0.0
    %3031 = vmatpush1.msra.mxu0 0.0
    %3032 = vmatprep.subr.mxu0 0.0
    %3033 = vmatpush1.msra.mxu0 0.0
    %3034 = vmatprep.subr.mxu0 0.0
    %3035 = vmatpush1.msra.mxu0 0.0
    %3036 = vmatprep.subr.mxu0 0.0
    %3037 = vmatpush1.msra.mxu0 0.0
    %3038 = vmatprep.subr.mxu0 0.0
    %3039 = vmatpush1.msra.mxu0 %v3003
    %3040 = vmatprep.subr.mxu0 0.0
    %3041 = vmatpush2.msra.mxu0 0.0
    %3042 = vmatprep.subr.mxu0 0.0
    %3043 = vmatpush2.msra.mxu0 0.0
    %3044 = vmatprep.subr.mxu0 0.0
    %3045 = vmatpush2.msra.mxu0 0.0
    %3046 = vmatprep.subr.mxu0 0.0
    %3047 = vmatpush2.msra.mxu0 0.0
    %3048 = vmatprep.subr.mxu0 0.0
    %3049 = vmatpush2.msra.mxu0 0.0
    %3050 = vmatprep.subr.mxu0 0.0
    %3051 = vmatpush2.msra.mxu0 0.0
    %3052 = vmatprep.subr.mxu0 0.0
    %3053 = vmatpush2.msra.mxu0 0.0
    %3054 = vmatprep.subr.mxu0 0.0
    %3055 = vmatpush2.msra.mxu0 0.0
    %3056 = vmatprep.subr.mxu0 0.0
    %3057 = vmatpush2.msra.mxu0 0.0
    %3058 = vmatprep.subr.mxu0 0.0
    %3059 = vmatpush2.msra.mxu0 0.0
    %3060 = vmatprep.subr.mxu0 0.0
    %3061 = vmatpush2.msra.mxu0 0.0
    %3062 = vmatprep.subr.mxu0 0.0
    %3063 = vmatpush2.msra.mxu0 0.0
    %3064 = vmatprep.subr.mxu0 0.0
    %3065 = vmatpush2.msra.mxu0 0.0
    %3066 = vmatprep.subr.mxu0 0.0
    %3067 = vmatpush2.msra.mxu0 0.0
    %3068 = vmatprep.subr.mxu0 0.0
    %3069 = vmatpush2.msra.mxu0 0.0
    %3070 = vmatprep.subr.mxu0 0.0
    %3071 = vmatpush2.msra.mxu0 0.0
    %3072 = vmatprep.mubr.f32.mxu0 0.0
    %3073 = vmatmul.mubr.f32.gmra.mxu0 %v3006
    %v3074 = vpop.f32.mrf.mxu0
    %v3075 = vadd.f32 0.0, %v3074
    %v3076 = vpop.f32.mrf.mxu0
    %3077 = vdwg.mxu0
    %3078 = vrot.lane.b32.xlu0 %v2219, 64
    %v3079 = vpop.permute.xlu0 %3078
    %v3082 = vsel %vm414, %v2920, 0
    %3084 = vmatprep.subr.mxu0 0.0
    %3085 = vmatpush1.msra.mxu0 0.0
    %3086 = vmatprep.subr.mxu0 0.0
    %3087 = vmatpush1.msra.mxu0 0.0
    %3088 = vmatprep.subr.mxu0 0.0
    %3089 = vmatpush1.msra.mxu0 0.0
    %3090 = vmatprep.subr.mxu0 0.0
    %3091 = vmatpush1.msra.mxu0 0.0
    %3092 = vmatprep.subr.mxu0 0.0
    %3093 = vmatpush1.msra.mxu0 0.0
    %3094 = vmatprep.subr.mxu0 0.0
    %3095 = vmatpush1.msra.mxu0 0.0
    %3096 = vmatprep.subr.mxu0 0.0
    %3097 = vmatpush1.msra.mxu0 0.0
    %3098 = vmatprep.subr.mxu0 0.0
    %3099 = vmatpush1.msra.mxu0 0.0
    %3100 = vmatprep.subr.mxu0 0.0
    %3101 = vmatpush1.msra.mxu0 0.0
    %3102 = vmatprep.subr.mxu0 0.0
    %3103 = vmatpush1.msra.mxu0 0.0
    %3104 = vmatprep.subr.mxu0 0.0
    %3105 = vmatpush1.msra.mxu0 0.0
    %3106 = vmatprep.subr.mxu0 0.0
    %3107 = vmatpush1.msra.mxu0 0.0
    %3108 = vmatprep.subr.mxu0 0.0
    %3109 = vmatpush1.msra.mxu0 0.0
    %3110 = vmatprep.subr.mxu0 0.0
    %3111 = vmatpush1.msra.mxu0 0.0
    %3112 = vmatprep.subr.mxu0 0.0
    %3113 = vmatpush1.msra.mxu0 0.0
    %3114 = vmatprep.subr.mxu0 0.0
    %3115 = vmatpush1.msra.mxu0 %v3079
    %3116 = vmatprep.subr.mxu0 0.0
    %3117 = vmatpush2.msra.mxu0 0.0
    %3118 = vmatprep.subr.mxu0 0.0
    %3119 = vmatpush2.msra.mxu0 0.0
    %3120 = vmatprep.subr.mxu0 0.0
    %3121 = vmatpush2.msra.mxu0 0.0
    %3122 = vmatprep.subr.mxu0 0.0
    %3123 = vmatpush2.msra.mxu0 0.0
    %3124 = vmatprep.subr.mxu0 0.0
    %3125 = vmatpush2.msra.mxu0 0.0
    %3126 = vmatprep.subr.mxu0 0.0
    %3127 = vmatpush2.msra.mxu0 0.0
    %3128 = vmatprep.subr.mxu0 0.0
    %3129 = vmatpush2.msra.mxu0 0.0
    %3130 = vmatprep.subr.mxu0 0.0
    %3131 = vmatpush2.msra.mxu0 0.0
    %3132 = vmatprep.subr.mxu0 0.0
    %3133 = vmatpush2.msra.mxu0 0.0
    %3134 = vmatprep.subr.mxu0 0.0
    %3135 = vmatpush2.msra.mxu0 0.0
    %3136 = vmatprep.subr.mxu0 0.0
    %3137 = vmatpush2.msra.mxu0 0.0
    %3138 = vmatprep.subr.mxu0 0.0
    %3139 = vmatpush2.msra.mxu0 0.0
    %3140 = vmatprep.subr.mxu0 0.0
    %3141 = vmatpush2.msra.mxu0 0.0
    %3142 = vmatprep.subr.mxu0 0.0
    %3143 = vmatpush2.msra.mxu0 0.0
    %3144 = vmatprep.subr.mxu0 0.0
    %3145 = vmatpush2.msra.mxu0 0.0
    %3146 = vmatprep.subr.mxu0 0.0
    %3147 = vmatpush2.msra.mxu0 0.0
    %3148 = vmatprep.mubr.f32.mxu0 0.0
    %3149 = vmatmul.mubr.f32.gmra.mxu0 %v3082
    %v3150 = vpop.f32.mrf.mxu0
    %v3151 = vadd.f32 0.0, %v3150
    %v3152 = vpop.f32.mrf.mxu0
    %3153 = vdwg.mxu0
    %3154 = vrot.lane.b32.xlu0 %v2221, 64
    %v3155 = vpop.permute.xlu0 %3154
    %v3158 = vsel %vm414, %v2921, 0
    %3160 = vmatprep.subr.mxu0 0.0
    %3161 = vmatpush1.msra.mxu0 0.0
    %3162 = vmatprep.subr.mxu0 0.0
    %3163 = vmatpush1.msra.mxu0 0.0
    %3164 = vmatprep.subr.mxu0 0.0
    %3165 = vmatpush1.msra.mxu0 0.0
    %3166 = vmatprep.subr.mxu0 0.0
    %3167 = vmatpush1.msra.mxu0 0.0
    %3168 = vmatprep.subr.mxu0 0.0
    %3169 = vmatpush1.msra.mxu0 0.0
    %3170 = vmatprep.subr.mxu0 0.0
    %3171 = vmatpush1.msra.mxu0 0.0
    %3172 = vmatprep.subr.mxu0 0.0
    %3173 = vmatpush1.msra.mxu0 0.0
    %3174 = vmatprep.subr.mxu0 0.0
    %3175 = vmatpush1.msra.mxu0 0.0
    %3176 = vmatprep.subr.mxu0 0.0
    %3177 = vmatpush1.msra.mxu0 0.0
    %3178 = vmatprep.subr.mxu0 0.0
    %3179 = vmatpush1.msra.mxu0 0.0
    %3180 = vmatprep.subr.mxu0 0.0
    %3181 = vmatpush1.msra.mxu0 0.0
    %3182 = vmatprep.subr.mxu0 0.0
    %3183 = vmatpush1.msra.mxu0 0.0
    %3184 = vmatprep.subr.mxu0 0.0
    %3185 = vmatpush1.msra.mxu0 0.0
    %3186 = vmatprep.subr.mxu0 0.0
    %3187 = vmatpush1.msra.mxu0 0.0
    %3188 = vmatprep.subr.mxu0 0.0
    %3189 = vmatpush1.msra.mxu0 0.0
    %3190 = vmatprep.subr.mxu0 0.0
    %3191 = vmatpush1.msra.mxu0 %v3155
    %3192 = vmatprep.subr.mxu0 0.0
    %3193 = vmatpush2.msra.mxu0 0.0
    %3194 = vmatprep.subr.mxu0 0.0
    %3195 = vmatpush2.msra.mxu0 0.0
    %3196 = vmatprep.subr.mxu0 0.0
    %3197 = vmatpush2.msra.mxu0 0.0
    %3198 = vmatprep.subr.mxu0 0.0
    %3199 = vmatpush2.msra.mxu0 0.0
    %3200 = vmatprep.subr.mxu0 0.0
    %3201 = vmatpush2.msra.mxu0 0.0
    %3202 = vmatprep.subr.mxu0 0.0
    %3203 = vmatpush2.msra.mxu0 0.0
    %3204 = vmatprep.subr.mxu0 0.0
    %3205 = vmatpush2.msra.mxu0 0.0
    %3206 = vmatprep.subr.mxu0 0.0
    %3207 = vmatpush2.msra.mxu0 0.0
    %3208 = vmatprep.subr.mxu0 0.0
    %3209 = vmatpush2.msra.mxu0 0.0
    %3210 = vmatprep.subr.mxu0 0.0
    %3211 = vmatpush2.msra.mxu0 0.0
    %3212 = vmatprep.subr.mxu0 0.0
    %3213 = vmatpush2.msra.mxu0 0.0
    %3214 = vmatprep.subr.mxu0 0.0
    %3215 = vmatpush2.msra.mxu0 0.0
    %3216 = vmatprep.subr.mxu0 0.0
    %3217 = vmatpush2.msra.mxu0 0.0
    %3218 = vmatprep.subr.mxu0 0.0
    %3219 = vmatpush2.msra.mxu0 0.0
    %3220 = vmatprep.subr.mxu0 0.0
    %3221 = vmatpush2.msra.mxu0 0.0
    %3222 = vmatprep.subr.mxu0 0.0
    %3223 = vmatpush2.msra.mxu0 0.0
    %3224 = vmatprep.mubr.f32.mxu0 0.0
    %3225 = vmatmul.mubr.f32.gmra.mxu0 %v3158
    %v3226 = vpop.f32.mrf.mxu0
    %v3227 = vadd.f32 0.0, %v3226
    %v3228 = vpop.f32.mrf.mxu0
    %3229 = vdwg.mxu0
    %3230 = vrot.lane.b32.xlu0 %v2223, 64
    %v3231 = vpop.permute.xlu0 %3230
    %v3234 = vsel %vm414, %v2922, 0
    %3236 = vmatprep.subr.mxu0 0.0
    %3237 = vmatpush1.msra.mxu0 0.0
    %3238 = vmatprep.subr.mxu0 0.0
    %3239 = vmatpush1.msra.mxu0 0.0
    %3240 = vmatprep.subr.mxu0 0.0
    %3241 = vmatpush1.msra.mxu0 0.0
    %3242 = vmatprep.subr.mxu0 0.0
    %3243 = vmatpush1.msra.mxu0 0.0
    %3244 = vmatprep.subr.mxu0 0.0
    %3245 = vmatpush1.msra.mxu0 0.0
    %3246 = vmatprep.subr.mxu0 0.0
    %3247 = vmatpush1.msra.mxu0 0.0
    %3248 = vmatprep.subr.mxu0 0.0
    %3249 = vmatpush1.msra.mxu0 0.0
    %3250 = vmatprep.subr.mxu0 0.0
    %3251 = vmatpush1.msra.mxu0 0.0
    %3252 = vmatprep.subr.mxu0 0.0
    %3253 = vmatpush1.msra.mxu0 0.0
    %3254 = vmatprep.subr.mxu0 0.0
    %3255 = vmatpush1.msra.mxu0 0.0
    %3256 = vmatprep.subr.mxu0 0.0
    %3257 = vmatpush1.msra.mxu0 0.0
    %3258 = vmatprep.subr.mxu0 0.0
    %3259 = vmatpush1.msra.mxu0 0.0
    %3260 = vmatprep.subr.mxu0 0.0
    %3261 = vmatpush1.msra.mxu0 0.0
    %3262 = vmatprep.subr.mxu0 0.0
    %3263 = vmatpush1.msra.mxu0 0.0
    %3264 = vmatprep.subr.mxu0 0.0
    %3265 = vmatpush1.msra.mxu0 0.0
    %3266 = vmatprep.subr.mxu0 0.0
    %3267 = vmatpush1.msra.mxu0 %v3231
    %3268 = vmatprep.subr.mxu0 0.0
    %3269 = vmatpush2.msra.mxu0 0.0
    %3270 = vmatprep.subr.mxu0 0.0
    %3271 = vmatpush2.msra.mxu0 0.0
    %3272 = vmatprep.subr.mxu0 0.0
    %3273 = vmatpush2.msra.mxu0 0.0
    %3274 = vmatprep.subr.mxu0 0.0
    %3275 = vmatpush2.msra.mxu0 0.0
    %3276 = vmatprep.subr.mxu0 0.0
    %3277 = vmatpush2.msra.mxu0 0.0
    %3278 = vmatprep.subr.mxu0 0.0
    %3279 = vmatpush2.msra.mxu0 0.0
    %3280 = vmatprep.subr.mxu0 0.0
    %3281 = vmatpush2.msra.mxu0 0.0
    %3282 = vmatprep.subr.mxu0 0.0
    %3283 = vmatpush2.msra.mxu0 0.0
    %3284 = vmatprep.subr.mxu0 0.0
    %3285 = vmatpush2.msra.mxu0 0.0
    %3286 = vmatprep.subr.mxu0 0.0
    %3287 = vmatpush2.msra.mxu0 0.0
    %3288 = vmatprep.subr.mxu0 0.0
    %3289 = vmatpush2.msra.mxu0 0.0
    %3290 = vmatprep.subr.mxu0 0.0
    %3291 = vmatpush2.msra.mxu0 0.0
    %3292 = vmatprep.subr.mxu0 0.0
    %3293 = vmatpush2.msra.mxu0 0.0
    %3294 = vmatprep.subr.mxu0 0.0
    %3295 = vmatpush2.msra.mxu0 0.0
    %3296 = vmatprep.subr.mxu0 0.0
    %3297 = vmatpush2.msra.mxu0 0.0
    %3298 = vmatprep.subr.mxu0 0.0
    %3299 = vmatpush2.msra.mxu0 0.0
    %3300 = vmatprep.mubr.f32.mxu0 0.0
    %3301 = vmatmul.mubr.f32.gmra.mxu0 %v3234
    %v3302 = vpop.f32.mrf.mxu0
    %v3303 = vadd.f32 0.0, %v3302
    %v3304 = vpop.f32.mrf.mxu0
    %3305 = vdwg.mxu0
    %3306 = vrot.lane.b32.xlu0 %v2225, 64
    %v3307 = vpop.permute.xlu0 %3306
    %v3310 = vsel %vm414, %v2923, 0
    %3312 = vmatprep.subr.mxu0 0.0
    %3313 = vmatpush1.msra.mxu0 0.0
    %3314 = vmatprep.subr.mxu0 0.0
    %3315 = vmatpush1.msra.mxu0 0.0
    %3316 = vmatprep.subr.mxu0 0.0
    %3317 = vmatpush1.msra.mxu0 0.0
    %3318 = vmatprep.subr.mxu0 0.0
    %3319 = vmatpush1.msra.mxu0 0.0
    %3320 = vmatprep.subr.mxu0 0.0
    %3321 = vmatpush1.msra.mxu0 0.0
    %3322 = vmatprep.subr.mxu0 0.0
    %3323 = vmatpush1.msra.mxu0 0.0
    %3324 = vmatprep.subr.mxu0 0.0
    %3325 = vmatpush1.msra.mxu0 0.0
    %3326 = vmatprep.subr.mxu0 0.0
    %3327 = vmatpush1.msra.mxu0 0.0
    %3328 = vmatprep.subr.mxu0 0.0
    %3329 = vmatpush1.msra.mxu0 0.0
    %3330 = vmatprep.subr.mxu0 0.0
    %3331 = vmatpush1.msra.mxu0 0.0
    %3332 = vmatprep.subr.mxu0 0.0
    %3333 = vmatpush1.msra.mxu0 0.0
    %3334 = vmatprep.subr.mxu0 0.0
    %3335 = vmatpush1.msra.mxu0 0.0
    %3336 = vmatprep.subr.mxu0 0.0
    %3337 = vmatpush1.msra.mxu0 0.0
    %3338 = vmatprep.subr.mxu0 0.0
    %3339 = vmatpush1.msra.mxu0 0.0
    %3340 = vmatprep.subr.mxu0 0.0
    %3341 = vmatpush1.msra.mxu0 0.0
    %3342 = vmatprep.subr.mxu0 0.0
    %3343 = vmatpush1.msra.mxu0 %v3307
    %3344 = vmatprep.subr.mxu0 0.0
    %3345 = vmatpush2.msra.mxu0 0.0
    %3346 = vmatprep.subr.mxu0 0.0
    %3347 = vmatpush2.msra.mxu0 0.0
    %3348 = vmatprep.subr.mxu0 0.0
    %3349 = vmatpush2.msra.mxu0 0.0
    %3350 = vmatprep.subr.mxu0 0.0
    %3351 = vmatpush2.msra.mxu0 0.0
    %3352 = vmatprep.subr.mxu0 0.0
    %3353 = vmatpush2.msra.mxu0 0.0
    %3354 = vmatprep.subr.mxu0 0.0
    %3355 = vmatpush2.msra.mxu0 0.0
    %3356 = vmatprep.subr.mxu0 0.0
    %3357 = vmatpush2.msra.mxu0 0.0
    %3358 = vmatprep.subr.mxu0 0.0
    %3359 = vmatpush2.msra.mxu0 0.0
    %3360 = vmatprep.subr.mxu0 0.0
    %3361 = vmatpush2.msra.mxu0 0.0
    %3362 = vmatprep.subr.mxu0 0.0
    %3363 = vmatpush2.msra.mxu0 0.0
    %3364 = vmatprep.subr.mxu0 0.0
    %3365 = vmatpush2.msra.mxu0 0.0
    %3366 = vmatprep.subr.mxu0 0.0
    %3367 = vmatpush2.msra.mxu0 0.0
    %3368 = vmatprep.subr.mxu0 0.0
    %3369 = vmatpush2.msra.mxu0 0.0
    %3370 = vmatprep.subr.mxu0 0.0
    %3371 = vmatpush2.msra.mxu0 0.0
    %3372 = vmatprep.subr.mxu0 0.0
    %3373 = vmatpush2.msra.mxu0 0.0
    %3374 = vmatprep.subr.mxu0 0.0
    %3375 = vmatpush2.msra.mxu0 0.0
    %3376 = vmatprep.mubr.f32.mxu0 0.0
    %3377 = vmatmul.mubr.f32.gmra.mxu0 %v3310
    %v3378 = vpop.f32.mrf.mxu0
    %v3379 = vadd.f32 0.0, %v3378
    %v3380 = vpop.f32.mrf.mxu0
    %3381 = vdwg.mxu0
    %3382 = vrot.lane.b32.xlu0 %v2227, 64
    %v3383 = vpop.permute.xlu0 %3382
    %v3386 = vsel %vm414, %v2924, 0
    %3388 = vmatprep.subr.mxu0 0.0
    %3389 = vmatpush1.msra.mxu0 0.0
    %3390 = vmatprep.subr.mxu0 0.0
    %3391 = vmatpush1.msra.mxu0 0.0
    %3392 = vmatprep.subr.mxu0 0.0
    %3393 = vmatpush1.msra.mxu0 0.0
    %3394 = vmatprep.subr.mxu0 0.0
    %3395 = vmatpush1.msra.mxu0 0.0
    %3396 = vmatprep.subr.mxu0 0.0
    %3397 = vmatpush1.msra.mxu0 0.0
    %3398 = vmatprep.subr.mxu0 0.0
    %3399 = vmatpush1.msra.mxu0 0.0
    %3400 = vmatprep.subr.mxu0 0.0
    %3401 = vmatpush1.msra.mxu0 0.0
    %3402 = vmatprep.subr.mxu0 0.0
    %3403 = vmatpush1.msra.mxu0 0.0
    %3404 = vmatprep.subr.mxu0 0.0
    %3405 = vmatpush1.msra.mxu0 0.0
    %3406 = vmatprep.subr.mxu0 0.0
    %3407 = vmatpush1.msra.mxu0 0.0
    %3408 = vmatprep.subr.mxu0 0.0
    %3409 = vmatpush1.msra.mxu0 0.0
    %3410 = vmatprep.subr.mxu0 0.0
    %3411 = vmatpush1.msra.mxu0 0.0
    %3412 = vmatprep.subr.mxu0 0.0
    %3413 = vmatpush1.msra.mxu0 0.0
    %3414 = vmatprep.subr.mxu0 0.0
    %3415 = vmatpush1.msra.mxu0 0.0
    %3416 = vmatprep.subr.mxu0 0.0
    %3417 = vmatpush1.msra.mxu0 0.0
    %3418 = vmatprep.subr.mxu0 0.0
    %3419 = vmatpush1.msra.mxu0 %v3383
    %3420 = vmatprep.subr.mxu0 0.0
    %3421 = vmatpush2.msra.mxu0 0.0
    %3422 = vmatprep.subr.mxu0 0.0
    %3423 = vmatpush2.msra.mxu0 0.0
    %3424 = vmatprep.subr.mxu0 0.0
    %3425 = vmatpush2.msra.mxu0 0.0
    %3426 = vmatprep.subr.mxu0 0.0
    %3427 = vmatpush2.msra.mxu0 0.0
    %3428 = vmatprep.subr.mxu0 0.0
    %3429 = vmatpush2.msra.mxu0 0.0
    %3430 = vmatprep.subr.mxu0 0.0
    %3431 = vmatpush2.msra.mxu0 0.0
    %3432 = vmatprep.subr.mxu0 0.0
    %3433 = vmatpush2.msra.mxu0 0.0
    %3434 = vmatprep.subr.mxu0 0.0
    %3435 = vmatpush2.msra.mxu0 0.0
    %3436 = vmatprep.subr.mxu0 0.0
    %3437 = vmatpush2.msra.mxu0 0.0
    %3438 = vmatprep.subr.mxu0 0.0
    %3439 = vmatpush2.msra.mxu0 0.0
    %3440 = vmatprep.subr.mxu0 0.0
    %3441 = vmatpush2.msra.mxu0 0.0
    %3442 = vmatprep.subr.mxu0 0.0
    %3443 = vmatpush2.msra.mxu0 0.0
    %3444 = vmatprep.subr.mxu0 0.0
    %3445 = vmatpush2.msra.mxu0 0.0
    %3446 = vmatprep.subr.mxu0 0.0
    %3447 = vmatpush2.msra.mxu0 0.0
    %3448 = vmatprep.subr.mxu0 0.0
    %3449 = vmatpush2.msra.mxu0 0.0
    %3450 = vmatprep.subr.mxu0 0.0
    %3451 = vmatpush2.msra.mxu0 0.0
    %3452 = vmatprep.mubr.f32.mxu0 0.0
    %3453 = vmatmul.mubr.f32.gmra.mxu0 %v3386
    %v3454 = vpop.f32.mrf.mxu0
    %v3455 = vadd.f32 0.0, %v3454
    %v3456 = vpop.f32.mrf.mxu0
    %3457 = vdwg.mxu0
    %3458 = vrot.lane.b32.xlu0 %v2229, 64
    %v3459 = vpop.permute.xlu0 %3458
    %v3462 = vsel %vm414, %v2925, 0
    %3464 = vmatprep.subr.mxu0 0.0
    %3465 = vmatpush1.msra.mxu0 0.0
    %3466 = vmatprep.subr.mxu0 0.0
    %3467 = vmatpush1.msra.mxu0 0.0
    %3468 = vmatprep.subr.mxu0 0.0
    %3469 = vmatpush1.msra.mxu0 0.0
    %3470 = vmatprep.subr.mxu0 0.0
    %3471 = vmatpush1.msra.mxu0 0.0
    %3472 = vmatprep.subr.mxu0 0.0
    %3473 = vmatpush1.msra.mxu0 0.0
    %3474 = vmatprep.subr.mxu0 0.0
    %3475 = vmatpush1.msra.mxu0 0.0
    %3476 = vmatprep.subr.mxu0 0.0
    %3477 = vmatpush1.msra.mxu0 0.0
    %3478 = vmatprep.subr.mxu0 0.0
    %3479 = vmatpush1.msra.mxu0 0.0
    %3480 = vmatprep.subr.mxu0 0.0
    %3481 = vmatpush1.msra.mxu0 0.0
    %3482 = vmatprep.subr.mxu0 0.0
    %3483 = vmatpush1.msra.mxu0 0.0
    %3484 = vmatprep.subr.mxu0 0.0
    %3485 = vmatpush1.msra.mxu0 0.0
    %3486 = vmatprep.subr.mxu0 0.0
    %3487 = vmatpush1.msra.mxu0 0.0
    %3488 = vmatprep.subr.mxu0 0.0
    %3489 = vmatpush1.msra.mxu0 0.0
    %3490 = vmatprep.subr.mxu0 0.0
    %3491 = vmatpush1.msra.mxu0 0.0
    %3492 = vmatprep.subr.mxu0 0.0
    %3493 = vmatpush1.msra.mxu0 0.0
    %3494 = vmatprep.subr.mxu0 0.0
    %3495 = vmatpush1.msra.mxu0 %v3459
    %3496 = vmatprep.subr.mxu0 0.0
    %3497 = vmatpush2.msra.mxu0 0.0
    %3498 = vmatprep.subr.mxu0 0.0
    %3499 = vmatpush2.msra.mxu0 0.0
    %3500 = vmatprep.subr.mxu0 0.0
    %3501 = vmatpush2.msra.mxu0 0.0
    %3502 = vmatprep.subr.mxu0 0.0
    %3503 = vmatpush2.msra.mxu0 0.0
    %3504 = vmatprep.subr.mxu0 0.0
    %3505 = vmatpush2.msra.mxu0 0.0
    %3506 = vmatprep.subr.mxu0 0.0
    %3507 = vmatpush2.msra.mxu0 0.0
    %3508 = vmatprep.subr.mxu0 0.0
    %3509 = vmatpush2.msra.mxu0 0.0
    %3510 = vmatprep.subr.mxu0 0.0
    %3511 = vmatpush2.msra.mxu0 0.0
    %3512 = vmatprep.subr.mxu0 0.0
    %3513 = vmatpush2.msra.mxu0 0.0
    %3514 = vmatprep.subr.mxu0 0.0
    %3515 = vmatpush2.msra.mxu0 0.0
    %3516 = vmatprep.subr.mxu0 0.0
    %3517 = vmatpush2.msra.mxu0 0.0
    %3518 = vmatprep.subr.mxu0 0.0
    %3519 = vmatpush2.msra.mxu0 0.0
    %3520 = vmatprep.subr.mxu0 0.0
    %3521 = vmatpush2.msra.mxu0 0.0
    %3522 = vmatprep.subr.mxu0 0.0
    %3523 = vmatpush2.msra.mxu0 0.0
    %3524 = vmatprep.subr.mxu0 0.0
    %3525 = vmatpush2.msra.mxu0 0.0
    %3526 = vmatprep.subr.mxu0 0.0
    %3527 = vmatpush2.msra.mxu0 0.0
    %3528 = vmatprep.mubr.f32.mxu0 0.0
    %3529 = vmatmul.mubr.f32.gmra.mxu0 %v3462
    %v3530 = vpop.f32.mrf.mxu0
    %v3531 = vadd.f32 0.0, %v3530
    %v3532 = vpop.f32.mrf.mxu0
    %3533 = vdwg.mxu0
    %3536 = vrot.lane.b32.xlu0 %v3151, 8
    %v3537 = vpop.permute.xlu0 %3536
    %3538 = vrot.lane.b32.xlu0 %v3227, 8
    %v3539 = vpop.permute.xlu0 %3538
    %3544 = vrot.lane.b32.xlu0 %v3303, 16
    %v3545 = vpop.permute.xlu0 %3544
    %3546 = vrot.lane.b32.xlu0 %v3379, 16
    %v3547 = vpop.permute.xlu0 %3546
    %3552 = vrot.lane.b32.xlu0 %v3455, 24
    %v3553 = vpop.permute.xlu0 %3552
    %3554 = vrot.lane.b32.xlu0 %v3531, 24
    %v3555 = vpop.permute.xlu0 %3554
    %v3558 = vsel %vm414, %v2999, %v3537
    %v3559 = vsel %vm414, %v3075, %v3539
    %v3560 = vsel %vm1743, %v3558, %v3545
    %v3561 = vsel %vm1743, %v3559, %v3547
    %v3562 = vsel %vm1746, %v3560, %v3553
    %v3563 = vsel %vm1746, %v3561, %v3555
    %v3564 = vld [vmem:[#allocation2 + $0x180] sm:$0xff]
    %v3565 = vld [vmem:[#allocation2 + $0x188] sm:$0xff]
    %v3566 = vld [vmem:[#allocation2 + $0x190] sm:$0xff]
    %v3567 = vld [vmem:[#allocation2 + $0x198] sm:$0xff]
    %v3568 = vld [vmem:[#allocation4 + $0xf] sm:$0x1]
    %v3569 = vlaneseq
    %v3570 = vshrl.u32 %v3569, 7
    %v3571 = vsub.s32 0, %v3570
    %v3572 = vrot.slane %v3568, %v3571
    %v3574 = vsel %vm162, %v3562, 0
    %v3577 = vsel %vm162, %v3563, 0
    %3579 = vmatprep.subr.mxu0 0.0
    %3580 = vmatpush1.msra.mxu0 0.0
    %3581 = vmatprep.subr.mxu0 0.0
    %3582 = vmatpush1.msra.mxu0 0.0
    %3583 = vmatprep.subr.mxu0 0.0
    %3584 = vmatpush1.msra.mxu0 0.0
    %3585 = vmatprep.subr.mxu0 0.0
    %3586 = vmatpush1.msra.mxu0 0.0
    %3587 = vmatprep.subr.mxu0 0.0
    %3588 = vmatpush1.msra.mxu0 0.0
    %3589 = vmatprep.subr.mxu0 0.0
    %3590 = vmatpush1.msra.mxu0 0.0
    %3591 = vmatprep.subr.mxu0 0.0
    %3592 = vmatpush1.msra.mxu0 0.0
    %3593 = vmatprep.subr.mxu0 0.0
    %3594 = vmatpush1.msra.mxu0 0.0
    %3595 = vmatprep.subr.mxu0 0.0
    %3596 = vmatpush1.msra.mxu0 0.0
    %3597 = vmatprep.subr.mxu0 0.0
    %3598 = vmatpush1.msra.mxu0 0.0
    %3599 = vmatprep.subr.mxu0 0.0
    %3600 = vmatpush1.msra.mxu0 0.0
    %3601 = vmatprep.subr.mxu0 0.0
    %3602 = vmatpush1.msra.mxu0 0.0
    %3603 = vmatprep.subr.mxu0 0.0
    %3604 = vmatpush1.msra.mxu0 %v3567
    %3605 = vmatprep.subr.mxu0 0.0
    %3606 = vmatpush1.msra.mxu0 %v3566
    %3607 = vmatprep.subr.mxu0 0.0
    %3608 = vmatpush1.msra.mxu0 %v3565
    %3609 = vmatprep.subr.mxu0 0.0
    %3610 = vmatpush1.msra.mxu0 %v3564
    %3611 = vmatprep.subr.mxu0 0.0
    %3612 = vmatpush2.msra.mxu0 0.0
    %3613 = vmatprep.subr.mxu0 0.0
    %3614 = vmatpush2.msra.mxu0 0.0
    %3615 = vmatprep.subr.mxu0 0.0
    %3616 = vmatpush2.msra.mxu0 0.0
    %3617 = vmatprep.subr.mxu0 0.0
    %3618 = vmatpush2.msra.mxu0 0.0
    %3619 = vmatprep.subr.mxu0 0.0
    %3620 = vmatpush2.msra.mxu0 0.0
    %3621 = vmatprep.subr.mxu0 0.0
    %3622 = vmatpush2.msra.mxu0 0.0
    %3623 = vmatprep.subr.mxu0 0.0
    %3624 = vmatpush2.msra.mxu0 0.0
    %3625 = vmatprep.subr.mxu0 0.0
    %3626 = vmatpush2.msra.mxu0 0.0
    %3627 = vmatprep.subr.mxu0 0.0
    %3628 = vmatpush2.msra.mxu0 0.0
    %3629 = vmatprep.subr.mxu0 0.0
    %3630 = vmatpush2.msra.mxu0 0.0
    %3631 = vmatprep.subr.mxu0 0.0
    %3632 = vmatpush2.msra.mxu0 0.0
    %3633 = vmatprep.subr.mxu0 0.0
    %3634 = vmatpush2.msra.mxu0 0.0
    %3635 = vmatprep.subr.mxu0 0.0
    %3636 = vmatpush2.msra.mxu0 0.0
    %3637 = vmatprep.subr.mxu0 0.0
    %3638 = vmatpush2.msra.mxu0 0.0
    %3639 = vmatprep.subr.mxu0 0.0
    %3640 = vmatpush2.msra.mxu0 0.0
    %3641 = vmatprep.subr.mxu0 0.0
    %3642 = vmatpush2.msra.mxu0 0.0
    %3643 = vmatprep.mubr.f32.mxu0 0.0
    %3644 = vmatmul.mubr.f32.gmra.mxu0 %v3574
    %v3645 = vpop.f32.mrf.mxu0
    %v3646 = vadd.f32 %v3572, %v3645
    %v3647 = vpop.f32.mrf.mxu0
    %3648 = vmatprep.mubr.f32.mxu0 0.0
    %3649 = vmatmul.mubr.f32.gmra.mxu0 %v3577
    %v3650 = vpop.f32.mrf.mxu0
    %v3651 = vadd.f32 %v3572, %v3650
    %v3652 = vpop.f32.mrf.mxu0
    %3653 = vdwg.mxu0
    %v3654 = vadd.f32 %v2124, %v3646
    %v3655 = vadd.f32 %v2125, %v3651
    %v3656 = vld [vmem:[#allocation4 + $0x10] sm:$0x1]
    %v3657 = vld [vmem:[#allocation4 + $0x11] sm:$0x1]
    %v3658 = vsel %vm162, %v3654, 0.0
    %3659 = vadd.xlane.f32.xlu0 %v3658
    %v3660 = vpop.xlane.xlu0 %3659
    %v3661 = vsel %vm162, %v3655, 0.0
    %3662 = vadd.xlane.f32.xlu0 %v3661
    %v3663 = vpop.xlane.xlu0 %3662
    %v3664 = vmul.f32 %v3660, %v169
    %v3665 = vmul.f32 %v3663, %v169
    %v3666 = vsub.f32 %v3654, %v3664
    %v3667 = vsub.f32 %v3655, %v3665
    %v3668 = vmul.f32 %v3666, %v3666
    %v3669 = vmul.f32 %v3667, %v3667
    %v3670 = vsel %vm162, %v3668, 0.0
    %3671 = vadd.xlane.f32.xlu0 %v3670
    %v3672 = vpop.xlane.xlu0 %3671
    %v3673 = vsel %vm162, %v3669, 0.0
    %3674 = vadd.xlane.f32.xlu0 %v3673
    %v3675 = vpop.xlane.xlu0 %3674
    %v3676 = vmul.f32 %v3672, %v169
    %v3677 = vmul.f32 %v3675, %v169
    %v3678 = vadd.f32 %v3676, 1e-12
    %v3679 = vadd.f32 %v3677, 1e-12
    %v3680 = vrsqrt.pop %v3678
    %v3681 = vrsqrt.pop %v3679
    %v3682 = vmul.f32 %v3666, %v3680
    %v3683 = vmul.f32 %v3667, %v3681
    %v3684 = vlaneseq
    %v3685 = vshrl.u32 %v3684, 7
    %v3686 = vsub.s32 0, %v3685
    %v3687 = vrot.slane %v3656, %v3686
    %v3688 = vmul.f32 %v3682, %v3687
    %v3689 = vmul.f32 %v3683, %v3687
    %v3690 = vlaneseq
    %v3691 = vshrl.u32 %v3690, 7
    %v3692 = vsub.s32 0, %v3691
    %v3693 = vrot.slane %v3657, %v3692
    %v3694 = vadd.f32 %v3688, %v3693
    %v3695 = vadd.f32 %v3689, %v3693
    %v3696 = vld [vmem:[#allocation2 + $0x1a0] sm:$0xff]
    %v3697 = vld [vmem:[#allocation2 + $0x1a8] sm:$0xff]
    %v3698 = vld [vmem:[#allocation2 + $0x1b0] sm:$0xff]
    %v3699 = vld [vmem:[#allocation2 + $0x1b8] sm:$0xff]
    %v3700 = vld [vmem:[#allocation4 + $0x12] sm:$0x1]
    %v3701 = vlaneseq
    %v3702 = vshrl.u32 %v3701, 7
    %v3703 = vsub.s32 0, %v3702
    %v3704 = vrot.slane %v3700, %v3703
    %v3706 = vsel %vm162, %v3694, 0
    %v3709 = vsel %vm162, %v3695, 0
    %3711 = vmatprep.subr.mxu0 0.0
    %3712 = vmatpush1.msra.mxu0 0.0
    %3713 = vmatprep.subr.mxu0 0.0
    %3714 = vmatpush1.msra.mxu0 0.0
    %3715 = vmatprep.subr.mxu0 0.0
    %3716 = vmatpush1.msra.mxu0 0.0
    %3717 = vmatprep.subr.mxu0 0.0
    %3718 = vmatpush1.msra.mxu0 0.0
    %3719 = vmatprep.subr.mxu0 0.0
    %3720 = vmatpush1.msra.mxu0 0.0
    %3721 = vmatprep.subr.mxu0 0.0
    %3722 = vmatpush1.msra.mxu0 0.0
    %3723 = vmatprep.subr.mxu0 0.0
    %3724 = vmatpush1.msra.mxu0 0.0
    %3725 = vmatprep.subr.mxu0 0.0
    %3726 = vmatpush1.msra.mxu0 0.0
    %3727 = vmatprep.subr.mxu0 0.0
    %3728 = vmatpush1.msra.mxu0 0.0
    %3729 = vmatprep.subr.mxu0 0.0
    %3730 = vmatpush1.msra.mxu0 0.0
    %3731 = vmatprep.subr.mxu0 0.0
    %3732 = vmatpush1.msra.mxu0 0.0
    %3733 = vmatprep.subr.mxu0 0.0
    %3734 = vmatpush1.msra.mxu0 0.0
    %3735 = vmatprep.subr.mxu0 0.0
    %3736 = vmatpush1.msra.mxu0 %v3699
    %3737 = vmatprep.subr.mxu0 0.0
    %3738 = vmatpush1.msra.mxu0 %v3698
    %3739 = vmatprep.subr.mxu0 0.0
    %3740 = vmatpush1.msra.mxu0 %v3697
    %3741 = vmatprep.subr.mxu0 0.0
    %3742 = vmatpush1.msra.mxu0 %v3696
    %3743 = vmatprep.subr.mxu0 0.0
    %3744 = vmatpush2.msra.mxu0 0.0
    %3745 = vmatprep.subr.mxu0 0.0
    %3746 = vmatpush2.msra.mxu0 0.0
    %3747 = vmatprep.subr.mxu0 0.0
    %3748 = vmatpush2.msra.mxu0 0.0
    %3749 = vmatprep.subr.mxu0 0.0
    %3750 = vmatpush2.msra.mxu0 0.0
    %3751 = vmatprep.subr.mxu0 0.0
    %3752 = vmatpush2.msra.mxu0 0.0
    %3753 = vmatprep.subr.mxu0 0.0
    %3754 = vmatpush2.msra.mxu0 0.0
    %3755 = vmatprep.subr.mxu0 0.0
    %3756 = vmatpush2.msra.mxu0 0.0
    %3757 = vmatprep.subr.mxu0 0.0
    %3758 = vmatpush2.msra.mxu0 0.0
    %3759 = vmatprep.subr.mxu0 0.0
    %3760 = vmatpush2.msra.mxu0 0.0
    %3761 = vmatprep.subr.mxu0 0.0
    %3762 = vmatpush2.msra.mxu0 0.0
    %3763 = vmatprep.subr.mxu0 0.0
    %3764 = vmatpush2.msra.mxu0 0.0
    %3765 = vmatprep.subr.mxu0 0.0
    %3766 = vmatpush2.msra.mxu0 0.0
    %3767 = vmatprep.subr.mxu0 0.0
    %3768 = vmatpush2.msra.mxu0 0.0
    %3769 = vmatprep.subr.mxu0 0.0
    %3770 = vmatpush2.msra.mxu0 0.0
    %3771 = vmatprep.subr.mxu0 0.0
    %3772 = vmatpush2.msra.mxu0 0.0
    %3773 = vmatprep.subr.mxu0 0.0
    %3774 = vmatpush2.msra.mxu0 0.0
    %3775 = vmatprep.mubr.f32.mxu0 0.0
    %3776 = vmatmul.mubr.f32.gmra.mxu0 %v3706
    %v3777 = vpop.f32.mrf.mxu0
    %v3778 = vadd.f32 %v3704, %v3777
    %v3779 = vpop.f32.mrf.mxu0
    %3780 = vmatprep.mubr.f32.mxu0 0.0
    %3781 = vmatmul.mubr.f32.gmra.mxu0 %v3709
    %v3782 = vpop.f32.mrf.mxu0
    %v3783 = vadd.f32 %v3704, %v3782
    %v3784 = vpop.f32.mrf.mxu0
    %3785 = vdwg.mxu0
    %v3786 = vmul.f32 %v3778, %v3778
    %v3787 = vmul.f32 %v3783, %v3783
    %v3788 = vmul.f32 %v3778, %v3786
    %v3789 = vmul.f32 %v3783, %v3787
    %v3790 = vmul.f32 %v3788, 0.044715
    %v3791 = vmul.f32 %v3789, 0.044715
    %v3792 = vadd.f32 %v3778, %v3790
    %v3793 = vadd.f32 %v3783, %v3791
    %v3794 = vmul.f32 %v3792, 0.7978846
    %v3795 = vmul.f32 %v3793, 0.7978846
    %v3796 = vtanh.pop %v3794
    %v3797 = vtanh.pop %v3795
    %v3798 = vadd.f32 %v3796, 1.0
    %v3799 = vadd.f32 %v3797, 1.0
    %v3800 = vmul.f32 %v3798, 0.5
    %v3801 = vmul.f32 %v3799, 0.5
    %v3802 = vmul.f32 %v3778, %v3800
    %v3803 = vmul.f32 %v3783, %v3801
    %v3804 = vld [vmem:[#allocation2 + $0x1c0] sm:$0xff]
    %v3805 = vld [vmem:[#allocation2 + $0x1c8] sm:$0xff]
    %v3806 = vld [vmem:[#allocation2 + $0x1d0] sm:$0xff]
    %v3807 = vld [vmem:[#allocation2 + $0x1d8] sm:$0xff]
    %v3808 = vld [vmem:[#allocation2 + $0x1e0] sm:$0xff]
    %v3809 = vld [vmem:[#allocation2 + $0x1e8] sm:$0xff]
    %v3810 = vld [vmem:[#allocation2 + $0x1f0] sm:$0xff]
    %v3811 = vld [vmem:[#allocation2 + $0x1f8] sm:$0xff]
    %v3812 = vld [vmem:[#allocation4 + $0x13] sm:$0x1]
    %v3813 = vlaneseq
    %v3814 = vshrl.u32 %v3813, 7
    %v3815 = vsub.s32 0, %v3814
    %v3816 = vrot.slane %v3812, %v3815
    %v3818 = vsel %vm2002, %v3802, 0
    %v3821 = vsel %vm2002, %v3803, 0
    %3823 = vmatprep.subr.mxu0 0.0
    %3824 = vmatpush1.msra.mxu0 0.0
    %3825 = vmatprep.subr.mxu0 0.0
    %3826 = vmatpush1.msra.mxu0 0.0
    %3827 = vmatprep.subr.mxu0 0.0
    %3828 = vmatpush1.msra.mxu0 0.0
    %3829 = vmatprep.subr.mxu0 0.0
    %3830 = vmatpush1.msra.mxu0 0.0
    %3831 = vmatprep.subr.mxu0 0.0
    %3832 = vmatpush1.msra.mxu0 0.0
    %3833 = vmatprep.subr.mxu0 0.0
    %3834 = vmatpush1.msra.mxu0 0.0
    %3835 = vmatprep.subr.mxu0 0.0
    %3836 = vmatpush1.msra.mxu0 0.0
    %3837 = vmatprep.subr.mxu0 0.0
    %3838 = vmatpush1.msra.mxu0 0.0
    %3839 = vmatprep.subr.mxu0 0.0
    %3840 = vmatpush1.msra.mxu0 %v3811
    %3841 = vmatprep.subr.mxu0 0.0
    %3842 = vmatpush1.msra.mxu0 %v3810
    %3843 = vmatprep.subr.mxu0 0.0
    %3844 = vmatpush1.msra.mxu0 %v3809
    %3845 = vmatprep.subr.mxu0 0.0
    %3846 = vmatpush1.msra.mxu0 %v3808
    %3847 = vmatprep.subr.mxu0 0.0
    %3848 = vmatpush1.msra.mxu0 %v3807
    %3849 = vmatprep.subr.mxu0 0.0
    %3850 = vmatpush1.msra.mxu0 %v3806
    %3851 = vmatprep.subr.mxu0 0.0
    %3852 = vmatpush1.msra.mxu0 %v3805
    %3853 = vmatprep.subr.mxu0 0.0
    %3854 = vmatpush1.msra.mxu0 %v3804
    %3855 = vmatprep.subr.mxu0 0.0
    %3856 = vmatpush2.msra.mxu0 0.0
    %3857 = vmatprep.subr.mxu0 0.0
    %3858 = vmatpush2.msra.mxu0 0.0
    %3859 = vmatprep.subr.mxu0 0.0
    %3860 = vmatpush2.msra.mxu0 0.0
    %3861 = vmatprep.subr.mxu0 0.0
    %3862 = vmatpush2.msra.mxu0 0.0
    %3863 = vmatprep.subr.mxu0 0.0
    %3864 = vmatpush2.msra.mxu0 0.0
    %3865 = vmatprep.subr.mxu0 0.0
    %3866 = vmatpush2.msra.mxu0 0.0
    %3867 = vmatprep.subr.mxu0 0.0
    %3868 = vmatpush2.msra.mxu0 0.0
    %3869 = vmatprep.subr.mxu0 0.0
    %3870 = vmatpush2.msra.mxu0 0.0
    %3871 = vmatprep.subr.mxu0 0.0
    %3872 = vmatpush2.msra.mxu0 0.0
    %3873 = vmatprep.subr.mxu0 0.0
    %3874 = vmatpush2.msra.mxu0 0.0
    %3875 = vmatprep.subr.mxu0 0.0
    %3876 = vmatpush2.msra.mxu0 0.0
    %3877 = vmatprep.subr.mxu0 0.0
    %3878 = vmatpush2.msra.mxu0 0.0
    %3879 = vmatprep.subr.mxu0 0.0
    %3880 = vmatpush2.msra.mxu0 0.0
    %3881 = vmatprep.subr.mxu0 0.0
    %3882 = vmatpush2.msra.mxu0 0.0
    %3883 = vmatprep.subr.mxu0 0.0
    %3884 = vmatpush2.msra.mxu0 0.0
    %3885 = vmatprep.subr.mxu0 0.0
    %3886 = vmatpush2.msra.mxu0 0.0
    %3887 = vmatprep.mubr.f32.mxu0 0.0
    %3888 = vmatmul.mubr.f32.gmra.mxu0 %v3818
    %v3889 = vpop.f32.mrf.mxu0
    %v3890 = vadd.f32 %v3816, %v3889
    %v3891 = vpop.f32.mrf.mxu0
    %3892 = vmatprep.mubr.f32.mxu0 0.0
    %3893 = vmatmul.mubr.f32.gmra.mxu0 %v3821
    %v3894 = vpop.f32.mrf.mxu0
    %v3895 = vadd.f32 %v3816, %v3894
    %v3896 = vpop.f32.mrf.mxu0
    %3897 = vdwg.mxu0
    %v3898 = vadd.f32 %v3694, %v3890
    %v3899 = vadd.f32 %v3695, %v3895
    %v3900 = vld [vmem:[#allocation4 + $0x14] sm:$0x1]
    %v3901 = vld [vmem:[#allocation4 + $0x15] sm:$0x1]
    %v3902 = vsel %vm162, %v3898, 0.0
    %3903 = vadd.xlane.f32.xlu0 %v3902
    %v3904 = vpop.xlane.xlu0 %3903
    %v3905 = vsel %vm162, %v3899, 0.0
    %3906 = vadd.xlane.f32.xlu0 %v3905
    %v3907 = vpop.xlane.xlu0 %3906
    %v3908 = vmul.f32 %v3904, %v169
    %v3909 = vmul.f32 %v3907, %v169
    %v3910 = vsub.f32 %v3898, %v3908
    %v3911 = vsub.f32 %v3899, %v3909
    %v3912 = vmul.f32 %v3910, %v3910
    %v3913 = vmul.f32 %v3911, %v3911
    %v3914 = vsel %vm162, %v3912, 0.0
    %3915 = vadd.xlane.f32.xlu0 %v3914
    %v3916 = vpop.xlane.xlu0 %3915
    %v3917 = vsel %vm162, %v3913, 0.0
    %3918 = vadd.xlane.f32.xlu0 %v3917
    %v3919 = vpop.xlane.xlu0 %3918
    %v3920 = vmul.f32 %v3916, %v169
    %v3921 = vmul.f32 %v3919, %v169
    %v3922 = vadd.f32 %v3920, 1e-12
    %v3923 = vadd.f32 %v3921, 1e-12
    %v3924 = vrsqrt.pop %v3922
    %v3925 = vrsqrt.pop %v3923
    %v3926 = vmul.f32 %v3910, %v3924
    %v3927 = vmul.f32 %v3911, %v3925
    %v3928 = vlaneseq
    %v3929 = vshrl.u32 %v3928, 7
    %v3930 = vsub.s32 0, %v3929
    %v3931 = vrot.slane %v3900, %v3930
    %v3932 = vmul.f32 %v3926, %v3931
    %v3933 = vmul.f32 %v3927, %v3931
    %v3934 = vlaneseq
    %v3935 = vshrl.u32 %v3934, 7
    %v3936 = vsub.s32 0, %v3935
    %v3937 = vrot.slane %v3901, %v3936
    %v3938 = vadd.f32 %v3932, %v3937
    %v3939 = vadd.f32 %v3933, %v3937
    %v3940 = vld [vmem:[#allocation4 + $0x3] sm:$0x3]
    %v3941 = vld [vmem:[#allocation4 + $0x5] sm:$0x1]
    %v3942 = vlaneseq
    %v3943 = vshrl.u32 %v3942, 7
    %v3944 = vsub.s32 0, %v3943
    %v3945 = vrot.slane %v3941, %v3944
    %v3947 = vsel %vm162, %v3938, 0
    %v3950 = vsel %vm162, %v3939, 0
    %v3953 = vsel %vm162, %v3940, 0
    %3955 = vmatprep.subr.mxu0 0.0
    %3956 = vmatpush1.xpose.msra.mxu0 0.0
    %3957 = vmatprep.subr.mxu0 0.0
    %3958 = vmatpush1.xpose.msra.mxu0 0.0
    %3959 = vmatprep.subr.mxu0 0.0
    %3960 = vmatpush1.xpose.msra.mxu0 0.0
    %3961 = vmatprep.subr.mxu0 0.0
    %3962 = vmatpush1.xpose.msra.mxu0 0.0
    %3963 = vmatprep.subr.mxu0 0.0
    %3964 = vmatpush1.xpose.msra.mxu0 0.0
    %3965 = vmatprep.subr.mxu0 0.0
    %3966 = vmatpush1.xpose.msra.mxu0 0.0
    %3967 = vmatprep.subr.mxu0 0.0
    %3968 = vmatpush1.xpose.msra.mxu0 0.0
    %3969 = vmatprep.subr.mxu0 0.0
    %3970 = vmatpush1.xpose.msra.mxu0 0.0
    %3971 = vmatprep.subr.mxu0 0.0
    %3972 = vmatpush1.xpose.msra.mxu0 0.0
    %3973 = vmatprep.subr.mxu0 0.0
    %3974 = vmatpush1.xpose.msra.mxu0 0.0
    %3975 = vmatprep.subr.mxu0 0.0
    %3976 = vmatpush1.xpose.msra.mxu0 0.0
    %3977 = vmatprep.subr.mxu0 0.0
    %3978 = vmatpush1.xpose.msra.mxu0 0.0
    %3979 = vmatprep.subr.mxu0 0.0
    %3980 = vmatpush1.xpose.msra.mxu0 0.0
    %3981 = vmatprep.subr.mxu0 0.0
    %3982 = vmatpush1.xpose.msra.mxu0 0.0
    %3983 = vmatprep.subr.mxu0 0.0
    %3984 = vmatpush1.xpose.msra.mxu0 0.0
    %3985 = vmatprep.subr.mxu0 0.0
    %3986 = vmatpush1.xpose.msra.mxu0 %v3953
    %3987 = vmatprep.subr.mxu0 0.0
    %3988 = vmatpush2.xpose.msra.mxu0 0.0
    %3989 = vmatprep.subr.mxu0 0.0
    %3990 = vmatpush2.xpose.msra.mxu0 0.0
    %3991 = vmatprep.subr.mxu0 0.0
    %3992 = vmatpush2.xpose.msra.mxu0 0.0
    %3993 = vmatprep.subr.mxu0 0.0
    %3994 = vmatpush2.xpose.msra.mxu0 0.0
    %3995 = vmatprep.subr.mxu0 0.0
    %3996 = vmatpush2.xpose.msra.mxu0 0.0
    %3997 = vmatprep.subr.mxu0 0.0
    %3998 = vmatpush2.xpose.msra.mxu0 0.0
    %3999 = vmatprep.subr.mxu0 0.0
    %4000 = vmatpush2.xpose.msra.mxu0 0.0
    %4001 = vmatprep.subr.mxu0 0.0
    %4002 = vmatpush2.xpose.msra.mxu0 0.0
    %4003 = vmatprep.subr.mxu0 0.0
    %4004 = vmatpush2.xpose.msra.mxu0 0.0
    %4005 = vmatprep.subr.mxu0 0.0
    %4006 = vmatpush2.xpose.msra.mxu0 0.0
    %4007 = vmatprep.subr.mxu0 0.0
    %4008 = vmatpush2.xpose.msra.mxu0 0.0
    %4009 = vmatprep.subr.mxu0 0.0
    %4010 = vmatpush2.xpose.msra.mxu0 0.0
    %4011 = vmatprep.subr.mxu0 0.0
    %4012 = vmatpush2.xpose.msra.mxu0 0.0
    %4013 = vmatprep.subr.mxu0 0.0
    %4014 = vmatpush2.xpose.msra.mxu0 0.0
    %4015 = vmatprep.subr.mxu0 0.0
    %4016 = vmatpush2.xpose.msra.mxu0 0.0
    %4017 = vmatprep.subr.mxu0 0.0
    %4018 = vmatpush2.xpose.msra.mxu0 0.0
    %4019 = vmatprep.mubr.f32.mxu0 0.0
    %4020 = vmatmul.mubr.f32.gmra.mxu0 %v3947
    %v4021 = vpop.f32.mrf.mxu0
    %v4022 = vadd.f32 %v3945, %v4021
    %v4023 = vpop.f32.mrf.mxu0
    %4024 = vmatprep.mubr.f32.mxu0 0.0
    %4025 = vmatmul.mubr.f32.gmra.mxu0 %v3950
    %v4026 = vpop.f32.mrf.mxu0
    %v4027 = vadd.f32 %v3945, %v4026
    %v4028 = vpop.f32.mrf.mxu0
    %4029 = vdwg.mxu0
    %vm4030 = vcmask 15360
    %4031 = vst.msk [vmem:[%s4] sm:$0xff] %vm4030, %v4022
    %4032 = vst.msk [vmem:[%s4 + $0x8] sm:$0xff] %vm4030, %v4027
    // Predicated region
    $region26: #{bert_wrapper_forward.1} parent=1 // pred_check
      _
    $region27: #{bert_wrapper_forward.1} parent=1 // pred_check_branch
      %4034 = sbr.rel (0) target = $region29
    $region28: #{bert_wrapper_forward.1} parent=1 // pred_region
      _
    $region29: #{bert_wrapper_forward.1} parent=1 // pred_fallthru
      _
    // Predicated region
    $region30: #{bert_wrapper_forward.1} parent=1 // pred_check
      _
    $region31: #{bert_wrapper_forward.1} parent=1 // pred_check_branch
      %4036 = sbr.rel (0) target = $region33
    $region32: #{bert_wrapper_forward.1} parent=1 // pred_region
      _
    $region33: #{bert_wrapper_forward.1} parent=1 // pred_fallthru
      _
    %4037 = vsyncpa [#allocation3], 1
    %4038 = vsyncpa [#allocation5], 1

</llo_original>
